<compile_context>
chip_gen: v5e
topology: v5e:2x2
jax: 0.10.0
libtpu: 0.0.40
codegen_flags: <defaults>
</compile_context>

<pallas_src>
import functools

import jax
import jax.numpy as jnp
from jax.experimental import pallas as pl
from jax.experimental.pallas import tpu as pltpu


IN_DIM = 784
HIDDEN = [256, 64, 16]          # hidden_dims from the module
LATENT = HIDDEN[-1]
NEG_SLOPE = 0.2
COMPUTE_DTYPE = jnp.bfloat16    # MXU-native input dtype; accumulation stays f32
_DEFAULT_TILE = 256             # fills the MXU M dim on v5e/v6e/v7x, fits 16 MiB VMEM

# Cached result of "does this JAX build accept single-buffered param BlockSpecs?"
_PARAM_BUFFERS = None


def _leaky_relu(v):
    return jnp.where(v >= 0, v, NEG_SLOPE * v)


def _round_up(x, m):
    return ((x + m - 1) // m) * m


def _batch_tile_for(n_rows):
    """>=256 rows/tile when possible; whole (8-aligned) batch for small inputs."""
    if n_rows <= _DEFAULT_TILE:
        return _round_up(max(n_rows, 8), 8)
    return _DEFAULT_TILE


# ---------------------------------------------------------------------------
# Kernel
# ---------------------------------------------------------------------------
def vae_kernel(
    # inputs (per-batch-tile)
    x_ref, eps_ref,
    # encoder params (weights bf16 [in, out]; biases f32 [1, out])
    e1w_ref, e1b_ref, e2w_ref, e2b_ref,
    ml_w_ref, ml_b_ref,            # fused mu|logvar head: [64, 32], [1, 32]
    # decoder params
    d1w_ref, d1b_ref, d2w_ref, d2b_ref, d3w_ref, d3b_ref,
    # outputs
    logits_ref, ml_ref,
):
    x = x_ref[...]                                       # already bf16

    # ---- encoder ----
    h = _leaky_relu(
        jnp.dot(x, e1w_ref[...], preferred_element_type=jnp.float32) + e1b_ref[...]
    )
    h = _leaky_relu(
        jnp.dot(h.astype(COMPUTE_DTYPE), e2w_ref[...],
                preferred_element_type=jnp.float32) + e2b_ref[...]
    )

    # ---- fused mu | logvar head: one [64, 32] dot, packed [tile, 32] output ----
    ml = jnp.dot(h.astype(COMPUTE_DTYPE), ml_w_ref[...],
                 preferred_element_type=jnp.float32) + ml_b_ref[...]
    mu = ml[:, :LATENT]
    logvar = ml[:, LATENT:]

    # ---- reparameterize: z = mu + eps * exp(0.5 * logvar) ----
    std = jnp.exp(0.5 * logvar)
    z = mu + eps_ref[...] * std

    # ---- decoder ----
    d = _leaky_relu(
        jnp.dot(z.astype(COMPUTE_DTYPE), d1w_ref[...],
                preferred_element_type=jnp.float32) + d1b_ref[...]
    )
    d = _leaky_relu(
        jnp.dot(d.astype(COMPUTE_DTYPE), d2w_ref[...],
                preferred_element_type=jnp.float32) + d2b_ref[...]
    )
    logits = jnp.dot(d.astype(COMPUTE_DTYPE), d3w_ref[...],
                     preferred_element_type=jnp.float32) + d3b_ref[...]

    logits_ref[...] = logits.astype(logits_ref.dtype)
    ml_ref[...] = ml.astype(ml_ref.dtype)


# ---------------------------------------------------------------------------
# Parameters
# ---------------------------------------------------------------------------
def init_params(key):
    """Deterministic parameter init (Linear weights stored as [in, out], f32 masters)."""
    dims = [IN_DIM] + HIDDEN              # [784, 256, 64, 16]
    params = {}
    keys = jax.random.split(key, 14)
    ki = iter(range(14))

    def linear(kw, kb, fan_in, fan_out):
        bound = 1.0 / jnp.sqrt(fan_in)
        w = jax.random.uniform(kw, (fan_in, fan_out), jnp.float32, -bound, bound)
        b = jax.random.uniform(kb, (1, fan_out), jnp.float32, -bound, bound)
        return w, b

    params["e1w"], params["e1b"] = linear(keys[next(ki)], keys[next(ki)], dims[0], dims[1])
    params["e2w"], params["e2b"] = linear(keys[next(ki)], keys[next(ki)], dims[1], dims[2])
    params["mu_w"], params["mu_b"] = linear(keys[next(ki)], keys[next(ki)], dims[2], dims[3])
    params["lv_w"], params["lv_b"] = linear(keys[next(ki)], keys[next(ki)], dims[2], dims[3])
    params["d1w"], params["d1b"] = linear(keys[next(ki)], keys[next(ki)], dims[3], dims[2])
    params["d2w"], params["d2b"] = linear(keys[next(ki)], keys[next(ki)], dims[2], dims[1])
    params["d3w"], params["d3b"] = linear(keys[next(ki)], keys[next(ki)], dims[1], dims[0])
    return params


def prepare_params(params):
    """Cast weights to bf16, fuse mu/logvar heads; biases stay f32 [1, out]."""
    prep = {}
    for name in ("e1", "e2", "d1", "d2", "d3"):
        prep[name + "w"] = params[name + "w"].astype(COMPUTE_DTYPE)
        prep[name + "b"] = params[name + "b"].astype(jnp.float32)
    prep["ml_w"] = jnp.concatenate(
        [params["mu_w"], params["lv_w"]], axis=1).astype(COMPUTE_DTYPE)
    prep["ml_b"] = jnp.concatenate(
        [params["mu_b"], params["lv_b"]], axis=1).astype(jnp.float32)
    return prep


# ---------------------------------------------------------------------------
# pallas_call wrapper
# ---------------------------------------------------------------------------
def _param_spec(arr, buffers):
    """Whole-array BlockSpec, constant across the grid (resident parameters)."""
    index_map = lambda i, n=arr.ndim: (0,) * n
    if buffers == 1:
        # Single buffer: the block index never changes, so no double-buffering.
        return pl.BlockSpec(arr.shape, index_map, pipeline_mode=pl.Buffered(1))
    return pl.BlockSpec(arr.shape, index_map)


@functools.partial(jax.jit, static_argnames=("batch_tile", "param_buffers"))
def _vae_forward_padded(x, eps, prep, *, batch_tile, param_buffers):
    """x: [Bp, IN_DIM] bf16 (Bp % batch_tile == 0), eps: [Bp, LATENT] f32."""
    Bp = x.shape[0]
    names = ["e1w", "e1b", "e2w", "e2b", "ml_w", "ml_b",
             "d1w", "d1b", "d2w", "d2b", "d3w", "d3b"]
    p_list = [prep[n] for n in names]

    # Rough VMEM budget: double-buffered x/eps/logits/ml tiles + parameters.
    tile_io_bytes = 2 * batch_tile * (IN_DIM * 2 + LATENT * 4 + IN_DIM * 4 + 2 * LATENT * 4)
    param_bytes = sum(int(p.size) * p.dtype.itemsize for p in p_list) * max(param_buffers, 1)
    vmem_est = tile_io_bytes + param_bytes
    vmem_limit = None
    if vmem_est > 12 * 1024 * 1024:
        # Raise the scoped-VMEM limit only when a big tile needs it (v5e default
        # is 16 MiB); stay well inside the smallest physical VMEM (v7x: 64 MiB).
        vmem_limit = min(int(vmem_est * 1.5), 56 * 1024 * 1024)

    in_specs = [
        pl.BlockSpec((batch_tile, IN_DIM), lambda i: (i, 0)),
        pl.BlockSpec((batch_tile, LATENT), lambda i: (i, 0)),
    ] + [_param_spec(p, param_buffers) for p in p_list]
    out_specs = [
        pl.BlockSpec((batch_tile, IN_DIM), lambda i: (i, 0)),
        pl.BlockSpec((batch_tile, 2 * LATENT), lambda i: (i, 0)),
    ]
    out_shape = (
        jax.ShapeDtypeStruct((Bp, IN_DIM), jnp.float32),
        jax.ShapeDtypeStruct((Bp, 2 * LATENT), jnp.float32),
    )

    return pl.pallas_call(
        vae_kernel,
        out_shape=out_shape,
        grid_spec=pltpu.PrefetchScalarGridSpec(
            num_scalar_prefetch=0,
            grid=(Bp // batch_tile,),
            in_specs=in_specs,
            out_specs=out_specs,
        ),
        compiler_params=pltpu.CompilerParams(
            dimension_semantics=("parallel",),
            vmem_limit_bytes=vmem_limit,
        ),
    )(x, eps, *p_list)


def vae_forward(x, eps, params, *, batch_tile=None):
    """x: [..., IN_DIM] f32 (flattened like X.view(-1, in_dim)), eps: [B, LATENT] f32.
    Returns (logits [B, IN_DIM], mu [B, LATENT], logvar [B, LATENT])."""
    global _PARAM_BUFFERS

    x = x.reshape(-1, IN_DIM)
    B = x.shape[0]
    if batch_tile is None:
        batch_tile = _batch_tile_for(B)
    Bp = _round_up(B, batch_tile)

    prep = prepare_params(params)
    x_p = jnp.zeros((Bp, IN_DIM), COMPUTE_DTYPE).at[:B].set(x.astype(COMPUTE_DTYPE))
    eps_p = jnp.zeros((Bp, LATENT), jnp.float32).at[:B].set(eps.astype(jnp.float32))

    if _PARAM_BUFFERS is None:
        _PARAM_BUFFERS = 1 if hasattr(pl, "Buffered") else 2

    try:
        logits, ml = _vae_forward_padded(
            x_p, eps_p, prep, batch_tile=batch_tile, param_buffers=_PARAM_BUFFERS)
    except Exception:
        if _PARAM_BUFFERS == 1:
            # Fall back to default (double-buffered) parameter blocks.
            _PARAM_BUFFERS = 2
            logits, ml = _vae_forward_padded(
                x_p, eps_p, prep, batch_tile=batch_tile, param_buffers=2)
        else:
            raise

    return logits[:B], ml[:B, :LATENT], ml[:B, LATENT:]


# ---------------------------------------------------------------------------
# Pure-JAX reference (same bf16-in / f32-accumulate recipe as the kernel)
# ---------------------------------------------------------------------------
def vae_forward_ref(x, eps, params):
    def mm(a, w):
        return jnp.dot(a.astype(COMPUTE_DTYPE), w.astype(COMPUTE_DTYPE),
                       preferred_element_type=jnp.float32)

    h = _leaky_relu(mm(x, params["e1w"]) + params["e1b"])
    h = _leaky_relu(mm(h, params["e2w"]) + params["e2b"])
    mu = mm(h, params["mu_w"]) + params["mu_b"]
    logvar = mm(h, params["lv_w"]) + params["lv_b"]
    z = mu + eps * jnp.exp(0.5 * logvar)
    d = _leaky_relu(mm(z, params["d1w"]) + params["d1b"])
    d = _leaky_relu(mm(d, params["d2w"]) + params["d2b"])
    logits = mm(d, params["d3w"]) + params["d3b"]
    return logits, mu, logvar


if __name__ == "__main__":
    key = jax.random.PRNGKey(0)
    k_param, k_x, k_eps = jax.random.split(key, 3)

    # Small demo batch; deliberately not a multiple of 8 to exercise the
    # wrapper-side padding path (review note on ragged batches).
    B = 12
    params = init_params(k_param)
    x = jax.random.normal(k_x, (B, IN_DIM), jnp.float32)
    # randn_like(std) from reparameterize(); drawn outside and passed in.
    eps = jax.random.normal(k_eps, (B, LATENT), jnp.float32)

    logits, mu, logvar = vae_forward(x, eps, params)
    jax.block_until_ready((logits, mu, logvar))

    # Sanity check vs. plain JAX reference (bf16 matmul inputs, f32 accumulation
    # on both sides -> tolerances reflect the accepted bf16 precision trade-off).
    ref_logits, ref_mu, ref_logvar = vae_forward_ref(x, eps, params)
    assert logits.shape == (B, IN_DIM)
    assert mu.shape == (B, LATENT) and logvar.shape == (B, LATENT)
    assert jnp.allclose(logits, ref_logits, atol=2e-2, rtol=2e-2)
    assert jnp.allclose(mu, ref_mu, atol=2e-2, rtol=2e-2)
    assert jnp.allclose(logvar, ref_logvar, atol=2e-2, rtol=2e-2)

    print("KERNEL_OK")
</pallas_src>

<mosaic_0001>
module attributes {stable_mosaic.version = 11 : i64} {
  func.func @vae_kernel(%arg0: i32, %arg1: memref<16x784xbf16, #tpu.memory_space<vmem>>, %arg2: memref<16x16xf32, #tpu.memory_space<vmem>>, %arg3: memref<784x256xbf16, #tpu.memory_space<vmem>>, %arg4: memref<1x256xf32, #tpu.memory_space<vmem>>, %arg5: memref<256x64xbf16, #tpu.memory_space<vmem>>, %arg6: memref<1x64xf32, #tpu.memory_space<vmem>>, %arg7: memref<64x32xbf16, #tpu.memory_space<vmem>>, %arg8: memref<1x32xf32, #tpu.memory_space<vmem>>, %arg9: memref<16x64xbf16, #tpu.memory_space<vmem>>, %arg10: memref<1x64xf32, #tpu.memory_space<vmem>>, %arg11: memref<64x256xbf16, #tpu.memory_space<vmem>>, %arg12: memref<1x256xf32, #tpu.memory_space<vmem>>, %arg13: memref<256x784xbf16, #tpu.memory_space<vmem>>, %arg14: memref<1x784xf32, #tpu.memory_space<vmem>>, %arg15: memref<16x784xf32, #tpu.memory_space<vmem>>, %arg16: memref<16x32xf32, #tpu.memory_space<vmem>>) attributes {dimension_semantics = [#tpu.dimension_semantics<parallel>], iteration_bounds = array<i64: 1>, scalar_prefetch = 0 : i64, scratch_operands = 0 : i64, tpu.core_type = #tpu.core_type<tc>, window_params = [{transform_indices = @transform_0, window_bounds = array<i64: 16, 784>}, {transform_indices = @transform_1, window_bounds = array<i64: 16, 16>}, {pipeline_mode = #tpu.pipeline_mode<synchronous>, transform_indices = @transform_2, window_bounds = array<i64: 784, 256>}, {pipeline_mode = #tpu.pipeline_mode<synchronous>, transform_indices = @transform_3, window_bounds = array<i64: 1, 256>}, {pipeline_mode = #tpu.pipeline_mode<synchronous>, transform_indices = @transform_4, window_bounds = array<i64: 256, 64>}, {pipeline_mode = #tpu.pipeline_mode<synchronous>, transform_indices = @transform_5, window_bounds = array<i64: 1, 64>}, {pipeline_mode = #tpu.pipeline_mode<synchronous>, transform_indices = @transform_6, window_bounds = array<i64: 64, 32>}, {pipeline_mode = #tpu.pipeline_mode<synchronous>, transform_indices = @transform_7, window_bounds = array<i64: 1, 32>}, {pipeline_mode = #tpu.pipeline_mode<synchronous>, transform_indices = @transform_8, window_bounds = array<i64: 16, 64>}, {pipeline_mode = #tpu.pipeline_mode<synchronous>, transform_indices = @transform_9, window_bounds = array<i64: 1, 64>}, {pipeline_mode = #tpu.pipeline_mode<synchronous>, transform_indices = @transform_10, window_bounds = array<i64: 64, 256>}, {pipeline_mode = #tpu.pipeline_mode<synchronous>, transform_indices = @transform_11, window_bounds = array<i64: 1, 256>}, {pipeline_mode = #tpu.pipeline_mode<synchronous>, transform_indices = @transform_12, window_bounds = array<i64: 256, 784>}, {pipeline_mode = #tpu.pipeline_mode<synchronous>, transform_indices = @transform_13, window_bounds = array<i64: 1, 784>}, {transform_indices = @transform_14, window_bounds = array<i64: 16, 784>}, {transform_indices = @transform_15, window_bounds = array<i64: 16, 32>}]} {
    %c0 = arith.constant 0 : index
    %c0_0 = arith.constant 0 : index
    %0 = vector.load %arg1[%c0, %c0_0] : memref<16x784xbf16, #tpu.memory_space<vmem>>, vector<16x784xbf16>
    %c0_1 = arith.constant 0 : index
    %c0_2 = arith.constant 0 : index
    %1 = vector.load %arg3[%c0_1, %c0_2] : memref<784x256xbf16, #tpu.memory_space<vmem>>, vector<784x256xbf16>
    %cst = arith.constant dense<0.000000e+00> : vector<16x256xf32>
    %2 = tpu.matmul %0, %1, %cst {dimension_numbers = #tpu.dot_dimension_numbers<[1], [0], [0], [1], [0, 0, 1, 1], [], []>} : vector<16x784xbf16>, vector<784x256xbf16>, vector<16x256xf32> -> vector<16x256xf32>
    %c0_3 = arith.constant 0 : index
    %c0_4 = arith.constant 0 : index
    %3 = vector.load %arg4[%c0_3, %c0_4] : memref<1x256xf32, #tpu.memory_space<vmem>>, vector<1x256xf32>
    %4 = vector.broadcast %3 : vector<1x256xf32> to vector<16x256xf32>
    %5 = arith.addf %2, %4 : vector<16x256xf32>
    %cst_5 = arith.constant 0.000000e+00 : f32
    %6 = vector.broadcast %cst_5 : f32 to vector<16x256xf32>
    %7 = arith.cmpf oge, %5, %6 : vector<16x256xf32>
    %cst_6 = arith.constant 2.000000e-01 : f32
    %8 = vector.broadcast %cst_6 : f32 to vector<16x256xf32>
    %9 = arith.mulf %8, %5 : vector<16x256xf32>
    %10 = arith.select %7, %5, %9 : vector<16x256xi1>, vector<16x256xf32>
    %11 = arith.truncf %10 : vector<16x256xf32> to vector<16x256xbf16>
    %c0_7 = arith.constant 0 : index
    %c0_8 = arith.constant 0 : index
    %12 = vector.load %arg5[%c0_7, %c0_8] : memref<256x64xbf16, #tpu.memory_space<vmem>>, vector<256x64xbf16>
    %cst_9 = arith.constant dense<0.000000e+00> : vector<16x64xf32>
    %13 = tpu.matmul %11, %12, %cst_9 {dimension_numbers = #tpu.dot_dimension_numbers<[1], [0], [0], [1], [0, 0, 1, 1], [], []>} : vector<16x256xbf16>, vector<256x64xbf16>, vector<16x64xf32> -> vector<16x64xf32>
    %c0_10 = arith.constant 0 : index
    %c0_11 = arith.constant 0 : index
    %14 = vector.load %arg6[%c0_10, %c0_11] : memref<1x64xf32, #tpu.memory_space<vmem>>, vector<1x64xf32>
    %15 = vector.broadcast %14 : vector<1x64xf32> to vector<16x64xf32>
    %16 = arith.addf %13, %15 : vector<16x64xf32>
    %cst_12 = arith.constant 0.000000e+00 : f32
    %17 = vector.broadcast %cst_12 : f32 to vector<16x64xf32>
    %18 = arith.cmpf oge, %16, %17 : vector<16x64xf32>
    %cst_13 = arith.constant 2.000000e-01 : f32
    %19 = vector.broadcast %cst_13 : f32 to vector<16x64xf32>
    %20 = arith.mulf %19, %16 : vector<16x64xf32>
    %21 = arith.select %18, %16, %20 : vector<16x64xi1>, vector<16x64xf32>
    %22 = arith.truncf %21 : vector<16x64xf32> to vector<16x64xbf16>
    %c0_14 = arith.constant 0 : index
    %c0_15 = arith.constant 0 : index
    %23 = vector.load %arg7[%c0_14, %c0_15] : memref<64x32xbf16, #tpu.memory_space<vmem>>, vector<64x32xbf16>
    %cst_16 = arith.constant dense<0.000000e+00> : vector<16x32xf32>
    %24 = tpu.matmul %22, %23, %cst_16 {dimension_numbers = #tpu.dot_dimension_numbers<[1], [0], [0], [1], [0, 0, 1, 1], [], []>} : vector<16x64xbf16>, vector<64x32xbf16>, vector<16x32xf32> -> vector<16x32xf32>
    %c0_17 = arith.constant 0 : index
    %c0_18 = arith.constant 0 : index
    %25 = vector.load %arg8[%c0_17, %c0_18] : memref<1x32xf32, #tpu.memory_space<vmem>>, vector<1x32xf32>
    %26 = vector.broadcast %25 : vector<1x32xf32> to vector<16x32xf32>
    %27 = arith.addf %24, %26 : vector<16x32xf32>
    %28 = vector.extract_strided_slice %27 {offsets = [0, 0], sizes = [16, 16], strides = [1, 1]} : vector<16x32xf32> to vector<16x16xf32>
    %29 = vector.extract_strided_slice %27 {offsets = [0, 16], sizes = [16, 16], strides = [1, 1]} : vector<16x32xf32> to vector<16x16xf32>
    %cst_19 = arith.constant 5.000000e-01 : f32
    %30 = vector.broadcast %cst_19 : f32 to vector<16x16xf32>
    %31 = arith.mulf %30, %29 : vector<16x16xf32>
    %32 = math.exp %31 : vector<16x16xf32>
    %c0_20 = arith.constant 0 : index
    %c0_21 = arith.constant 0 : index
    %33 = vector.load %arg2[%c0_20, %c0_21] : memref<16x16xf32, #tpu.memory_space<vmem>>, vector<16x16xf32>
    %34 = arith.mulf %33, %32 : vector<16x16xf32>
    %35 = arith.addf %28, %34 : vector<16x16xf32>
    %36 = arith.truncf %35 : vector<16x16xf32> to vector<16x16xbf16>
    %c0_22 = arith.constant 0 : index
    %c0_23 = arith.constant 0 : index
    %37 = vector.load %arg9[%c0_22, %c0_23] : memref<16x64xbf16, #tpu.memory_space<vmem>>, vector<16x64xbf16>
    %cst_24 = arith.constant dense<0.000000e+00> : vector<16x64xf32>
    %38 = tpu.matmul %36, %37, %cst_24 {dimension_numbers = #tpu.dot_dimension_numbers<[1], [0], [0], [1], [0, 0, 1, 1], [], []>} : vector<16x16xbf16>, vector<16x64xbf16>, vector<16x64xf32> -> vector<16x64xf32>
    %c0_25 = arith.constant 0 : index
    %c0_26 = arith.constant 0 : index
    %39 = vector.load %arg10[%c0_25, %c0_26] : memref<1x64xf32, #tpu.memory_space<vmem>>, vector<1x64xf32>
    %40 = vector.broadcast %39 : vector<1x64xf32> to vector<16x64xf32>
    %41 = arith.addf %38, %40 : vector<16x64xf32>
    %cst_27 = arith.constant 0.000000e+00 : f32
    %42 = vector.broadcast %cst_27 : f32 to vector<16x64xf32>
    %43 = arith.cmpf oge, %41, %42 : vector<16x64xf32>
    %cst_28 = arith.constant 2.000000e-01 : f32
    %44 = vector.broadcast %cst_28 : f32 to vector<16x64xf32>
    %45 = arith.mulf %44, %41 : vector<16x64xf32>
    %46 = arith.select %43, %41, %45 : vector<16x64xi1>, vector<16x64xf32>
    %47 = arith.truncf %46 : vector<16x64xf32> to vector<16x64xbf16>
    %c0_29 = arith.constant 0 : index
    %c0_30 = arith.constant 0 : index
    %48 = vector.load %arg11[%c0_29, %c0_30] : memref<64x256xbf16, #tpu.memory_space<vmem>>, vector<64x256xbf16>
    %cst_31 = arith.constant dense<0.000000e+00> : vector<16x256xf32>
    %49 = tpu.matmul %47, %48, %cst_31 {dimension_numbers = #tpu.dot_dimension_numbers<[1], [0], [0], [1], [0, 0, 1, 1], [], []>} : vector<16x64xbf16>, vector<64x256xbf16>, vector<16x256xf32> -> vector<16x256xf32>
    %c0_32 = arith.constant 0 : index
    %c0_33 = arith.constant 0 : index
    %50 = vector.load %arg12[%c0_32, %c0_33] : memref<1x256xf32, #tpu.memory_space<vmem>>, vector<1x256xf32>
    %51 = vector.broadcast %50 : vector<1x256xf32> to vector<16x256xf32>
    %52 = arith.addf %49, %51 : vector<16x256xf32>
    %cst_34 = arith.constant 0.000000e+00 : f32
    %53 = vector.broadcast %cst_34 : f32 to vector<16x256xf32>
    %54 = arith.cmpf oge, %52, %53 : vector<16x256xf32>
    %cst_35 = arith.constant 2.000000e-01 : f32
    %55 = vector.broadcast %cst_35 : f32 to vector<16x256xf32>
    %56 = arith.mulf %55, %52 : vector<16x256xf32>
    %57 = arith.select %54, %52, %56 : vector<16x256xi1>, vector<16x256xf32>
    %58 = arith.truncf %57 : vector<16x256xf32> to vector<16x256xbf16>
    %c0_36 = arith.constant 0 : index
    %c0_37 = arith.constant 0 : index
    %59 = vector.load %arg13[%c0_36, %c0_37] : memref<256x784xbf16, #tpu.memory_space<vmem>>, vector<256x784xbf16>
    %cst_38 = arith.constant dense<0.000000e+00> : vector<16x784xf32>
    %60 = tpu.matmul %58, %59, %cst_38 {dimension_numbers = #tpu.dot_dimension_numbers<[1], [0], [0], [1], [0, 0, 1, 1], [], []>} : vector<16x256xbf16>, vector<256x784xbf16>, vector<16x784xf32> -> vector<16x784xf32>
    %c0_39 = arith.constant 0 : index
    %c0_40 = arith.constant 0 : index
    %61 = vector.load %arg14[%c0_39, %c0_40] : memref<1x784xf32, #tpu.memory_space<vmem>>, vector<1x784xf32>
    %62 = vector.broadcast %61 : vector<1x784xf32> to vector<16x784xf32>
    %63 = arith.addf %60, %62 : vector<16x784xf32>
    %c0_41 = arith.constant 0 : index
    %c0_42 = arith.constant 0 : index
    %64 = vector.load %arg15[%c0_41, %c0_42] : memref<16x784xf32, #tpu.memory_space<vmem>>, vector<16x784xf32>
    tpu.vector_store %arg15[%c0_41, %c0_42], %63 {strides = array<i32>} : memref<16x784xf32, #tpu.memory_space<vmem>>, vector<16x784xf32>,
    %c0_43 = arith.constant 0 : index
    %c0_44 = arith.constant 0 : index
    %65 = vector.load %arg16[%c0_43, %c0_44] : memref<16x32xf32, #tpu.memory_space<vmem>>, vector<16x32xf32>
    tpu.vector_store %arg16[%c0_43, %c0_44], %27 {strides = array<i32>} : memref<16x32xf32, #tpu.memory_space<vmem>>, vector<16x32xf32>,
    return
  }
  func.func @transform_0(%arg0: i32) -> (i32, i32) {
    %c0_i32 = arith.constant 0 : i32
    %c0_i32_0 = arith.constant 0 : i32
    return %arg0, %c0_i32 : i32, i32
  }
  func.func @transform_1(%arg0: i32) -> (i32, i32) {
    %c0_i32 = arith.constant 0 : i32
    %c0_i32_0 = arith.constant 0 : i32
    return %arg0, %c0_i32 : i32, i32
  }
  func.func @transform_2(%arg0: i32) -> (i32, i32) {
    %c0_i32 = arith.constant 0 : i32
    %c0_i32_0 = arith.constant 0 : i32
    %c0_i32_1 = arith.constant 0 : i32
    return %c0_i32, %c0_i32_0 : i32, i32
  }
  func.func @transform_3(%arg0: i32) -> (i32, i32) {
    %c0_i32 = arith.constant 0 : i32
    %c0_i32_0 = arith.constant 0 : i32
    %c0_i32_1 = arith.constant 0 : i32
    return %c0_i32, %c0_i32_0 : i32, i32
  }
  func.func @transform_4(%arg0: i32) -> (i32, i32) {
    %c0_i32 = arith.constant 0 : i32
    %c0_i32_0 = arith.constant 0 : i32
    %c0_i32_1 = arith.constant 0 : i32
    return %c0_i32, %c0_i32_0 : i32, i32
  }
  func.func @transform_5(%arg0: i32) -> (i32, i32) {
    %c0_i32 = arith.constant 0 : i32
    %c0_i32_0 = arith.constant 0 : i32
    %c0_i32_1 = arith.constant 0 : i32
    return %c0_i32, %c0_i32_0 : i32, i32
  }
  func.func @transform_6(%arg0: i32) -> (i32, i32) {
    %c0_i32 = arith.constant 0 : i32
    %c0_i32_0 = arith.constant 0 : i32
    %c0_i32_1 = arith.constant 0 : i32
    return %c0_i32, %c0_i32_0 : i32, i32
  }
  func.func @transform_7(%arg0: i32) -> (i32, i32) {
    %c0_i32 = arith.constant 0 : i32
    %c0_i32_0 = arith.constant 0 : i32
    %c0_i32_1 = arith.constant 0 : i32
    return %c0_i32, %c0_i32_0 : i32, i32
  }
  func.func @transform_8(%arg0: i32) -> (i32, i32) {
    %c0_i32 = arith.constant 0 : i32
    %c0_i32_0 = arith.constant 0 : i32
    %c0_i32_1 = arith.constant 0 : i32
    return %c0_i32, %c0_i32_0 : i32, i32
  }
  func.func @transform_9(%arg0: i32) -> (i32, i32) {
    %c0_i32 = arith.constant 0 : i32
    %c0_i32_0 = arith.constant 0 : i32
    %c0_i32_1 = arith.constant 0 : i32
    return %c0_i32, %c0_i32_0 : i32, i32
  }
  func.func @transform_10(%arg0: i32) -> (i32, i32) {
    %c0_i32 = arith.constant 0 : i32
    %c0_i32_0 = arith.constant 0 : i32
    %c0_i32_1 = arith.constant 0 : i32
    return %c0_i32, %c0_i32_0 : i32, i32
  }
  func.func @transform_11(%arg0: i32) -> (i32, i32) {
    %c0_i32 = arith.constant 0 : i32
    %c0_i32_0 = arith.constant 0 : i32
    %c0_i32_1 = arith.constant 0 : i32
    return %c0_i32, %c0_i32_0 : i32, i32
  }
  func.func @transform_12(%arg0: i32) -> (i32, i32) {
    %c0_i32 = arith.constant 0 : i32
    %c0_i32_0 = arith.constant 0 : i32
    %c0_i32_1 = arith.constant 0 : i32
    return %c0_i32, %c0_i32_0 : i32, i32
  }
  func.func @transform_13(%arg0: i32) -> (i32, i32) {
    %c0_i32 = arith.constant 0 : i32
    %c0_i32_0 = arith.constant 0 : i32
    %c0_i32_1 = arith.constant 0 : i32
    return %c0_i32, %c0_i32_0 : i32, i32
  }
  func.func @transform_14(%arg0: i32) -> (i32, i32) {
    %c0_i32 = arith.constant 0 : i32
    %c0_i32_0 = arith.constant 0 : i32
    return %arg0, %c0_i32 : i32, i32
  }
  func.func @transform_15(%arg0: i32) -> (i32, i32) {
    %c0_i32 = arith.constant 0 : i32
    %c0_i32_0 = arith.constant 0 : i32
    return %arg0, %c0_i32 : i32, i32
  }
}

module attributes {stable_mosaic.version = 11 : i64} {
  func.func @vae_kernel(%arg0: i32, %arg1: memref<16x784xbf16, #tpu.memory_space<vmem>>, %arg2: memref<16x16xf32, #tpu.memory_space<vmem>>, %arg3: memref<784x256xbf16, #tpu.memory_space<vmem>>, %arg4: memref<1x256xf32, #tpu.memory_space<vmem>>, %arg5: memref<256x64xbf16, #tpu.memory_space<vmem>>, %arg6: memref<1x64xf32, #tpu.memory_space<vmem>>, %arg7: memref<64x32xbf16, #tpu.memory_space<vmem>>, %arg8: memref<1x32xf32, #tpu.memory_space<vmem>>, %arg9: memref<16x64xbf16, #tpu.memory_space<vmem>>, %arg10: memref<1x64xf32, #tpu.memory_space<vmem>>, %arg11: memref<64x256xbf16, #tpu.memory_space<vmem>>, %arg12: memref<1x256xf32, #tpu.memory_space<vmem>>, %arg13: memref<256x784xbf16, #tpu.memory_space<vmem>>, %arg14: memref<1x784xf32, #tpu.memory_space<vmem>>, %arg15: memref<16x784xf32, #tpu.memory_space<vmem>>, %arg16: memref<16x32xf32, #tpu.memory_space<vmem>>) attributes {dimension_semantics = [#tpu.dimension_semantics<parallel>], iteration_bounds = array<i64: 1>, scalar_prefetch = 0 : i64, scratch_operands = 0 : i64, tpu.core_type = #tpu.core_type<tc>, window_params = [{transform_indices = @transform_0, window_bounds = array<i64: 16, 784>}, {transform_indices = @transform_1, window_bounds = array<i64: 16, 16>}, {pipeline_mode = #tpu.pipeline_mode<synchronous>, transform_indices = @transform_2, window_bounds = array<i64: 784, 256>}, {pipeline_mode = #tpu.pipeline_mode<synchronous>, transform_indices = @transform_3, window_bounds = array<i64: 1, 256>}, {pipeline_mode = #tpu.pipeline_mode<synchronous>, transform_indices = @transform_4, window_bounds = array<i64: 256, 64>}, {pipeline_mode = #tpu.pipeline_mode<synchronous>, transform_indices = @transform_5, window_bounds = array<i64: 1, 64>}, {pipeline_mode = #tpu.pipeline_mode<synchronous>, transform_indices = @transform_6, window_bounds = array<i64: 64, 32>}, {pipeline_mode = #tpu.pipeline_mode<synchronous>, transform_indices = @transform_7, window_bounds = array<i64: 1, 32>}, {pipeline_mode = #tpu.pipeline_mode<synchronous>, transform_indices = @transform_8, window_bounds = array<i64: 16, 64>}, {pipeline_mode = #tpu.pipeline_mode<synchronous>, transform_indices = @transform_9, window_bounds = array<i64: 1, 64>}, {pipeline_mode = #tpu.pipeline_mode<synchronous>, transform_indices = @transform_10, window_bounds = array<i64: 64, 256>}, {pipeline_mode = #tpu.pipeline_mode<synchronous>, transform_indices = @transform_11, window_bounds = array<i64: 1, 256>}, {pipeline_mode = #tpu.pipeline_mode<synchronous>, transform_indices = @transform_12, window_bounds = array<i64: 256, 784>}, {pipeline_mode = #tpu.pipeline_mode<synchronous>, transform_indices = @transform_13, window_bounds = array<i64: 1, 784>}, {transform_indices = @transform_14, window_bounds = array<i64: 16, 784>}, {transform_indices = @transform_15, window_bounds = array<i64: 16, 32>}]} {
    %c0 = arith.constant 0 : index
    %c0_0 = arith.constant 0 : index
    %0 = vector.load %arg1[%c0, %c0_0] : memref<16x784xbf16, #tpu.memory_space<vmem>>, vector<16x784xbf16>
    %c0_1 = arith.constant 0 : index
    %c0_2 = arith.constant 0 : index
    %1 = vector.load %arg3[%c0_1, %c0_2] : memref<784x256xbf16, #tpu.memory_space<vmem>>, vector<784x256xbf16>
    %cst = arith.constant dense<0.000000e+00> : vector<16x256xf32>
    %2 = tpu.matmul %0, %1, %cst {dimension_numbers = #tpu.dot_dimension_numbers<[1], [0], [0], [1], [0, 0, 1, 1], [], []>} : vector<16x784xbf16>, vector<784x256xbf16>, vector<16x256xf32> -> vector<16x256xf32>
    %c0_3 = arith.constant 0 : index
    %c0_4 = arith.constant 0 : index
    %3 = vector.load %arg4[%c0_3, %c0_4] : memref<1x256xf32, #tpu.memory_space<vmem>>, vector<1x256xf32>
    %4 = vector.broadcast %3 : vector<1x256xf32> to vector<16x256xf32>
    %5 = arith.addf %2, %4 : vector<16x256xf32>
    %cst_5 = arith.constant 0.000000e+00 : f32
    %6 = vector.broadcast %cst_5 : f32 to vector<16x256xf32>
    %7 = arith.cmpf oge, %5, %6 : vector<16x256xf32>
    %cst_6 = arith.constant 2.000000e-01 : f32
    %8 = vector.broadcast %cst_6 : f32 to vector<16x256xf32>
    %9 = arith.mulf %8, %5 : vector<16x256xf32>
    %10 = arith.select %7, %5, %9 : vector<16x256xi1>, vector<16x256xf32>
    %11 = arith.truncf %10 : vector<16x256xf32> to vector<16x256xbf16>
    %c0_7 = arith.constant 0 : index
    %c0_8 = arith.constant 0 : index
    %12 = vector.load %arg5[%c0_7, %c0_8] : memref<256x64xbf16, #tpu.memory_space<vmem>>, vector<256x64xbf16>
    %cst_9 = arith.constant dense<0.000000e+00> : vector<16x64xf32>
    %13 = tpu.matmul %11, %12, %cst_9 {dimension_numbers = #tpu.dot_dimension_numbers<[1], [0], [0], [1], [0, 0, 1, 1], [], []>} : vector<16x256xbf16>, vector<256x64xbf16>, vector<16x64xf32> -> vector<16x64xf32>
    %c0_10 = arith.constant 0 : index
    %c0_11 = arith.constant 0 : index
    %14 = vector.load %arg6[%c0_10, %c0_11] : memref<1x64xf32, #tpu.memory_space<vmem>>, vector<1x64xf32>
    %15 = vector.broadcast %14 : vector<1x64xf32> to vector<16x64xf32>
    %16 = arith.addf %13, %15 : vector<16x64xf32>
    %cst_12 = arith.constant 0.000000e+00 : f32
    %17 = vector.broadcast %cst_12 : f32 to vector<16x64xf32>
    %18 = arith.cmpf oge, %16, %17 : vector<16x64xf32>
    %cst_13 = arith.constant 2.000000e-01 : f32
    %19 = vector.broadcast %cst_13 : f32 to vector<16x64xf32>
    %20 = arith.mulf %19, %16 : vector<16x64xf32>
    %21 = arith.select %18, %16, %20 : vector<16x64xi1>, vector<16x64xf32>
    %22 = arith.truncf %21 : vector<16x64xf32> to vector<16x64xbf16>
    %c0_14 = arith.constant 0 : index
    %c0_15 = arith.constant 0 : index
    %23 = vector.load %arg7[%c0_14, %c0_15] : memref<64x32xbf16, #tpu.memory_space<vmem>>, vector<64x32xbf16>
    %cst_16 = arith.constant dense<0.000000e+00> : vector<16x32xf32>
    %24 = tpu.matmul %22, %23, %cst_16 {dimension_numbers = #tpu.dot_dimension_numbers<[1], [0], [0], [1], [0, 0, 1, 1], [], []>} : vector<16x64xbf16>, vector<64x32xbf16>, vector<16x32xf32> -> vector<16x32xf32>
    %c0_17 = arith.constant 0 : index
    %c0_18 = arith.constant 0 : index
    %25 = vector.load %arg8[%c0_17, %c0_18] : memref<1x32xf32, #tpu.memory_space<vmem>>, vector<1x32xf32>
    %26 = vector.broadcast %25 : vector<1x32xf32> to vector<16x32xf32>
    %27 = arith.addf %24, %26 : vector<16x32xf32>
    %28 = vector.extract_strided_slice %27 {offsets = [0, 0], sizes = [16, 16], strides = [1, 1]} : vector<16x32xf32> to vector<16x16xf32>
    %29 = vector.extract_strided_slice %27 {offsets = [0, 16], sizes = [16, 16], strides = [1, 1]} : vector<16x32xf32> to vector<16x16xf32>
    %cst_19 = arith.constant 5.000000e-01 : f32
    %30 = vector.broadcast %cst_19 : f32 to vector<16x16xf32>
    %31 = arith.mulf %30, %29 : vector<16x16xf32>
    %32 = math.exp %31 : vector<16x16xf32>
    %c0_20 = arith.constant 0 : index
    %c0_21 = arith.constant 0 : index
    %33 = vector.load %arg2[%c0_20, %c0_21] : memref<16x16xf32, #tpu.memory_space<vmem>>, vector<16x16xf32>
    %34 = arith.mulf %33, %32 : vector<16x16xf32>
    %35 = arith.addf %28, %34 : vector<16x16xf32>
    %36 = arith.truncf %35 : vector<16x16xf32> to vector<16x16xbf16>
    %c0_22 = arith.constant 0 : index
    %c0_23 = arith.constant 0 : index
    %37 = vector.load %arg9[%c0_22, %c0_23] : memref<16x64xbf16, #tpu.memory_space<vmem>>, vector<16x64xbf16>
    %cst_24 = arith.constant dense<0.000000e+00> : vector<16x64xf32>
    %38 = tpu.matmul %36, %37, %cst_24 {dimension_numbers = #tpu.dot_dimension_numbers<[1], [0], [0], [1], [0, 0, 1, 1], [], []>} : vector<16x16xbf16>, vector<16x64xbf16>, vector<16x64xf32> -> vector<16x64xf32>
    %c0_25 = arith.constant 0 : index
    %c0_26 = arith.constant 0 : index
    %39 = vector.load %arg10[%c0_25, %c0_26] : memref<1x64xf32, #tpu.memory_space<vmem>>, vector<1x64xf32>
    %40 = vector.broadcast %39 : vector<1x64xf32> to vector<16x64xf32>
    %41 = arith.addf %38, %40 : vector<16x64xf32>
    %cst_27 = arith.constant 0.000000e+00 : f32
    %42 = vector.broadcast %cst_27 : f32 to vector<16x64xf32>
    %43 = arith.cmpf oge, %41, %42 : vector<16x64xf32>
    %cst_28 = arith.constant 2.000000e-01 : f32
    %44 = vector.broadcast %cst_28 : f32 to vector<16x64xf32>
    %45 = arith.mulf %44, %41 : vector<16x64xf32>
    %46 = arith.select %43, %41, %45 : vector<16x64xi1>, vector<16x64xf32>
    %47 = arith.truncf %46 : vector<16x64xf32> to vector<16x64xbf16>
    %c0_29 = arith.constant 0 : index
    %c0_30 = arith.constant 0 : index
    %48 = vector.load %arg11[%c0_29, %c0_30] : memref<64x256xbf16, #tpu.memory_space<vmem>>, vector<64x256xbf16>
    %cst_31 = arith.constant dense<0.000000e+00> : vector<16x256xf32>
    %49 = tpu.matmul %47, %48, %cst_31 {dimension_numbers = #tpu.dot_dimension_numbers<[1], [0], [0], [1], [0, 0, 1, 1], [], []>} : vector<16x64xbf16>, vector<64x256xbf16>, vector<16x256xf32> -> vector<16x256xf32>
    %c0_32 = arith.constant 0 : index
    %c0_33 = arith.constant 0 : index
    %50 = vector.load %arg12[%c0_32, %c0_33] : memref<1x256xf32, #tpu.memory_space<vmem>>, vector<1x256xf32>
    %51 = vector.broadcast %50 : vector<1x256xf32> to vector<16x256xf32>
    %52 = arith.addf %49, %51 : vector<16x256xf32>
    %cst_34 = arith.constant 0.000000e+00 : f32
    %53 = vector.broadcast %cst_34 : f32 to vector<16x256xf32>
    %54 = arith.cmpf oge, %52, %53 : vector<16x256xf32>
    %cst_35 = arith.constant 2.000000e-01 : f32
    %55 = vector.broadcast %cst_35 : f32 to vector<16x256xf32>
    %56 = arith.mulf %55, %52 : vector<16x256xf32>
    %57 = arith.select %54, %52, %56 : vector<16x256xi1>, vector<16x256xf32>
    %58 = arith.truncf %57 : vector<16x256xf32> to vector<16x256xbf16>
    %c0_36 = arith.constant 0 : index
    %c0_37 = arith.constant 0 : index
    %59 = vector.load %arg13[%c0_36, %c0_37] : memref<256x784xbf16, #tpu.memory_space<vmem>>, vector<256x784xbf16>
    %cst_38 = arith.constant dense<0.000000e+00> : vector<16x784xf32>
    %60 = tpu.matmul %58, %59, %cst_38 {dimension_numbers = #tpu.dot_dimension_numbers<[1], [0], [0], [1], [0, 0, 1, 1], [], []>} : vector<16x256xbf16>, vector<256x784xbf16>, vector<16x784xf32> -> vector<16x784xf32>
    %c0_39 = arith.constant 0 : index
    %c0_40 = arith.constant 0 : index
    %61 = vector.load %arg14[%c0_39, %c0_40] : memref<1x784xf32, #tpu.memory_space<vmem>>, vector<1x784xf32>
    %62 = vector.broadcast %61 : vector<1x784xf32> to vector<16x784xf32>
    %63 = arith.addf %60, %62 : vector<16x784xf32>
    %c0_41 = arith.constant 0 : index
    %c0_42 = arith.constant 0 : index
    %64 = vector.load %arg15[%c0_41, %c0_42] : memref<16x784xf32, #tpu.memory_space<vmem>>, vector<16x784xf32>
    tpu.vector_store %arg15[%c0_41, %c0_42], %63 {strides = array<i32>} : memref<16x784xf32, #tpu.memory_space<vmem>>, vector<16x784xf32>,
    %c0_43 = arith.constant 0 : index
    %c0_44 = arith.constant 0 : index
    %65 = vector.load %arg16[%c0_43, %c0_44] : memref<16x32xf32, #tpu.memory_space<vmem>>, vector<16x32xf32>
    tpu.vector_store %arg16[%c0_43, %c0_44], %27 {strides = array<i32>} : memref<16x32xf32, #tpu.memory_space<vmem>>, vector<16x32xf32>,
    return
  }
  func.func @transform_0(%arg0: i32) -> (i32, i32) {
    %c0_i32 = arith.constant 0 : i32
    %c0_i32_0 = arith.constant 0 : i32
    return %arg0, %c0_i32 : i32, i32
  }
  func.func @transform_1(%arg0: i32) -> (i32, i32) {
    %c0_i32 = arith.constant 0 : i32
    %c0_i32_0 = arith.constant 0 : i32
    return %arg0, %c0_i32 : i32, i32
  }
  func.func @transform_2(%arg0: i32) -> (i32, i32) {
    %c0_i32 = arith.constant 0 : i32
    %c0_i32_0 = arith.constant 0 : i32
    %c0_i32_1 = arith.constant 0 : i32
    return %c0_i32, %c0_i32_0 : i32, i32
  }
  func.func @transform_3(%arg0: i32) -> (i32, i32) {
    %c0_i32 = arith.constant 0 : i32
    %c0_i32_0 = arith.constant 0 : i32
    %c0_i32_1 = arith.constant 0 : i32
    return %c0_i32, %c0_i32_0 : i32, i32
  }
  func.func @transform_4(%arg0: i32) -> (i32, i32) {
    %c0_i32 = arith.constant 0 : i32
    %c0_i32_0 = arith.constant 0 : i32
    %c0_i32_1 = arith.constant 0 : i32
    return %c0_i32, %c0_i32_0 : i32, i32
  }
  func.func @transform_5(%arg0: i32) -> (i32, i32) {
    %c0_i32 = arith.constant 0 : i32
    %c0_i32_0 = arith.constant 0 : i32
    %c0_i32_1 = arith.constant 0 : i32
    return %c0_i32, %c0_i32_0 : i32, i32
  }
  func.func @transform_6(%arg0: i32) -> (i32, i32) {
    %c0_i32 = arith.constant 0 : i32
    %c0_i32_0 = arith.constant 0 : i32
    %c0_i32_1 = arith.constant 0 : i32
    return %c0_i32, %c0_i32_0 : i32, i32
  }
  func.func @transform_7(%arg0: i32) -> (i32, i32) {
    %c0_i32 = arith.constant 0 : i32
    %c0_i32_0 = arith.constant 0 : i32
    %c0_i32_1 = arith.constant 0 : i32
    return %c0_i32, %c0_i32_0 : i32, i32
  }
  func.func @transform_8(%arg0: i32) -> (i32, i32) {
    %c0_i32 = arith.constant 0 : i32
    %c0_i32_0 = arith.constant 0 : i32
    %c0_i32_1 = arith.constant 0 : i32
    return %c0_i32, %c0_i32_0 : i32, i32
  }
  func.func @transform_9(%arg0: i32) -> (i32, i32) {
    %c0_i32 = arith.constant 0 : i32
    %c0_i32_0 = arith.constant 0 : i32
    %c0_i32_1 = arith.constant 0 : i32
    return %c0_i32, %c0_i32_0 : i32, i32
  }
  func.func @transform_10(%arg0: i32) -> (i32, i32) {
    %c0_i32 = arith.constant 0 : i32
    %c0_i32_0 = arith.constant 0 : i32
    %c0_i32_1 = arith.constant 0 : i32
    return %c0_i32, %c0_i32_0 : i32, i32
  }
  func.func @transform_11(%arg0: i32) -> (i32, i32) {
    %c0_i32 = arith.constant 0 : i32
    %c0_i32_0 = arith.constant 0 : i32
    %c0_i32_1 = arith.constant 0 : i32
    return %c0_i32, %c0_i32_0 : i32, i32
  }
  func.func @transform_12(%arg0: i32) -> (i32, i32) {
    %c0_i32 = arith.constant 0 : i32
    %c0_i32_0 = arith.constant 0 : i32
    %c0_i32_1 = arith.constant 0 : i32
    return %c0_i32, %c0_i32_0 : i32, i32
  }
  func.func @transform_13(%arg0: i32) -> (i32, i32) {
    %c0_i32 = arith.constant 0 : i32
    %c0_i32_0 = arith.constant 0 : i32
    %c0_i32_1 = arith.constant 0 : i32
    return %c0_i32, %c0_i32_0 : i32, i32
  }
  func.func @transform_14(%arg0: i32) -> (i32, i32) {
    %c0_i32 = arith.constant 0 : i32
    %c0_i32_0 = arith.constant 0 : i32
    return %arg0, %c0_i32 : i32, i32
  }
  func.func @transform_15(%arg0: i32) -> (i32, i32) {
    %c0_i32 = arith.constant 0 : i32
    %c0_i32_0 = arith.constant 0 : i32
    return %arg0, %c0_i32 : i32, i32
  }
}

</mosaic_0001>

<llo_original>
// kernel: _vae_forward_padded.1
$region0: #{_vae_forward_padded.1}
  #allocation0 [shape = 'u32[]', space=smem, size = 0x4, offset = 0x4, fixed_abs, tag = 'smem constant byte address 0x4 - core index']
  #allocation1 [shape = 'u32[72,128]{1,0:T(1,128)}', space=vmem, size = 0x9000, scoped, tag = 'internal scratch']
  %s0 = inlined_call_operand.vmem [shape: bf16[16,784], index: 0, kind: input, shape index: {}]
  %s1 = inlined_call_operand.vmem [shape: f32[16,16], index: 1, kind: input, shape index: {}]
  %s2 = inlined_call_operand.vmem [shape: bf16[784,256], index: 2, kind: input, shape index: {}]
  %s3 = inlined_call_operand.vmem [shape: f32[1,256], index: 3, kind: input, shape index: {}]
  %s4 = inlined_call_operand.vmem [shape: bf16[256,64], index: 4, kind: input, shape index: {}]
  %s5 = inlined_call_operand.vmem [shape: f32[1,64], index: 5, kind: input, shape index: {}]
  %s6 = inlined_call_operand.vmem [shape: bf16[64,32], index: 6, kind: input, shape index: {}]
  %s7 = inlined_call_operand.vmem [shape: f32[1,32], index: 7, kind: input, shape index: {}]
  %s8 = inlined_call_operand.vmem [shape: bf16[16,64], index: 8, kind: input, shape index: {}]
  %s9 = inlined_call_operand.vmem [shape: f32[1,64], index: 9, kind: input, shape index: {}]
  %s10 = inlined_call_operand.vmem [shape: bf16[64,256], index: 10, kind: input, shape index: {}]
  %s11 = inlined_call_operand.vmem [shape: f32[1,256], index: 11, kind: input, shape index: {}]
  %s12 = inlined_call_operand.vmem [shape: bf16[256,784], index: 12, kind: input, shape index: {}]
  %s13 = inlined_call_operand.vmem [shape: f32[1,784], index: 13, kind: input, shape index: {}]
  %s14 = inlined_call_operand.hbm [shape: f32[16,784], index: 14, kind: output, shape index: {0}]
  %s15 = inlined_call_operand.hbm [shape: f32[16,32], index: 15, kind: output, shape index: {1}]
  %16 = xla_tuple %s14, %s15
  %s17 = sld [smem:[#allocation0]]
  $region74: #{_vae_forward_padded.1} parent=0
    _
  %s19 = ssub.s32 1, %s17
  %s20 = scalar_select 0, %s19, %s17
  $region1: #{_vae_forward_padded.1} parent=0
    #allocation2 [shape = 'u8[57344]{0}', space=vmem, size = 0xe000, scoped, tag = 'output window, operand 0, single buffered']
    #allocation3 [shape = 's32[1]{0}', space=sflag, size = 0x4, scoped, tag = 'scoped memory for _vae_forward_padded.1']
    #allocation4 [shape = 'u8[8192]{0}', space=vmem, size = 0x2000, scoped, tag = 'output window, operand 1, single buffered']
    #allocation5 [shape = 's32[1]{0}', space=sflag, size = 0x4, scoped, tag = 'scoped memory for _vae_forward_padded.1']
    %21 = vsyncpa [#allocation3], 0
    %22 = vsyncpa [#allocation5], 0
    // Predicated region
    $region2: #{_vae_forward_padded.1} parent=1 // pred_check
      _
    $region3: #{_vae_forward_padded.1} parent=1 // pred_check_branch
      %24 = sbr.rel (0) target = $region5
    $region4: #{_vae_forward_padded.1} parent=1 // pred_region
      _
    $region5: #{_vae_forward_padded.1} parent=1 // pred_fallthru
      _
    // Predicated region
    $region6: #{_vae_forward_padded.1} parent=1 // pred_check
      _
    $region7: #{_vae_forward_padded.1} parent=1 // pred_check_branch
      %26 = sbr.rel (0) target = $region9
    $region8: #{_vae_forward_padded.1} parent=1 // pred_region
      _
    $region9: #{_vae_forward_padded.1} parent=1 // pred_fallthru
      _
    // Predicated region
    $region10: #{_vae_forward_padded.1} parent=1 // pred_check
      _
    $region11: #{_vae_forward_padded.1} parent=1 // pred_check_branch
      %28 = sbr.rel (0) target = $region13
    $region12: #{_vae_forward_padded.1} parent=1 // pred_region
      _
    $region13: #{_vae_forward_padded.1} parent=1 // pred_fallthru
      _
    // Predicated region
    $region14: #{_vae_forward_padded.1} parent=1 // pred_check
      _
    $region15: #{_vae_forward_padded.1} parent=1 // pred_check_branch
      %30 = sbr.rel (0) target = $region17
    $region16: #{_vae_forward_padded.1} parent=1 // pred_region
      _
    $region17: #{_vae_forward_padded.1} parent=1 // pred_fallthru
      _
    // Predicated region
    $region18: #{_vae_forward_padded.1} parent=1 // pred_check
      _
    $region19: #{_vae_forward_padded.1} parent=1 // pred_check_branch
      %32 = sbr.rel (0) target = $region21
    $region20: #{_vae_forward_padded.1} parent=1 // pred_region
      _
    $region21: #{_vae_forward_padded.1} parent=1 // pred_fallthru
      _
    // Predicated region
    $region22: #{_vae_forward_padded.1} parent=1 // pred_check
      _
    $region23: #{_vae_forward_padded.1} parent=1 // pred_check_branch
      %34 = sbr.rel (0) target = $region25
    $region24: #{_vae_forward_padded.1} parent=1 // pred_region
      _
    $region25: #{_vae_forward_padded.1} parent=1 // pred_fallthru
      _
    // Predicated region
    $region26: #{_vae_forward_padded.1} parent=1 // pred_check
      _
    $region27: #{_vae_forward_padded.1} parent=1 // pred_check_branch
      %36 = sbr.rel (0) target = $region29
    $region28: #{_vae_forward_padded.1} parent=1 // pred_region
      _
    $region29: #{_vae_forward_padded.1} parent=1 // pred_fallthru
      _
    // Predicated region
    $region30: #{_vae_forward_padded.1} parent=1 // pred_check
      _
    $region31: #{_vae_forward_padded.1} parent=1 // pred_check_branch
      %38 = sbr.rel (0) target = $region33
    $region32: #{_vae_forward_padded.1} parent=1 // pred_region
      _
    $region33: #{_vae_forward_padded.1} parent=1 // pred_fallthru
      _
    // Predicated region
    $region34: #{_vae_forward_padded.1} parent=1 // pred_check
      _
    $region35: #{_vae_forward_padded.1} parent=1 // pred_check_branch
      %40 = sbr.rel (0) target = $region37
    $region36: #{_vae_forward_padded.1} parent=1 // pred_region
      _
    $region37: #{_vae_forward_padded.1} parent=1 // pred_fallthru
      _
    // Predicated region
    $region38: #{_vae_forward_padded.1} parent=1 // pred_check
      _
    $region39: #{_vae_forward_padded.1} parent=1 // pred_check_branch
      %42 = sbr.rel (0) target = $region41
    $region40: #{_vae_forward_padded.1} parent=1 // pred_region
      _
    $region41: #{_vae_forward_padded.1} parent=1 // pred_fallthru
      _
    // Predicated region
    $region42: #{_vae_forward_padded.1} parent=1 // pred_check
      _
    $region43: #{_vae_forward_padded.1} parent=1 // pred_check_branch
      %44 = sbr.rel (0) target = $region45
    $region44: #{_vae_forward_padded.1} parent=1 // pred_region
      _
    $region45: #{_vae_forward_padded.1} parent=1 // pred_fallthru
      _
    // Predicated region
    $region46: #{_vae_forward_padded.1} parent=1 // pred_check
      _
    $region47: #{_vae_forward_padded.1} parent=1 // pred_check_branch
      %46 = sbr.rel (0) target = $region49
    $region48: #{_vae_forward_padded.1} parent=1 // pred_region
      _
    $region49: #{_vae_forward_padded.1} parent=1 // pred_fallthru
      _
    // Predicated region
    $region50: #{_vae_forward_padded.1} parent=1 // pred_check
      _
    $region51: #{_vae_forward_padded.1} parent=1 // pred_check_branch
      %48 = sbr.rel (0) target = $region53
    $region52: #{_vae_forward_padded.1} parent=1 // pred_region
      _
    $region53: #{_vae_forward_padded.1} parent=1 // pred_fallthru
      _
    // Predicated region
    $region54: #{_vae_forward_padded.1} parent=1 // pred_check
      _
    $region55: #{_vae_forward_padded.1} parent=1 // pred_check_branch
      %50 = sbr.rel (0) target = $region57
    $region56: #{_vae_forward_padded.1} parent=1 // pred_region
      _
    $region57: #{_vae_forward_padded.1} parent=1 // pred_fallthru
      _
    %v52 = vld [vmem:[%s0] sm:$0xff]
    %v53 = vld [vmem:[%s0 + $0x8] sm:$0xff]
    %v54 = vld [vmem:[%s0 + $0x10] sm:$0xff]
    %v55 = vld [vmem:[%s0 + $0x18] sm:$0xf]
    %v56 = vld [vmem:[%s0 + $0x1c] sm:$0xff]
    %v57 = vld [vmem:[%s0 + $0x24] sm:$0xff]
    %v58 = vld [vmem:[%s0 + $0x2c] sm:$0xff]
    %v59 = vld [vmem:[%s0 + $0x34] sm:$0xf]
    %v60 = vld [vmem:[%s2] sm:$0xff]
    %v61 = vld [vmem:[%s2 + $0x8] sm:$0xff]
    %v62 = vld [vmem:[%s2 + $0x10] sm:$0xff]
    %v63 = vld [vmem:[%s2 + $0x18] sm:$0xff]
    %v64 = vld [vmem:[%s2 + $0x20] sm:$0xff]
    %v65 = vld [vmem:[%s2 + $0x28] sm:$0xff]
    %v66 = vld [vmem:[%s2 + $0x30] sm:$0xff]
    %v67 = vld [vmem:[%s2 + $0x38] sm:$0xff]
    %v68 = vld [vmem:[%s2 + $0x40] sm:$0xff]
    %v69 = vld [vmem:[%s2 + $0x48] sm:$0xff]
    %v70 = vld [vmem:[%s2 + $0x50] sm:$0xff]
    %v71 = vld [vmem:[%s2 + $0x58] sm:$0xff]
    %v72 = vld [vmem:[%s2 + $0x60] sm:$0xff]
    %v73 = vld [vmem:[%s2 + $0x68] sm:$0xff]
    %v74 = vld [vmem:[%s2 + $0x70] sm:$0xff]
    %v75 = vld [vmem:[%s2 + $0x78] sm:$0xff]
    %v76 = vld [vmem:[%s2 + $0x80] sm:$0xff]
    %v77 = vld [vmem:[%s2 + $0x88] sm:$0xff]
    %v78 = vld [vmem:[%s2 + $0x90] sm:$0xff]
    %v79 = vld [vmem:[%s2 + $0x98] sm:$0xff]
    %v80 = vld [vmem:[%s2 + $0xa0] sm:$0xff]
    %v81 = vld [vmem:[%s2 + $0xa8] sm:$0xff]
    %v82 = vld [vmem:[%s2 + $0xb0] sm:$0xff]
    %v83 = vld [vmem:[%s2 + $0xb8] sm:$0xff]
    %v84 = vld [vmem:[%s2 + $0xc0] sm:$0xff]
    %v85 = vld [vmem:[%s2 + $0xc8] sm:$0xff]
    %v86 = vld [vmem:[%s2 + $0xd0] sm:$0xff]
    %v87 = vld [vmem:[%s2 + $0xd8] sm:$0xff]
    %v88 = vld [vmem:[%s2 + $0xe0] sm:$0xff]
    %v89 = vld [vmem:[%s2 + $0xe8] sm:$0xff]
    %v90 = vld [vmem:[%s2 + $0xf0] sm:$0xff]
    %v91 = vld [vmem:[%s2 + $0xf8] sm:$0xff]
    %v92 = vld [vmem:[%s2 + $0x100] sm:$0xff]
    %v93 = vld [vmem:[%s2 + $0x108] sm:$0xff]
    %v94 = vld [vmem:[%s2 + $0x110] sm:$0xff]
    %v95 = vld [vmem:[%s2 + $0x118] sm:$0xff]
    %v96 = vld [vmem:[%s2 + $0x120] sm:$0xff]
    %v97 = vld [vmem:[%s2 + $0x128] sm:$0xff]
    %v98 = vld [vmem:[%s2 + $0x130] sm:$0xff]
    %v99 = vld [vmem:[%s2 + $0x138] sm:$0xff]
    %v100 = vld [vmem:[%s2 + $0x140] sm:$0xff]
    %v101 = vld [vmem:[%s2 + $0x148] sm:$0xff]
    %v102 = vld [vmem:[%s2 + $0x150] sm:$0xff]
    %v103 = vld [vmem:[%s2 + $0x158] sm:$0xff]
    %v104 = vld [vmem:[%s2 + $0x160] sm:$0xff]
    %v105 = vld [vmem:[%s2 + $0x168] sm:$0xff]
    %v106 = vld [vmem:[%s2 + $0x170] sm:$0xff]
    %v107 = vld [vmem:[%s2 + $0x178] sm:$0xff]
    %v108 = vld [vmem:[%s2 + $0x180] sm:$0xff]
    %v109 = vld [vmem:[%s2 + $0x188] sm:$0xff]
    %v110 = vld [vmem:[%s2 + $0x190] sm:$0xff]
    %v111 = vld [vmem:[%s2 + $0x198] sm:$0xff]
    %v112 = vld [vmem:[%s2 + $0x1a0] sm:$0xff]
    %v113 = vld [vmem:[%s2 + $0x1a8] sm:$0xff]
    %v114 = vld [vmem:[%s2 + $0x1b0] sm:$0xff]
    %v115 = vld [vmem:[%s2 + $0x1b8] sm:$0xff]
    %v116 = vld [vmem:[%s2 + $0x1c0] sm:$0xff]
    %v117 = vld [vmem:[%s2 + $0x1c8] sm:$0xff]
    %v118 = vld [vmem:[%s2 + $0x1d0] sm:$0xff]
    %v119 = vld [vmem:[%s2 + $0x1d8] sm:$0xff]
    %v120 = vld [vmem:[%s2 + $0x1e0] sm:$0xff]
    %v121 = vld [vmem:[%s2 + $0x1e8] sm:$0xff]
    %v122 = vld [vmem:[%s2 + $0x1f0] sm:$0xff]
    %v123 = vld [vmem:[%s2 + $0x1f8] sm:$0xff]
    %v124 = vld [vmem:[%s2 + $0x200] sm:$0xff]
    %v125 = vld [vmem:[%s2 + $0x208] sm:$0xff]
    %v126 = vld [vmem:[%s2 + $0x210] sm:$0xff]
    %v127 = vld [vmem:[%s2 + $0x218] sm:$0xff]
    %v128 = vld [vmem:[%s2 + $0x220] sm:$0xff]
    %v129 = vld [vmem:[%s2 + $0x228] sm:$0xff]
    %v130 = vld [vmem:[%s2 + $0x230] sm:$0xff]
    %v131 = vld [vmem:[%s2 + $0x238] sm:$0xff]
    %v132 = vld [vmem:[%s2 + $0x240] sm:$0xff]
    %v133 = vld [vmem:[%s2 + $0x248] sm:$0xff]
    %v134 = vld [vmem:[%s2 + $0x250] sm:$0xff]
    %v135 = vld [vmem:[%s2 + $0x258] sm:$0xff]
    %v136 = vld [vmem:[%s2 + $0x260] sm:$0xff]
    %v137 = vld [vmem:[%s2 + $0x268] sm:$0xff]
    %v138 = vld [vmem:[%s2 + $0x270] sm:$0xff]
    %v139 = vld [vmem:[%s2 + $0x278] sm:$0xff]
    %v140 = vld [vmem:[%s2 + $0x280] sm:$0xff]
    %v141 = vld [vmem:[%s2 + $0x288] sm:$0xff]
    %v142 = vld [vmem:[%s2 + $0x290] sm:$0xff]
    %v143 = vld [vmem:[%s2 + $0x298] sm:$0xff]
    %v144 = vld [vmem:[%s2 + $0x2a0] sm:$0xff]
    %v145 = vld [vmem:[%s2 + $0x2a8] sm:$0xff]
    %v146 = vld [vmem:[%s2 + $0x2b0] sm:$0xff]
    %v147 = vld [vmem:[%s2 + $0x2b8] sm:$0xff]
    %v148 = vld [vmem:[%s2 + $0x2c0] sm:$0xff]
    %v149 = vld [vmem:[%s2 + $0x2c8] sm:$0xff]
    %v150 = vld [vmem:[%s2 + $0x2d0] sm:$0xff]
    %v151 = vld [vmem:[%s2 + $0x2d8] sm:$0xff]
    %v152 = vld [vmem:[%s2 + $0x2e0] sm:$0xff]
    %v153 = vld [vmem:[%s2 + $0x2e8] sm:$0xff]
    %v154 = vld [vmem:[%s2 + $0x2f0] sm:$0xff]
    %v155 = vld [vmem:[%s2 + $0x2f8] sm:$0xff]
    %v156 = vld [vmem:[%s2 + $0x300] sm:$0xff]
    %v157 = vld [vmem:[%s2 + $0x308] sm:$0xff]
    %v158 = vld [vmem:[%s3] sm:$0x3]
    %v160 = vperm.slane %v158, 0
    %v161 = vperm.slane %v158, 1
    %v172 = vunpack.c.l.b16 %v52
    %v173 = vunpack.c.h.b16 %v52
    %v174 = vunpack.c.l.b16 %v53
    %v175 = vunpack.c.h.b16 %v53
    %v176 = vunpack.c.l.b16 %v54
    %v177 = vunpack.c.h.b16 %v54
    %v178 = vunpack.c.l.b16 %v55
    %v179 = vunpack.c.l.b16 %v56
    %v180 = vunpack.c.h.b16 %v56
    %v181 = vunpack.c.l.b16 %v57
    %v182 = vunpack.c.h.b16 %v57
    %v183 = vunpack.c.l.b16 %v58
    %v184 = vunpack.c.h.b16 %v58
    %v185 = vunpack.c.l.b16 %v59
    %v186 = vpack.c.b16 %v179, %v172
    %v187 = vpack.c.b16 %v180, %v173
    %v188 = vpack.c.b16 %v181, %v174
    %v189 = vpack.c.b16 %v182, %v175
    %v190 = vpack.c.b16 %v183, %v176
    %v191 = vpack.c.b16 %v184, %v177
    %v192 = vpack.c.b16 %v185, %v178
    %v297 = vunpack.c.l.b16 %v60
    %v298 = vunpack.c.h.b16 %v60
    %v299 = vunpack.c.l.b16 %v61
    %v300 = vunpack.c.h.b16 %v61
    %v301 = vunpack.c.l.b16 %v62
    %v302 = vunpack.c.h.b16 %v62
    %v303 = vunpack.c.l.b16 %v63
    %v304 = vunpack.c.h.b16 %v63
    %v305 = vunpack.c.l.b16 %v64
    %v306 = vunpack.c.h.b16 %v64
    %v307 = vunpack.c.l.b16 %v65
    %v308 = vunpack.c.h.b16 %v65
    %v309 = vunpack.c.l.b16 %v66
    %v310 = vunpack.c.h.b16 %v66
    %v311 = vunpack.c.l.b16 %v67
    %v312 = vunpack.c.h.b16 %v67
    %v313 = vunpack.c.l.b16 %v68
    %v314 = vunpack.c.h.b16 %v68
    %v315 = vunpack.c.l.b16 %v69
    %v316 = vunpack.c.h.b16 %v69
    %v317 = vunpack.c.l.b16 %v70
    %v318 = vunpack.c.h.b16 %v70
    %v319 = vunpack.c.l.b16 %v71
    %v320 = vunpack.c.h.b16 %v71
    %v321 = vunpack.c.l.b16 %v72
    %v322 = vunpack.c.h.b16 %v72
    %v323 = vunpack.c.l.b16 %v73
    %v324 = vunpack.c.h.b16 %v73
    %v325 = vunpack.c.l.b16 %v74
    %v326 = vunpack.c.h.b16 %v74
    %v327 = vunpack.c.l.b16 %v75
    %v328 = vunpack.c.h.b16 %v75
    %v329 = vunpack.c.l.b16 %v76
    %v330 = vunpack.c.h.b16 %v76
    %v331 = vunpack.c.l.b16 %v77
    %v332 = vunpack.c.h.b16 %v77
    %v333 = vunpack.c.l.b16 %v78
    %v334 = vunpack.c.h.b16 %v78
    %v335 = vunpack.c.l.b16 %v79
    %v336 = vunpack.c.h.b16 %v79
    %v337 = vunpack.c.l.b16 %v80
    %v338 = vunpack.c.h.b16 %v80
    %v339 = vunpack.c.l.b16 %v81
    %v340 = vunpack.c.h.b16 %v81
    %v341 = vunpack.c.l.b16 %v82
    %v342 = vunpack.c.h.b16 %v82
    %v343 = vunpack.c.l.b16 %v83
    %v344 = vunpack.c.h.b16 %v83
    %v345 = vunpack.c.l.b16 %v84
    %v346 = vunpack.c.h.b16 %v84
    %v347 = vunpack.c.l.b16 %v85
    %v348 = vunpack.c.h.b16 %v85
    %v349 = vunpack.c.l.b16 %v86
    %v350 = vunpack.c.h.b16 %v86
    %v351 = vunpack.c.l.b16 %v87
    %v352 = vunpack.c.h.b16 %v87
    %v353 = vunpack.c.l.b16 %v88
    %v354 = vunpack.c.h.b16 %v88
    %v355 = vunpack.c.l.b16 %v89
    %v356 = vunpack.c.h.b16 %v89
    %v357 = vunpack.c.l.b16 %v90
    %v358 = vunpack.c.h.b16 %v90
    %v359 = vunpack.c.l.b16 %v91
    %v360 = vunpack.c.h.b16 %v91
    %v361 = vunpack.c.l.b16 %v92
    %v362 = vunpack.c.h.b16 %v92
    %v363 = vunpack.c.l.b16 %v93
    %v364 = vunpack.c.h.b16 %v93
    %v365 = vunpack.c.l.b16 %v94
    %v366 = vunpack.c.h.b16 %v94
    %v367 = vunpack.c.l.b16 %v95
    %v368 = vunpack.c.h.b16 %v95
    %v369 = vunpack.c.l.b16 %v96
    %v370 = vunpack.c.h.b16 %v96
    %v371 = vunpack.c.l.b16 %v97
    %v372 = vunpack.c.h.b16 %v97
    %v373 = vunpack.c.l.b16 %v98
    %v374 = vunpack.c.h.b16 %v98
    %v375 = vunpack.c.l.b16 %v99
    %v376 = vunpack.c.h.b16 %v99
    %v377 = vunpack.c.l.b16 %v100
    %v378 = vunpack.c.h.b16 %v100
    %v379 = vunpack.c.l.b16 %v101
    %v380 = vunpack.c.h.b16 %v101
    %v381 = vunpack.c.l.b16 %v102
    %v382 = vunpack.c.h.b16 %v102
    %v383 = vunpack.c.l.b16 %v103
    %v384 = vunpack.c.h.b16 %v103
    %v385 = vunpack.c.l.b16 %v104
    %v386 = vunpack.c.h.b16 %v104
    %v387 = vunpack.c.l.b16 %v105
    %v388 = vunpack.c.h.b16 %v105
    %v389 = vunpack.c.l.b16 %v106
    %v390 = vunpack.c.h.b16 %v106
    %v391 = vunpack.c.l.b16 %v107
    %v392 = vunpack.c.h.b16 %v107
    %v393 = vunpack.c.l.b16 %v108
    %v394 = vunpack.c.h.b16 %v108
    %v395 = vunpack.c.l.b16 %v109
    %v396 = vunpack.c.h.b16 %v109
    %v397 = vunpack.c.l.b16 %v110
    %v398 = vunpack.c.h.b16 %v110
    %v399 = vunpack.c.l.b16 %v111
    %v400 = vunpack.c.h.b16 %v111
    %v401 = vunpack.c.l.b16 %v112
    %v402 = vunpack.c.h.b16 %v112
    %v403 = vunpack.c.l.b16 %v113
    %v404 = vunpack.c.h.b16 %v113
    %v405 = vunpack.c.l.b16 %v114
    %v406 = vunpack.c.h.b16 %v114
    %v407 = vunpack.c.l.b16 %v115
    %v408 = vunpack.c.h.b16 %v115
    %v409 = vunpack.c.l.b16 %v116
    %v410 = vunpack.c.h.b16 %v116
    %v411 = vunpack.c.l.b16 %v117
    %v412 = vunpack.c.h.b16 %v117
    %v413 = vunpack.c.l.b16 %v118
    %v414 = vunpack.c.h.b16 %v118
    %v415 = vunpack.c.l.b16 %v119
    %v416 = vunpack.c.h.b16 %v119
    %v417 = vunpack.c.l.b16 %v120
    %v418 = vunpack.c.h.b16 %v120
    %v419 = vunpack.c.l.b16 %v121
    %v420 = vunpack.c.h.b16 %v121
    %v421 = vunpack.c.l.b16 %v122
    %v422 = vunpack.c.h.b16 %v122
    %v423 = vunpack.c.l.b16 %v123
    %v424 = vunpack.c.h.b16 %v123
    %v425 = vunpack.c.l.b16 %v124
    %v426 = vunpack.c.h.b16 %v124
    %v427 = vunpack.c.l.b16 %v125
    %v428 = vunpack.c.h.b16 %v125
    %v429 = vunpack.c.l.b16 %v126
    %v430 = vunpack.c.h.b16 %v126
    %v431 = vunpack.c.l.b16 %v127
    %v432 = vunpack.c.h.b16 %v127
    %v433 = vunpack.c.l.b16 %v128
    %v434 = vunpack.c.h.b16 %v128
    %v435 = vunpack.c.l.b16 %v129
    %v436 = vunpack.c.h.b16 %v129
    %v437 = vunpack.c.l.b16 %v130
    %v438 = vunpack.c.h.b16 %v130
    %v439 = vunpack.c.l.b16 %v131
    %v440 = vunpack.c.h.b16 %v131
    %v441 = vunpack.c.l.b16 %v132
    %v442 = vunpack.c.h.b16 %v132
    %v443 = vunpack.c.l.b16 %v133
    %v444 = vunpack.c.h.b16 %v133
    %v445 = vunpack.c.l.b16 %v134
    %v446 = vunpack.c.h.b16 %v134
    %v447 = vunpack.c.l.b16 %v135
    %v448 = vunpack.c.h.b16 %v135
    %v449 = vunpack.c.l.b16 %v136
    %v450 = vunpack.c.h.b16 %v136
    %v451 = vunpack.c.l.b16 %v137
    %v452 = vunpack.c.h.b16 %v137
    %v453 = vunpack.c.l.b16 %v138
    %v454 = vunpack.c.h.b16 %v138
    %v455 = vunpack.c.l.b16 %v139
    %v456 = vunpack.c.h.b16 %v139
    %v457 = vunpack.c.l.b16 %v140
    %v458 = vunpack.c.h.b16 %v140
    %v459 = vunpack.c.l.b16 %v141
    %v460 = vunpack.c.h.b16 %v141
    %v461 = vunpack.c.l.b16 %v142
    %v462 = vunpack.c.h.b16 %v142
    %v463 = vunpack.c.l.b16 %v143
    %v464 = vunpack.c.h.b16 %v143
    %v465 = vunpack.c.l.b16 %v144
    %v466 = vunpack.c.h.b16 %v144
    %v467 = vunpack.c.l.b16 %v145
    %v468 = vunpack.c.h.b16 %v145
    %v469 = vunpack.c.l.b16 %v146
    %v470 = vunpack.c.h.b16 %v146
    %v471 = vunpack.c.l.b16 %v147
    %v472 = vunpack.c.h.b16 %v147
    %v473 = vunpack.c.l.b16 %v148
    %v474 = vunpack.c.h.b16 %v148
    %v475 = vunpack.c.l.b16 %v149
    %v476 = vunpack.c.h.b16 %v149
    %v477 = vunpack.c.l.b16 %v150
    %v478 = vunpack.c.h.b16 %v150
    %v479 = vunpack.c.l.b16 %v151
    %v480 = vunpack.c.h.b16 %v151
    %v481 = vunpack.c.l.b16 %v152
    %v482 = vunpack.c.h.b16 %v152
    %v483 = vunpack.c.l.b16 %v153
    %v484 = vunpack.c.h.b16 %v153
    %v485 = vunpack.c.l.b16 %v154
    %v486 = vunpack.c.h.b16 %v154
    %v487 = vunpack.c.l.b16 %v155
    %v488 = vunpack.c.h.b16 %v155
    %v489 = vunpack.c.l.b16 %v156
    %v490 = vunpack.c.h.b16 %v156
    %v491 = vunpack.c.l.b16 %v157
    %v492 = vunpack.c.h.b16 %v157
    %v493 = vpack.c.b16 %v299, %v297
    %v494 = vpack.c.b16 %v300, %v298
    %v495 = vpack.c.b16 %v303, %v301
    %v496 = vpack.c.b16 %v304, %v302
    %v497 = vpack.c.b16 %v307, %v305
    %v498 = vpack.c.b16 %v308, %v306
    %v499 = vpack.c.b16 %v311, %v309
    %v500 = vpack.c.b16 %v312, %v310
    %v501 = vpack.c.b16 %v315, %v313
    %v502 = vpack.c.b16 %v316, %v314
    %v503 = vpack.c.b16 %v319, %v317
    %v504 = vpack.c.b16 %v320, %v318
    %v505 = vpack.c.b16 %v323, %v321
    %v506 = vpack.c.b16 %v324, %v322
    %v507 = vpack.c.b16 %v327, %v325
    %v508 = vpack.c.b16 %v328, %v326
    %v509 = vpack.c.b16 %v331, %v329
    %v510 = vpack.c.b16 %v332, %v330
    %v511 = vpack.c.b16 %v335, %v333
    %v512 = vpack.c.b16 %v336, %v334
    %v513 = vpack.c.b16 %v339, %v337
    %v514 = vpack.c.b16 %v340, %v338
    %v515 = vpack.c.b16 %v343, %v341
    %v516 = vpack.c.b16 %v344, %v342
    %v517 = vpack.c.b16 %v347, %v345
    %v518 = vpack.c.b16 %v348, %v346
    %v519 = vpack.c.b16 %v351, %v349
    %v520 = vpack.c.b16 %v352, %v350
    %v521 = vpack.c.b16 %v355, %v353
    %v522 = vpack.c.b16 %v356, %v354
    %v523 = vpack.c.b16 %v359, %v357
    %v524 = vpack.c.b16 %v360, %v358
    %v525 = vpack.c.b16 %v363, %v361
    %v526 = vpack.c.b16 %v364, %v362
    %v527 = vpack.c.b16 %v367, %v365
    %v528 = vpack.c.b16 %v368, %v366
    %v529 = vpack.c.b16 %v371, %v369
    %v530 = vpack.c.b16 %v372, %v370
    %v531 = vpack.c.b16 %v375, %v373
    %v532 = vpack.c.b16 %v376, %v374
    %v533 = vpack.c.b16 %v379, %v377
    %v534 = vpack.c.b16 %v380, %v378
    %v535 = vpack.c.b16 %v383, %v381
    %v536 = vpack.c.b16 %v384, %v382
    %v537 = vpack.c.b16 %v387, %v385
    %v538 = vpack.c.b16 %v388, %v386
    %v539 = vpack.c.b16 %v391, %v389
    %v540 = vpack.c.b16 %v392, %v390
    %v541 = vpack.c.b16 %v395, %v393
    %v542 = vpack.c.b16 %v396, %v394
    %v543 = vpack.c.b16 %v399, %v397
    %v544 = vpack.c.b16 %v400, %v398
    %v545 = vpack.c.b16 %v403, %v401
    %v546 = vpack.c.b16 %v404, %v402
    %v547 = vpack.c.b16 %v407, %v405
    %v548 = vpack.c.b16 %v408, %v406
    %v549 = vpack.c.b16 %v411, %v409
    %v550 = vpack.c.b16 %v412, %v410
    %v551 = vpack.c.b16 %v415, %v413
    %v552 = vpack.c.b16 %v416, %v414
    %v553 = vpack.c.b16 %v419, %v417
    %v554 = vpack.c.b16 %v420, %v418
    %v555 = vpack.c.b16 %v423, %v421
    %v556 = vpack.c.b16 %v424, %v422
    %v557 = vpack.c.b16 %v427, %v425
    %v558 = vpack.c.b16 %v428, %v426
    %v559 = vpack.c.b16 %v431, %v429
    %v560 = vpack.c.b16 %v432, %v430
    %v561 = vpack.c.b16 %v435, %v433
    %v562 = vpack.c.b16 %v436, %v434
    %v563 = vpack.c.b16 %v439, %v437
    %v564 = vpack.c.b16 %v440, %v438
    %v565 = vpack.c.b16 %v443, %v441
    %v566 = vpack.c.b16 %v444, %v442
    %v567 = vpack.c.b16 %v447, %v445
    %v568 = vpack.c.b16 %v448, %v446
    %v569 = vpack.c.b16 %v451, %v449
    %v570 = vpack.c.b16 %v452, %v450
    %v571 = vpack.c.b16 %v455, %v453
    %v572 = vpack.c.b16 %v456, %v454
    %v573 = vpack.c.b16 %v459, %v457
    %v574 = vpack.c.b16 %v460, %v458
    %v575 = vpack.c.b16 %v463, %v461
    %v576 = vpack.c.b16 %v464, %v462
    %v577 = vpack.c.b16 %v467, %v465
    %v578 = vpack.c.b16 %v468, %v466
    %v579 = vpack.c.b16 %v471, %v469
    %v580 = vpack.c.b16 %v472, %v470
    %v581 = vpack.c.b16 %v475, %v473
    %v582 = vpack.c.b16 %v476, %v474
    %v583 = vpack.c.b16 %v479, %v477
    %v584 = vpack.c.b16 %v480, %v478
    %v585 = vpack.c.b16 %v483, %v481
    %v586 = vpack.c.b16 %v484, %v482
    %v587 = vpack.c.b16 %v487, %v485
    %v588 = vpack.c.b16 %v488, %v486
    %v589 = vpack.c.b16 %v491, %v489
    %v590 = vpack.c.b16 %v492, %v490
    %vm689 = vcmask 130048
    %v691 = vsel %vm689, %v192, 0
    %693 = vmatpush.bf16.msra.mxu0 %v507
    %694 = vmatpush.bf16.msra.mxu0 %v505
    %695 = vmatpush.bf16.msra.mxu0 %v503
    %696 = vmatpush.bf16.msra.mxu0 %v501
    %697 = vmatpush.bf16.msra.mxu0 %v499
    %698 = vmatpush.bf16.msra.mxu0 %v497
    %699 = vmatpush.bf16.msra.mxu0 %v495
    %700 = vmatpush.bf16.msra.mxu0 %v493
    %701 = vmatmul.bf16.gmra.mxu0 %v186
    %v702 = vpop.f32.mrf.mxu0
    %v703 = vadd.f32 %v160, %v702
    %v704 = vpop.f32.mrf.mxu0
    %v705 = vadd.f32 %v160, %v704
    %706 = vdwg.mxu0
    %707 = vmatpush.bf16.msra.mxu0 %v523
    %708 = vmatpush.bf16.msra.mxu0 %v521
    %709 = vmatpush.bf16.msra.mxu0 %v519
    %710 = vmatpush.bf16.msra.mxu0 %v517
    %711 = vmatpush.bf16.msra.mxu0 %v515
    %712 = vmatpush.bf16.msra.mxu0 %v513
    %713 = vmatpush.bf16.msra.mxu0 %v511
    %714 = vmatpush.bf16.msra.mxu0 %v509
    %715 = vmatmul.bf16.gmra.mxu0 %v187
    %v716 = vpop.f32.mrf.mxu0
    %v717 = vadd.f32 %v703, %v716
    %v718 = vpop.f32.mrf.mxu0
    %v719 = vadd.f32 %v705, %v718
    %720 = vdwg.mxu0
    %721 = vmatpush.bf16.msra.mxu0 %v539
    %722 = vmatpush.bf16.msra.mxu0 %v537
    %723 = vmatpush.bf16.msra.mxu0 %v535
    %724 = vmatpush.bf16.msra.mxu0 %v533
    %725 = vmatpush.bf16.msra.mxu0 %v531
    %726 = vmatpush.bf16.msra.mxu0 %v529
    %727 = vmatpush.bf16.msra.mxu0 %v527
    %728 = vmatpush.bf16.msra.mxu0 %v525
    %729 = vmatmul.bf16.gmra.mxu0 %v188
    %v730 = vpop.f32.mrf.mxu0
    %v731 = vadd.f32 %v717, %v730
    %v732 = vpop.f32.mrf.mxu0
    %v733 = vadd.f32 %v719, %v732
    %734 = vdwg.mxu0
    %735 = vmatpush.bf16.msra.mxu0 %v555
    %736 = vmatpush.bf16.msra.mxu0 %v553
    %737 = vmatpush.bf16.msra.mxu0 %v551
    %738 = vmatpush.bf16.msra.mxu0 %v549
    %739 = vmatpush.bf16.msra.mxu0 %v547
    %740 = vmatpush.bf16.msra.mxu0 %v545
    %741 = vmatpush.bf16.msra.mxu0 %v543
    %742 = vmatpush.bf16.msra.mxu0 %v541
    %743 = vmatmul.bf16.gmra.mxu0 %v189
    %v744 = vpop.f32.mrf.mxu0
    %v745 = vadd.f32 %v731, %v744
    %v746 = vpop.f32.mrf.mxu0
    %v747 = vadd.f32 %v733, %v746
    %748 = vdwg.mxu0
    %749 = vmatpush.bf16.msra.mxu0 %v571
    %750 = vmatpush.bf16.msra.mxu0 %v569
    %751 = vmatpush.bf16.msra.mxu0 %v567
    %752 = vmatpush.bf16.msra.mxu0 %v565
    %753 = vmatpush.bf16.msra.mxu0 %v563
    %754 = vmatpush.bf16.msra.mxu0 %v561
    %755 = vmatpush.bf16.msra.mxu0 %v559
    %756 = vmatpush.bf16.msra.mxu0 %v557
    %757 = vmatmul.bf16.gmra.mxu0 %v190
    %v758 = vpop.f32.mrf.mxu0
    %v759 = vadd.f32 %v745, %v758
    %v760 = vpop.f32.mrf.mxu0
    %v761 = vadd.f32 %v747, %v760
    %762 = vdwg.mxu0
    %763 = vmatpush.bf16.msra.mxu0 %v587
    %764 = vmatpush.bf16.msra.mxu0 %v585
    %765 = vmatpush.bf16.msra.mxu0 %v583
    %766 = vmatpush.bf16.msra.mxu0 %v581
    %767 = vmatpush.bf16.msra.mxu0 %v579
    %768 = vmatpush.bf16.msra.mxu0 %v577
    %769 = vmatpush.bf16.msra.mxu0 %v575
    %770 = vmatpush.bf16.msra.mxu0 %v573
    %771 = vmatmul.bf16.gmra.mxu0 %v191
    %v772 = vpop.f32.mrf.mxu0
    %v773 = vadd.f32 %v759, %v772
    %v774 = vpop.f32.mrf.mxu0
    %v775 = vadd.f32 %v761, %v774
    %776 = vdwg.mxu0
    %777 = vmatpush.bf16.msra.mxu0 0
    %778 = vmatpush.bf16.msra.mxu0 0
    %779 = vmatpush.bf16.msra.mxu0 0
    %780 = vmatpush.bf16.msra.mxu0 0
    %781 = vmatpush.bf16.msra.mxu0 0
    %782 = vmatpush.bf16.msra.mxu0 0
    %783 = vmatpush.bf16.msra.mxu0 0
    %784 = vmatpush.bf16.msra.mxu0 %v589
    %785 = vmatmul.bf16.gmra.mxu0 %v691
    %v786 = vpop.f32.mrf.mxu0
    %v787 = vadd.f32 %v773, %v786
    %v788 = vpop.f32.mrf.mxu0
    %v789 = vadd.f32 %v775, %v788
    %790 = vdwg.mxu0
    %791 = vmatpush.bf16.msra.mxu0 %v508
    %792 = vmatpush.bf16.msra.mxu0 %v506
    %793 = vmatpush.bf16.msra.mxu0 %v504
    %794 = vmatpush.bf16.msra.mxu0 %v502
    %795 = vmatpush.bf16.msra.mxu0 %v500
    %796 = vmatpush.bf16.msra.mxu0 %v498
    %797 = vmatpush.bf16.msra.mxu0 %v496
    %798 = vmatpush.bf16.msra.mxu0 %v494
    %799 = vmatmul.bf16.gmra.mxu0 %v186
    %v800 = vpop.f32.mrf.mxu0
    %v801 = vadd.f32 %v161, %v800
    %v802 = vpop.f32.mrf.mxu0
    %v803 = vadd.f32 %v161, %v802
    %804 = vdwg.mxu0
    %805 = vmatpush.bf16.msra.mxu0 %v524
    %806 = vmatpush.bf16.msra.mxu0 %v522
    %807 = vmatpush.bf16.msra.mxu0 %v520
    %808 = vmatpush.bf16.msra.mxu0 %v518
    %809 = vmatpush.bf16.msra.mxu0 %v516
    %810 = vmatpush.bf16.msra.mxu0 %v514
    %811 = vmatpush.bf16.msra.mxu0 %v512
    %812 = vmatpush.bf16.msra.mxu0 %v510
    %813 = vmatmul.bf16.gmra.mxu0 %v187
    %v814 = vpop.f32.mrf.mxu0
    %v815 = vadd.f32 %v801, %v814
    %v816 = vpop.f32.mrf.mxu0
    %v817 = vadd.f32 %v803, %v816
    %818 = vdwg.mxu0
    %819 = vmatpush.bf16.msra.mxu0 %v540
    %820 = vmatpush.bf16.msra.mxu0 %v538
    %821 = vmatpush.bf16.msra.mxu0 %v536
    %822 = vmatpush.bf16.msra.mxu0 %v534
    %823 = vmatpush.bf16.msra.mxu0 %v532
    %824 = vmatpush.bf16.msra.mxu0 %v530
    %825 = vmatpush.bf16.msra.mxu0 %v528
    %826 = vmatpush.bf16.msra.mxu0 %v526
    %827 = vmatmul.bf16.gmra.mxu0 %v188
    %v828 = vpop.f32.mrf.mxu0
    %v829 = vadd.f32 %v815, %v828
    %v830 = vpop.f32.mrf.mxu0
    %v831 = vadd.f32 %v817, %v830
    %832 = vdwg.mxu0
    %833 = vmatpush.bf16.msra.mxu0 %v556
    %834 = vmatpush.bf16.msra.mxu0 %v554
    %835 = vmatpush.bf16.msra.mxu0 %v552
    %836 = vmatpush.bf16.msra.mxu0 %v550
    %837 = vmatpush.bf16.msra.mxu0 %v548
    %838 = vmatpush.bf16.msra.mxu0 %v546
    %839 = vmatpush.bf16.msra.mxu0 %v544
    %840 = vmatpush.bf16.msra.mxu0 %v542
    %841 = vmatmul.bf16.gmra.mxu0 %v189
    %v842 = vpop.f32.mrf.mxu0
    %v843 = vadd.f32 %v829, %v842
    %v844 = vpop.f32.mrf.mxu0
    %v845 = vadd.f32 %v831, %v844
    %846 = vdwg.mxu0
    %847 = vmatpush.bf16.msra.mxu0 %v572
    %848 = vmatpush.bf16.msra.mxu0 %v570
    %849 = vmatpush.bf16.msra.mxu0 %v568
    %850 = vmatpush.bf16.msra.mxu0 %v566
    %851 = vmatpush.bf16.msra.mxu0 %v564
    %852 = vmatpush.bf16.msra.mxu0 %v562
    %853 = vmatpush.bf16.msra.mxu0 %v560
    %854 = vmatpush.bf16.msra.mxu0 %v558
    %855 = vmatmul.bf16.gmra.mxu0 %v190
    %v856 = vpop.f32.mrf.mxu0
    %v857 = vadd.f32 %v843, %v856
    %v858 = vpop.f32.mrf.mxu0
    %v859 = vadd.f32 %v845, %v858
    %860 = vdwg.mxu0
    %861 = vmatpush.bf16.msra.mxu0 %v588
    %862 = vmatpush.bf16.msra.mxu0 %v586
    %863 = vmatpush.bf16.msra.mxu0 %v584
    %864 = vmatpush.bf16.msra.mxu0 %v582
    %865 = vmatpush.bf16.msra.mxu0 %v580
    %866 = vmatpush.bf16.msra.mxu0 %v578
    %867 = vmatpush.bf16.msra.mxu0 %v576
    %868 = vmatpush.bf16.msra.mxu0 %v574
    %869 = vmatmul.bf16.gmra.mxu0 %v191
    %v870 = vpop.f32.mrf.mxu0
    %v871 = vadd.f32 %v857, %v870
    %v872 = vpop.f32.mrf.mxu0
    %v873 = vadd.f32 %v859, %v872
    %874 = vdwg.mxu0
    %875 = vmatpush.bf16.msra.mxu0 0
    %876 = vmatpush.bf16.msra.mxu0 0
    %877 = vmatpush.bf16.msra.mxu0 0
    %878 = vmatpush.bf16.msra.mxu0 0
    %879 = vmatpush.bf16.msra.mxu0 0
    %880 = vmatpush.bf16.msra.mxu0 0
    %881 = vmatpush.bf16.msra.mxu0 0
    %882 = vmatpush.bf16.msra.mxu0 %v590
    %883 = vmatmul.bf16.gmra.mxu0 %v691
    %v884 = vpop.f32.mrf.mxu0
    %v885 = vadd.f32 %v871, %v884
    %v886 = vpop.f32.mrf.mxu0
    %v887 = vadd.f32 %v873, %v886
    %888 = vdwg.mxu0
    %vm889 = vcmp.ge.f32.partialorder %v787, 0.0
    %vm890 = vcmp.ge.f32.partialorder %v885, 0.0
    %vm891 = vcmp.ge.f32.partialorder %v789, 0.0
    %vm892 = vcmp.ge.f32.partialorder %v887, 0.0
    %v893 = vmul.f32 %v787, 0.2
    %v894 = vmul.f32 %v885, 0.2
    %v895 = vmul.f32 %v789, 0.2
    %v896 = vmul.f32 %v887, 0.2
    %v897 = vsel %vm889, %v787, %v893
    %v898 = vsel %vm890, %v885, %v894
    %v899 = vsel %vm891, %v789, %v895
    %v900 = vsel %vm892, %v887, %v896
    %v901 = vpack.c.bf16 %v899, %v897
    %v902 = vpack.c.bf16 %v900, %v898
    %v903 = vld [vmem:[%s4] sm:$0xf]
    %v904 = vld [vmem:[%s4 + $0x4] sm:$0xf]
    %v905 = vld [vmem:[%s4 + $0x8] sm:$0xf]
    %v906 = vld [vmem:[%s4 + $0xc] sm:$0xf]
    %v907 = vld [vmem:[%s4 + $0x10] sm:$0xf]
    %v908 = vld [vmem:[%s4 + $0x14] sm:$0xf]
    %v909 = vld [vmem:[%s4 + $0x18] sm:$0xf]
    %v910 = vld [vmem:[%s4 + $0x1c] sm:$0xf]
    %v911 = vld [vmem:[%s4 + $0x20] sm:$0xf]
    %v912 = vld [vmem:[%s4 + $0x24] sm:$0xf]
    %v913 = vld [vmem:[%s4 + $0x28] sm:$0xf]
    %v914 = vld [vmem:[%s4 + $0x2c] sm:$0xf]
    %v915 = vld [vmem:[%s4 + $0x30] sm:$0xf]
    %v916 = vld [vmem:[%s4 + $0x34] sm:$0xf]
    %v917 = vld [vmem:[%s4 + $0x38] sm:$0xf]
    %v918 = vld [vmem:[%s4 + $0x3c] sm:$0xf]
    %v919 = vld [vmem:[%s4 + $0x40] sm:$0xf]
    %v920 = vld [vmem:[%s4 + $0x44] sm:$0xf]
    %v921 = vld [vmem:[%s4 + $0x48] sm:$0xf]
    %v922 = vld [vmem:[%s4 + $0x4c] sm:$0xf]
    %v923 = vld [vmem:[%s4 + $0x50] sm:$0xf]
    %v924 = vld [vmem:[%s4 + $0x54] sm:$0xf]
    %v925 = vld [vmem:[%s4 + $0x58] sm:$0xf]
    %v926 = vld [vmem:[%s4 + $0x5c] sm:$0xf]
    %v927 = vld [vmem:[%s4 + $0x60] sm:$0xf]
    %v928 = vld [vmem:[%s4 + $0x64] sm:$0xf]
    %v929 = vld [vmem:[%s4 + $0x68] sm:$0xf]
    %v930 = vld [vmem:[%s4 + $0x6c] sm:$0xf]
    %v931 = vld [vmem:[%s4 + $0x70] sm:$0xf]
    %v932 = vld [vmem:[%s4 + $0x74] sm:$0xf]
    %v933 = vld [vmem:[%s4 + $0x78] sm:$0xf]
    %v934 = vld [vmem:[%s4 + $0x7c] sm:$0xf]
    %v935 = vld [vmem:[%s5] sm:$0x1]
    %v937 = vperm.slane %v935, 0
    %v971 = vunpack.c.l.b16 %v903
    %v972 = vunpack.c.l.b16 %v904
    %v973 = vunpack.c.l.b16 %v905
    %v974 = vunpack.c.l.b16 %v906
    %v975 = vunpack.c.l.b16 %v907
    %v976 = vunpack.c.l.b16 %v908
    %v977 = vunpack.c.l.b16 %v909
    %v978 = vunpack.c.l.b16 %v910
    %v979 = vunpack.c.l.b16 %v911
    %v980 = vunpack.c.l.b16 %v912
    %v981 = vunpack.c.l.b16 %v913
    %v982 = vunpack.c.l.b16 %v914
    %v983 = vunpack.c.l.b16 %v915
    %v984 = vunpack.c.l.b16 %v916
    %v985 = vunpack.c.l.b16 %v917
    %v986 = vunpack.c.l.b16 %v918
    %v987 = vunpack.c.l.b16 %v919
    %v988 = vunpack.c.l.b16 %v920
    %v989 = vunpack.c.l.b16 %v921
    %v990 = vunpack.c.l.b16 %v922
    %v991 = vunpack.c.l.b16 %v923
    %v992 = vunpack.c.l.b16 %v924
    %v993 = vunpack.c.l.b16 %v925
    %v994 = vunpack.c.l.b16 %v926
    %v995 = vunpack.c.l.b16 %v927
    %v996 = vunpack.c.l.b16 %v928
    %v997 = vunpack.c.l.b16 %v929
    %v998 = vunpack.c.l.b16 %v930
    %v999 = vunpack.c.l.b16 %v931
    %v1000 = vunpack.c.l.b16 %v932
    %v1001 = vunpack.c.l.b16 %v933
    %v1002 = vunpack.c.l.b16 %v934
    %v1003 = vpack.c.b16 %v972, %v971
    %v1004 = vpack.c.b16 %v974, %v973
    %v1005 = vpack.c.b16 %v976, %v975
    %v1006 = vpack.c.b16 %v978, %v977
    %v1007 = vpack.c.b16 %v980, %v979
    %v1008 = vpack.c.b16 %v982, %v981
    %v1009 = vpack.c.b16 %v984, %v983
    %v1010 = vpack.c.b16 %v986, %v985
    %v1011 = vpack.c.b16 %v988, %v987
    %v1012 = vpack.c.b16 %v990, %v989
    %v1013 = vpack.c.b16 %v992, %v991
    %v1014 = vpack.c.b16 %v994, %v993
    %v1015 = vpack.c.b16 %v996, %v995
    %v1016 = vpack.c.b16 %v998, %v997
    %v1017 = vpack.c.b16 %v1000, %v999
    %v1018 = vpack.c.b16 %v1002, %v1001
    %1035 = vmatpush.bf16.msra.mxu0 %v1010
    %1036 = vmatpush.bf16.msra.mxu0 %v1009
    %1037 = vmatpush.bf16.msra.mxu0 %v1008
    %1038 = vmatpush.bf16.msra.mxu0 %v1007
    %1039 = vmatpush.bf16.msra.mxu0 %v1006
    %1040 = vmatpush.bf16.msra.mxu0 %v1005
    %1041 = vmatpush.bf16.msra.mxu0 %v1004
    %1042 = vmatpush.bf16.msra.mxu0 %v1003
    %1043 = vmatmul.bf16.gmra.mxu0 %v901
    %v1044 = vpop.f32.mrf.mxu0
    %v1045 = vadd.f32 %v937, %v1044
    %v1046 = vpop.f32.mrf.mxu0
    %v1047 = vadd.f32 %v937, %v1046
    %1048 = vdwg.mxu0
    %1049 = vmatpush.bf16.msra.mxu0 %v1018
    %1050 = vmatpush.bf16.msra.mxu0 %v1017
    %1051 = vmatpush.bf16.msra.mxu0 %v1016
    %1052 = vmatpush.bf16.msra.mxu0 %v1015
    %1053 = vmatpush.bf16.msra.mxu0 %v1014
    %1054 = vmatpush.bf16.msra.mxu0 %v1013
    %1055 = vmatpush.bf16.msra.mxu0 %v1012
    %1056 = vmatpush.bf16.msra.mxu0 %v1011
    %1057 = vmatmul.bf16.gmra.mxu0 %v902
    %v1058 = vpop.f32.mrf.mxu0
    %v1059 = vadd.f32 %v1045, %v1058
    %v1060 = vpop.f32.mrf.mxu0
    %v1061 = vadd.f32 %v1047, %v1060
    %1062 = vdwg.mxu0
    %vm1063 = vcmp.ge.f32.partialorder %v1059, 0.0
    %vm1064 = vcmp.ge.f32.partialorder %v1061, 0.0
    %v1065 = vmul.f32 %v1059, 0.2
    %v1066 = vmul.f32 %v1061, 0.2
    %v1067 = vsel %vm1063, %v1059, %v1065
    %v1068 = vsel %vm1064, %v1061, %v1066
    %v1069 = vpack.c.bf16 %v1068, %v1067
    %v1070 = vld [vmem:[%s6] sm:$0xf]
    %v1071 = vld [vmem:[%s6 + $0x4] sm:$0xf]
    %v1072 = vld [vmem:[%s6 + $0x8] sm:$0xf]
    %v1073 = vld [vmem:[%s6 + $0xc] sm:$0xf]
    %v1074 = vld [vmem:[%s6 + $0x10] sm:$0xf]
    %v1075 = vld [vmem:[%s6 + $0x14] sm:$0xf]
    %v1076 = vld [vmem:[%s6 + $0x18] sm:$0xf]
    %v1077 = vld [vmem:[%s6 + $0x1c] sm:$0xf]
    %v1078 = vld [vmem:[%s7] sm:$0x1]
    %v1080 = vperm.slane %v1078, 0
    %v1090 = vunpack.c.l.b16 %v1070
    %v1091 = vunpack.c.l.b16 %v1071
    %v1092 = vunpack.c.l.b16 %v1072
    %v1093 = vunpack.c.l.b16 %v1073
    %v1094 = vunpack.c.l.b16 %v1074
    %v1095 = vunpack.c.l.b16 %v1075
    %v1096 = vunpack.c.l.b16 %v1076
    %v1097 = vunpack.c.l.b16 %v1077
    %v1098 = vpack.c.b16 %v1091, %v1090
    %v1099 = vpack.c.b16 %v1093, %v1092
    %v1100 = vpack.c.b16 %v1095, %v1094
    %v1101 = vpack.c.b16 %v1097, %v1096
    %vm1106 = vcmask 523264
    %v1108 = vsel %vm1106, %v1069, 0
    %1110 = vmatpush.bf16.msra.mxu0 0
    %1111 = vmatpush.bf16.msra.mxu0 0
    %1112 = vmatpush.bf16.msra.mxu0 0
    %1113 = vmatpush.bf16.msra.mxu0 0
    %1114 = vmatpush.bf16.msra.mxu0 %v1101
    %1115 = vmatpush.bf16.msra.mxu0 %v1100
    %1116 = vmatpush.bf16.msra.mxu0 %v1099
    %1117 = vmatpush.bf16.msra.mxu0 %v1098
    %1118 = vmatmul.bf16.gmra.mxu0 %v1108
    %v1119 = vpop.f32.mrf.mxu0
    %v1120 = vadd.f32 %v1080, %v1119
    %v1121 = vpop.f32.mrf.mxu0
    %v1122 = vadd.f32 %v1080, %v1121
    %1123 = vdwg.mxu0
    %v1124 = vmul.f32 %v1120, 0.5
    %v1125 = vmul.f32 %v1122, 0.5
    %v1126 = vmul.f32 %v1124, 1.442695
    %v1127 = vpow.pop %v1126
    %v1128 = vmul.f32 %v1125, 1.442695
    %v1129 = vpow.pop %v1128
    %v1130 = vld [vmem:[%s1] sm:$0xff]
    %v1131 = vld [vmem:[%s1 + $0x8] sm:$0xff]
    %1134 = vrot.lane.b32.xlu0 %v1127, 112
    %v1135 = vpop.permute.xlu0 %1134
    %1136 = vrot.lane.b32.xlu0 %v1129, 112
    %v1137 = vpop.permute.xlu0 %1136
    %v1140 = vmul.f32 %v1130, %v1135
    %v1141 = vmul.f32 %v1131, %v1137
    %v1142 = vadd.f32 %v1120, %v1140
    %v1143 = vadd.f32 %v1122, %v1141
    %v1144 = vpack.c.bf16 %v1143, %v1142
    %v1145 = vld [vmem:[%s8] sm:$0xf]
    %v1146 = vld [vmem:[%s8 + $0x4] sm:$0xf]
    %v1147 = vld [vmem:[%s9] sm:$0x1]
    %v1149 = vperm.slane %v1147, 0
    %v1153 = vunpack.c.l.b16 %v1145
    %v1154 = vunpack.c.l.b16 %v1146
    %v1155 = vpack.c.b16 %v1154, %v1153
    %v1158 = vsel %vm689, %v1144, 0
    %1160 = vmatpush.bf16.msra.mxu0 0
    %1161 = vmatpush.bf16.msra.mxu0 0
    %1162 = vmatpush.bf16.msra.mxu0 0
    %1163 = vmatpush.bf16.msra.mxu0 0
    %1164 = vmatpush.bf16.msra.mxu0 0
    %1165 = vmatpush.bf16.msra.mxu0 0
    %1166 = vmatpush.bf16.msra.mxu0 0
    %1167 = vmatpush.bf16.msra.mxu0 %v1155
    %1168 = vmatmul.bf16.gmra.mxu0 %v1158
    %v1169 = vpop.f32.mrf.mxu0
    %v1170 = vadd.f32 %v1149, %v1169
    %v1171 = vpop.f32.mrf.mxu0
    %v1172 = vadd.f32 %v1149, %v1171
    %1173 = vdwg.mxu0
    %vm1174 = vcmp.ge.f32.partialorder %v1170, 0.0
    %vm1175 = vcmp.ge.f32.partialorder %v1172, 0.0
    %v1176 = vmul.f32 %v1170, 0.2
    %v1177 = vmul.f32 %v1172, 0.2
    %v1178 = vsel %vm1174, %v1170, %v1176
    %v1179 = vsel %vm1175, %v1172, %v1177
    %v1180 = vpack.c.bf16 %v1179, %v1178
    %v1181 = vld [vmem:[%s10] sm:$0xff]
    %v1182 = vld [vmem:[%s10 + $0x8] sm:$0xff]
    %v1183 = vld [vmem:[%s10 + $0x10] sm:$0xff]
    %v1184 = vld [vmem:[%s10 + $0x18] sm:$0xff]
    %v1185 = vld [vmem:[%s10 + $0x20] sm:$0xff]
    %v1186 = vld [vmem:[%s10 + $0x28] sm:$0xff]
    %v1187 = vld [vmem:[%s10 + $0x30] sm:$0xff]
    %v1188 = vld [vmem:[%s10 + $0x38] sm:$0xff]
    %v1189 = vld [vmem:[%s11] sm:$0x3]
    %v1191 = vperm.slane %v1189, 0
    %v1192 = vperm.slane %v1189, 1
    %v1203 = vunpack.c.l.b16 %v1181
    %v1204 = vunpack.c.h.b16 %v1181
    %v1205 = vunpack.c.l.b16 %v1182
    %v1206 = vunpack.c.h.b16 %v1182
    %v1207 = vunpack.c.l.b16 %v1183
    %v1208 = vunpack.c.h.b16 %v1183
    %v1209 = vunpack.c.l.b16 %v1184
    %v1210 = vunpack.c.h.b16 %v1184
    %v1211 = vunpack.c.l.b16 %v1185
    %v1212 = vunpack.c.h.b16 %v1185
    %v1213 = vunpack.c.l.b16 %v1186
    %v1214 = vunpack.c.h.b16 %v1186
    %v1215 = vunpack.c.l.b16 %v1187
    %v1216 = vunpack.c.h.b16 %v1187
    %v1217 = vunpack.c.l.b16 %v1188
    %v1218 = vunpack.c.h.b16 %v1188
    %v1219 = vpack.c.b16 %v1205, %v1203
    %v1220 = vpack.c.b16 %v1206, %v1204
    %v1221 = vpack.c.b16 %v1209, %v1207
    %v1222 = vpack.c.b16 %v1210, %v1208
    %v1223 = vpack.c.b16 %v1213, %v1211
    %v1224 = vpack.c.b16 %v1214, %v1212
    %v1225 = vpack.c.b16 %v1217, %v1215
    %v1226 = vpack.c.b16 %v1218, %v1216
    %v1236 = vsel %vm1106, %v1180, 0
    %1238 = vmatpush.bf16.msra.mxu0 0
    %1239 = vmatpush.bf16.msra.mxu0 0
    %1240 = vmatpush.bf16.msra.mxu0 0
    %1241 = vmatpush.bf16.msra.mxu0 0
    %1242 = vmatpush.bf16.msra.mxu0 %v1225
    %1243 = vmatpush.bf16.msra.mxu0 %v1223
    %1244 = vmatpush.bf16.msra.mxu0 %v1221
    %1245 = vmatpush.bf16.msra.mxu0 %v1219
    %1246 = vmatmul.bf16.gmra.mxu0 %v1236
    %v1247 = vpop.f32.mrf.mxu0
    %v1248 = vadd.f32 %v1191, %v1247
    %v1249 = vpop.f32.mrf.mxu0
    %v1250 = vadd.f32 %v1191, %v1249
    %1251 = vdwg.mxu0
    %1252 = vmatpush.bf16.msra.mxu0 0
    %1253 = vmatpush.bf16.msra.mxu0 0
    %1254 = vmatpush.bf16.msra.mxu0 0
    %1255 = vmatpush.bf16.msra.mxu0 0
    %1256 = vmatpush.bf16.msra.mxu0 %v1226
    %1257 = vmatpush.bf16.msra.mxu0 %v1224
    %1258 = vmatpush.bf16.msra.mxu0 %v1222
    %1259 = vmatpush.bf16.msra.mxu0 %v1220
    %1260 = vmatmul.bf16.gmra.mxu0 %v1236
    %v1261 = vpop.f32.mrf.mxu0
    %v1262 = vadd.f32 %v1192, %v1261
    %v1263 = vpop.f32.mrf.mxu0
    %v1264 = vadd.f32 %v1192, %v1263
    %1265 = vdwg.mxu0
    %vm1266 = vcmp.ge.f32.partialorder %v1248, 0.0
    %vm1267 = vcmp.ge.f32.partialorder %v1262, 0.0
    %vm1268 = vcmp.ge.f32.partialorder %v1250, 0.0
    %vm1269 = vcmp.ge.f32.partialorder %v1264, 0.0
    %v1270 = vmul.f32 %v1248, 0.2
    %v1271 = vmul.f32 %v1262, 0.2
    %v1272 = vmul.f32 %v1250, 0.2
    %v1273 = vmul.f32 %v1264, 0.2
    %v1274 = vsel %vm1266, %v1248, %v1270
    %v1275 = vsel %vm1267, %v1262, %v1271
    %v1276 = vsel %vm1268, %v1250, %v1272
    %v1277 = vsel %vm1269, %v1264, %v1273
    %v1278 = vpack.c.bf16 %v1276, %v1274
    %v1279 = vpack.c.bf16 %v1277, %v1275
    %v1280 = vld [vmem:[%s12] sm:$0xff]
    %v1281 = vld [vmem:[%s12 + $0x8] sm:$0xff]
    %v1282 = vld [vmem:[%s12 + $0x10] sm:$0xff]
    %v1283 = vld [vmem:[%s12 + $0x18] sm:$0xf]
    %v1284 = vld [vmem:[%s12 + $0x1c] sm:$0xff]
    %v1285 = vld [vmem:[%s12 + $0x24] sm:$0xff]
    %v1286 = vld [vmem:[%s12 + $0x2c] sm:$0xff]
    %v1287 = vld [vmem:[%s12 + $0x34] sm:$0xf]
    %v1288 = vld [vmem:[%s12 + $0x38] sm:$0xff]
    %v1289 = vld [vmem:[%s12 + $0x40] sm:$0xff]
    %v1290 = vld [vmem:[%s12 + $0x48] sm:$0xff]
    %v1291 = vld [vmem:[%s12 + $0x50] sm:$0xf]
    %v1292 = vld [vmem:[%s12 + $0x54] sm:$0xff]
    %v1293 = vld [vmem:[%s12 + $0x5c] sm:$0xff]
    %v1294 = vld [vmem:[%s12 + $0x64] sm:$0xff]
    %v1295 = vld [vmem:[%s12 + $0x6c] sm:$0xf]
    %v1296 = vld [vmem:[%s12 + $0x70] sm:$0xff]
    %v1297 = vld [vmem:[%s12 + $0x78] sm:$0xff]
    %v1298 = vld [vmem:[%s12 + $0x80] sm:$0xff]
    %v1299 = vld [vmem:[%s12 + $0x88] sm:$0xf]
    %v1300 = vld [vmem:[%s12 + $0x8c] sm:$0xff]
    %v1301 = vld [vmem:[%s12 + $0x94] sm:$0xff]
    %v1302 = vld [vmem:[%s12 + $0x9c] sm:$0xff]
    %v1303 = vld [vmem:[%s12 + $0xa4] sm:$0xf]
    %v1304 = vld [vmem:[%s12 + $0xa8] sm:$0xff]
    %v1305 = vld [vmem:[%s12 + $0xb0] sm:$0xff]
    %v1306 = vld [vmem:[%s12 + $0xb8] sm:$0xff]
    %v1307 = vld [vmem:[%s12 + $0xc0] sm:$0xf]
    %v1308 = vld [vmem:[%s12 + $0xc4] sm:$0xff]
    %v1309 = vld [vmem:[%s12 + $0xcc] sm:$0xff]
    %v1310 = vld [vmem:[%s12 + $0xd4] sm:$0xff]
    %v1311 = vld [vmem:[%s12 + $0xdc] sm:$0xf]
    %v1312 = vld [vmem:[%s12 + $0xe0] sm:$0xff]
    %v1313 = vld [vmem:[%s12 + $0xe8] sm:$0xff]
    %v1314 = vld [vmem:[%s12 + $0xf0] sm:$0xff]
    %v1315 = vld [vmem:[%s12 + $0xf8] sm:$0xf]
    %v1316 = vld [vmem:[%s12 + $0xfc] sm:$0xff]
    %v1317 = vld [vmem:[%s12 + $0x104] sm:$0xff]
    %v1318 = vld [vmem:[%s12 + $0x10c] sm:$0xff]
    %v1319 = vld [vmem:[%s12 + $0x114] sm:$0xf]
    %v1320 = vld [vmem:[%s12 + $0x118] sm:$0xff]
    %v1321 = vld [vmem:[%s12 + $0x120] sm:$0xff]
    %v1322 = vld [vmem:[%s12 + $0x128] sm:$0xff]
    %v1323 = vld [vmem:[%s12 + $0x130] sm:$0xf]
    %v1324 = vld [vmem:[%s12 + $0x134] sm:$0xff]
    %v1325 = vld [vmem:[%s12 + $0x13c] sm:$0xff]
    %v1326 = vld [vmem:[%s12 + $0x144] sm:$0xff]
    %v1327 = vld [vmem:[%s12 + $0x14c] sm:$0xf]
    %v1328 = vld [vmem:[%s12 + $0x150] sm:$0xff]
    %v1329 = vld [vmem:[%s12 + $0x158] sm:$0xff]
    %v1330 = vld [vmem:[%s12 + $0x160] sm:$0xff]
    %v1331 = vld [vmem:[%s12 + $0x168] sm:$0xf]
    %v1332 = vld [vmem:[%s12 + $0x16c] sm:$0xff]
    %v1333 = vld [vmem:[%s12 + $0x174] sm:$0xff]
    %v1334 = vld [vmem:[%s12 + $0x17c] sm:$0xff]
    %v1335 = vld [vmem:[%s12 + $0x184] sm:$0xf]
    %v1336 = vld [vmem:[%s12 + $0x188] sm:$0xff]
    %v1337 = vld [vmem:[%s12 + $0x190] sm:$0xff]
    %v1338 = vld [vmem:[%s12 + $0x198] sm:$0xff]
    %v1339 = vld [vmem:[%s12 + $0x1a0] sm:$0xf]
    %v1340 = vld [vmem:[%s12 + $0x1a4] sm:$0xff]
    %v1341 = vld [vmem:[%s12 + $0x1ac] sm:$0xff]
    %v1342 = vld [vmem:[%s12 + $0x1b4] sm:$0xff]
    %v1343 = vld [vmem:[%s12 + $0x1bc] sm:$0xf]
    %v1344 = vld [vmem:[%s12 + $0x1c0] sm:$0xff]
    %v1345 = vld [vmem:[%s12 + $0x1c8] sm:$0xff]
    %v1346 = vld [vmem:[%s12 + $0x1d0] sm:$0xff]
    %v1347 = vld [vmem:[%s12 + $0x1d8] sm:$0xf]
    %v1348 = vld [vmem:[%s12 + $0x1dc] sm:$0xff]
    %v1349 = vld [vmem:[%s12 + $0x1e4] sm:$0xff]
    %v1350 = vld [vmem:[%s12 + $0x1ec] sm:$0xff]
    %v1351 = vld [vmem:[%s12 + $0x1f4] sm:$0xf]
    %v1352 = vld [vmem:[%s12 + $0x1f8] sm:$0xff]
    %v1353 = vld [vmem:[%s12 + $0x200] sm:$0xff]
    %v1354 = vld [vmem:[%s12 + $0x208] sm:$0xff]
    %v1355 = vld [vmem:[%s12 + $0x210] sm:$0xf]
    %v1356 = vld [vmem:[%s12 + $0x214] sm:$0xff]
    %v1357 = vld [vmem:[%s12 + $0x21c] sm:$0xff]
    %v1358 = vld [vmem:[%s12 + $0x224] sm:$0xff]
    %v1359 = vld [vmem:[%s12 + $0x22c] sm:$0xf]
    %v1360 = vld [vmem:[%s12 + $0x230] sm:$0xff]
    %v1361 = vld [vmem:[%s12 + $0x238] sm:$0xff]
    %v1362 = vld [vmem:[%s12 + $0x240] sm:$0xff]
    %v1363 = vld [vmem:[%s12 + $0x248] sm:$0xf]
    %v1364 = vld [vmem:[%s12 + $0x24c] sm:$0xff]
    %v1365 = vld [vmem:[%s12 + $0x254] sm:$0xff]
    %v1366 = vld [vmem:[%s12 + $0x25c] sm:$0xff]
    %v1367 = vld [vmem:[%s12 + $0x264] sm:$0xf]
    %v1368 = vld [vmem:[%s12 + $0x268] sm:$0xff]
    %v1369 = vld [vmem:[%s12 + $0x270] sm:$0xff]
    %v1370 = vld [vmem:[%s12 + $0x278] sm:$0xff]
    %v1371 = vld [vmem:[%s12 + $0x280] sm:$0xf]
    %v1372 = vld [vmem:[%s12 + $0x284] sm:$0xff]
    %v1373 = vld [vmem:[%s12 + $0x28c] sm:$0xff]
    %v1374 = vld [vmem:[%s12 + $0x294] sm:$0xff]
    %v1375 = vld [vmem:[%s12 + $0x29c] sm:$0xf]
    %v1376 = vld [vmem:[%s12 + $0x2a0] sm:$0xff]
    %v1377 = vld [vmem:[%s12 + $0x2a8] sm:$0xff]
    %v1378 = vld [vmem:[%s12 + $0x2b0] sm:$0xff]
    %v1379 = vld [vmem:[%s12 + $0x2b8] sm:$0xf]
    %v1380 = vld [vmem:[%s12 + $0x2bc] sm:$0xff]
    %v1381 = vld [vmem:[%s12 + $0x2c4] sm:$0xff]
    %v1382 = vld [vmem:[%s12 + $0x2cc] sm:$0xff]
    %v1383 = vld [vmem:[%s12 + $0x2d4] sm:$0xf]
    %v1384 = vld [vmem:[%s12 + $0x2d8] sm:$0xff]
    %v1385 = vld [vmem:[%s12 + $0x2e0] sm:$0xff]
    %v1386 = vld [vmem:[%s12 + $0x2e8] sm:$0xff]
    %v1387 = vld [vmem:[%s12 + $0x2f0] sm:$0xf]
    %v1388 = vld [vmem:[%s12 + $0x2f4] sm:$0xff]
    %v1389 = vld [vmem:[%s12 + $0x2fc] sm:$0xff]
    %v1390 = vld [vmem:[%s12 + $0x304] sm:$0xff]
    %v1391 = vld [vmem:[%s12 + $0x30c] sm:$0xf]
    %v1392 = vld [vmem:[%s12 + $0x310] sm:$0xff]
    %v1393 = vld [vmem:[%s12 + $0x318] sm:$0xff]
    %v1394 = vld [vmem:[%s12 + $0x320] sm:$0xff]
    %v1395 = vld [vmem:[%s12 + $0x328] sm:$0xf]
    %v1396 = vld [vmem:[%s12 + $0x32c] sm:$0xff]
    %v1397 = vld [vmem:[%s12 + $0x334] sm:$0xff]
    %v1398 = vld [vmem:[%s12 + $0x33c] sm:$0xff]
    %v1399 = vld [vmem:[%s12 + $0x344] sm:$0xf]
    %v1400 = vld [vmem:[%s12 + $0x348] sm:$0xff]
    %v1401 = vld [vmem:[%s12 + $0x350] sm:$0xff]
    %v1402 = vld [vmem:[%s12 + $0x358] sm:$0xff]
    %v1403 = vld [vmem:[%s12 + $0x360] sm:$0xf]
    %v1404 = vld [vmem:[%s12 + $0x364] sm:$0xff]
    %v1405 = vld [vmem:[%s12 + $0x36c] sm:$0xff]
    %v1406 = vld [vmem:[%s12 + $0x374] sm:$0xff]
    %v1407 = vld [vmem:[%s12 + $0x37c] sm:$0xf]
    %v1408 = vld [vmem:[%s13] sm:$0x7f]
    %v1410 = vperm.slane %v1408, 0
    %v1411 = vperm.slane %v1408, 1
    %v1412 = vperm.slane %v1408, 2
    %v1413 = vperm.slane %v1408, 3
    %v1414 = vperm.slane %v1408, 4
    %v1415 = vperm.slane %v1408, 5
    %v1416 = vperm.slane %v1408, 6
    %v1552 = vunpack.c.l.b16 %v1280
    %v1553 = vunpack.c.h.b16 %v1280
    %v1554 = vunpack.c.l.b16 %v1281
    %v1555 = vunpack.c.h.b16 %v1281
    %v1556 = vunpack.c.l.b16 %v1282
    %v1557 = vunpack.c.h.b16 %v1282
    %v1558 = vunpack.c.l.b16 %v1283
    %v1559 = vunpack.c.l.b16 %v1284
    %v1560 = vunpack.c.h.b16 %v1284
    %v1561 = vunpack.c.l.b16 %v1285
    %v1562 = vunpack.c.h.b16 %v1285
    %v1563 = vunpack.c.l.b16 %v1286
    %v1564 = vunpack.c.h.b16 %v1286
    %v1565 = vunpack.c.l.b16 %v1287
    %v1566 = vunpack.c.l.b16 %v1288
    %v1567 = vunpack.c.h.b16 %v1288
    %v1568 = vunpack.c.l.b16 %v1289
    %v1569 = vunpack.c.h.b16 %v1289
    %v1570 = vunpack.c.l.b16 %v1290
    %v1571 = vunpack.c.h.b16 %v1290
    %v1572 = vunpack.c.l.b16 %v1291
    %v1573 = vunpack.c.l.b16 %v1292
    %v1574 = vunpack.c.h.b16 %v1292
    %v1575 = vunpack.c.l.b16 %v1293
    %v1576 = vunpack.c.h.b16 %v1293
    %v1577 = vunpack.c.l.b16 %v1294
    %v1578 = vunpack.c.h.b16 %v1294
    %v1579 = vunpack.c.l.b16 %v1295
    %v1580 = vunpack.c.l.b16 %v1296
    %v1581 = vunpack.c.h.b16 %v1296
    %v1582 = vunpack.c.l.b16 %v1297
    %v1583 = vunpack.c.h.b16 %v1297
    %v1584 = vunpack.c.l.b16 %v1298
    %v1585 = vunpack.c.h.b16 %v1298
    %v1586 = vunpack.c.l.b16 %v1299
    %v1587 = vunpack.c.l.b16 %v1300
    %v1588 = vunpack.c.h.b16 %v1300
    %v1589 = vunpack.c.l.b16 %v1301
    %v1590 = vunpack.c.h.b16 %v1301
    %v1591 = vunpack.c.l.b16 %v1302
    %v1592 = vunpack.c.h.b16 %v1302
    %v1593 = vunpack.c.l.b16 %v1303
    %v1594 = vunpack.c.l.b16 %v1304
    %v1595 = vunpack.c.h.b16 %v1304
    %v1596 = vunpack.c.l.b16 %v1305
    %v1597 = vunpack.c.h.b16 %v1305
    %v1598 = vunpack.c.l.b16 %v1306
    %v1599 = vunpack.c.h.b16 %v1306
    %v1600 = vunpack.c.l.b16 %v1307
    %v1601 = vunpack.c.l.b16 %v1308
    %v1602 = vunpack.c.h.b16 %v1308
    %v1603 = vunpack.c.l.b16 %v1309
    %v1604 = vunpack.c.h.b16 %v1309
    %v1605 = vunpack.c.l.b16 %v1310
    %v1606 = vunpack.c.h.b16 %v1310
    %v1607 = vunpack.c.l.b16 %v1311
    %v1608 = vunpack.c.l.b16 %v1312
    %v1609 = vunpack.c.h.b16 %v1312
    %v1610 = vunpack.c.l.b16 %v1313
    %v1611 = vunpack.c.h.b16 %v1313
    %v1612 = vunpack.c.l.b16 %v1314
    %v1613 = vunpack.c.h.b16 %v1314
    %v1614 = vunpack.c.l.b16 %v1315
    %v1615 = vunpack.c.l.b16 %v1316
    %v1616 = vunpack.c.h.b16 %v1316
    %v1617 = vunpack.c.l.b16 %v1317
    %v1618 = vunpack.c.h.b16 %v1317
    %v1619 = vunpack.c.l.b16 %v1318
    %v1620 = vunpack.c.h.b16 %v1318
    %v1621 = vunpack.c.l.b16 %v1319
    %v1622 = vunpack.c.l.b16 %v1320
    %v1623 = vunpack.c.h.b16 %v1320
    %v1624 = vunpack.c.l.b16 %v1321
    %v1625 = vunpack.c.h.b16 %v1321
    %v1626 = vunpack.c.l.b16 %v1322
    %v1627 = vunpack.c.h.b16 %v1322
    %v1628 = vunpack.c.l.b16 %v1323
    %v1629 = vunpack.c.l.b16 %v1324
    %v1630 = vunpack.c.h.b16 %v1324
    %v1631 = vunpack.c.l.b16 %v1325
    %v1632 = vunpack.c.h.b16 %v1325
    %v1633 = vunpack.c.l.b16 %v1326
    %v1634 = vunpack.c.h.b16 %v1326
    %v1635 = vunpack.c.l.b16 %v1327
    %v1636 = vunpack.c.l.b16 %v1328
    %v1637 = vunpack.c.h.b16 %v1328
    %v1638 = vunpack.c.l.b16 %v1329
    %v1639 = vunpack.c.h.b16 %v1329
    %v1640 = vunpack.c.l.b16 %v1330
    %v1641 = vunpack.c.h.b16 %v1330
    %v1642 = vunpack.c.l.b16 %v1331
    %v1643 = vunpack.c.l.b16 %v1332
    %v1644 = vunpack.c.h.b16 %v1332
    %v1645 = vunpack.c.l.b16 %v1333
    %v1646 = vunpack.c.h.b16 %v1333
    %v1647 = vunpack.c.l.b16 %v1334
    %v1648 = vunpack.c.h.b16 %v1334
    %v1649 = vunpack.c.l.b16 %v1335
    %v1650 = vunpack.c.l.b16 %v1336
    %v1651 = vunpack.c.h.b16 %v1336
    %v1652 = vunpack.c.l.b16 %v1337
    %v1653 = vunpack.c.h.b16 %v1337
    %v1654 = vunpack.c.l.b16 %v1338
    %v1655 = vunpack.c.h.b16 %v1338
    %v1656 = vunpack.c.l.b16 %v1339
    %v1657 = vunpack.c.l.b16 %v1340
    %v1658 = vunpack.c.h.b16 %v1340
    %v1659 = vunpack.c.l.b16 %v1341
    %v1660 = vunpack.c.h.b16 %v1341
    %v1661 = vunpack.c.l.b16 %v1342
    %v1662 = vunpack.c.h.b16 %v1342
    %v1663 = vunpack.c.l.b16 %v1343
    %v1664 = vunpack.c.l.b16 %v1344
    %v1665 = vunpack.c.h.b16 %v1344
    %v1666 = vunpack.c.l.b16 %v1345
    %v1667 = vunpack.c.h.b16 %v1345
    %v1668 = vunpack.c.l.b16 %v1346
    %v1669 = vunpack.c.h.b16 %v1346
    %v1670 = vunpack.c.l.b16 %v1347
    %v1671 = vunpack.c.l.b16 %v1348
    %v1672 = vunpack.c.h.b16 %v1348
    %v1673 = vunpack.c.l.b16 %v1349
    %v1674 = vunpack.c.h.b16 %v1349
    %v1675 = vunpack.c.l.b16 %v1350
    %v1676 = vunpack.c.h.b16 %v1350
    %v1677 = vunpack.c.l.b16 %v1351
    %v1678 = vunpack.c.l.b16 %v1352
    %v1679 = vunpack.c.h.b16 %v1352
    %v1680 = vunpack.c.l.b16 %v1353
    %v1681 = vunpack.c.h.b16 %v1353
    %v1682 = vunpack.c.l.b16 %v1354
    %v1683 = vunpack.c.h.b16 %v1354
    %v1684 = vunpack.c.l.b16 %v1355
    %v1685 = vunpack.c.l.b16 %v1356
    %v1686 = vunpack.c.h.b16 %v1356
    %v1687 = vunpack.c.l.b16 %v1357
    %v1688 = vunpack.c.h.b16 %v1357
    %v1689 = vunpack.c.l.b16 %v1358
    %v1690 = vunpack.c.h.b16 %v1358
    %v1691 = vunpack.c.l.b16 %v1359
    %v1692 = vunpack.c.l.b16 %v1360
    %v1693 = vunpack.c.h.b16 %v1360
    %v1694 = vunpack.c.l.b16 %v1361
    %v1695 = vunpack.c.h.b16 %v1361
    %v1696 = vunpack.c.l.b16 %v1362
    %v1697 = vunpack.c.h.b16 %v1362
    %v1698 = vunpack.c.l.b16 %v1363
    %v1699 = vunpack.c.l.b16 %v1364
    %v1700 = vunpack.c.h.b16 %v1364
    %v1701 = vunpack.c.l.b16 %v1365
    %v1702 = vunpack.c.h.b16 %v1365
    %v1703 = vunpack.c.l.b16 %v1366
    %v1704 = vunpack.c.h.b16 %v1366
    %v1705 = vunpack.c.l.b16 %v1367
    %v1706 = vunpack.c.l.b16 %v1368
    %v1707 = vunpack.c.h.b16 %v1368
    %v1708 = vunpack.c.l.b16 %v1369
    %v1709 = vunpack.c.h.b16 %v1369
    %v1710 = vunpack.c.l.b16 %v1370
    %v1711 = vunpack.c.h.b16 %v1370
    %v1712 = vunpack.c.l.b16 %v1371
    %v1713 = vunpack.c.l.b16 %v1372
    %v1714 = vunpack.c.h.b16 %v1372
    %v1715 = vunpack.c.l.b16 %v1373
    %v1716 = vunpack.c.h.b16 %v1373
    %v1717 = vunpack.c.l.b16 %v1374
    %v1718 = vunpack.c.h.b16 %v1374
    %v1719 = vunpack.c.l.b16 %v1375
    %v1720 = vunpack.c.l.b16 %v1376
    %v1721 = vunpack.c.h.b16 %v1376
    %v1722 = vunpack.c.l.b16 %v1377
    %v1723 = vunpack.c.h.b16 %v1377
    %v1724 = vunpack.c.l.b16 %v1378
    %v1725 = vunpack.c.h.b16 %v1378
    %v1726 = vunpack.c.l.b16 %v1379
    %v1727 = vunpack.c.l.b16 %v1380
    %v1728 = vunpack.c.h.b16 %v1380
    %v1729 = vunpack.c.l.b16 %v1381
    %v1730 = vunpack.c.h.b16 %v1381
    %v1731 = vunpack.c.l.b16 %v1382
    %v1732 = vunpack.c.h.b16 %v1382
    %v1733 = vunpack.c.l.b16 %v1383
    %v1734 = vunpack.c.l.b16 %v1384
    %v1735 = vunpack.c.h.b16 %v1384
    %v1736 = vunpack.c.l.b16 %v1385
    %v1737 = vunpack.c.h.b16 %v1385
    %v1738 = vunpack.c.l.b16 %v1386
    %v1739 = vunpack.c.h.b16 %v1386
    %v1740 = vunpack.c.l.b16 %v1387
    %v1741 = vunpack.c.l.b16 %v1388
    %v1742 = vunpack.c.h.b16 %v1388
    %v1743 = vunpack.c.l.b16 %v1389
    %v1744 = vunpack.c.h.b16 %v1389
    %v1745 = vunpack.c.l.b16 %v1390
    %v1746 = vunpack.c.h.b16 %v1390
    %v1747 = vunpack.c.l.b16 %v1391
    %v1748 = vunpack.c.l.b16 %v1392
    %v1749 = vunpack.c.h.b16 %v1392
    %v1750 = vunpack.c.l.b16 %v1393
    %v1751 = vunpack.c.h.b16 %v1393
    %v1752 = vunpack.c.l.b16 %v1394
    %v1753 = vunpack.c.h.b16 %v1394
    %v1754 = vunpack.c.l.b16 %v1395
    %v1755 = vunpack.c.l.b16 %v1396
    %v1756 = vunpack.c.h.b16 %v1396
    %v1757 = vunpack.c.l.b16 %v1397
    %v1758 = vunpack.c.h.b16 %v1397
    %v1759 = vunpack.c.l.b16 %v1398
    %v1760 = vunpack.c.h.b16 %v1398
    %v1761 = vunpack.c.l.b16 %v1399
    %v1762 = vunpack.c.l.b16 %v1400
    %v1763 = vunpack.c.h.b16 %v1400
    %v1764 = vunpack.c.l.b16 %v1401
    %v1765 = vunpack.c.h.b16 %v1401
    %v1766 = vunpack.c.l.b16 %v1402
    %v1767 = vunpack.c.h.b16 %v1402
    %v1768 = vunpack.c.l.b16 %v1403
    %v1769 = vunpack.c.l.b16 %v1404
    %v1770 = vunpack.c.h.b16 %v1404
    %v1771 = vunpack.c.l.b16 %v1405
    %v1772 = vunpack.c.h.b16 %v1405
    %v1773 = vunpack.c.l.b16 %v1406
    %v1774 = vunpack.c.h.b16 %v1406
    %v1775 = vunpack.c.l.b16 %v1407
    %v1776 = vpack.c.b16 %v1559, %v1552
    %v1777 = vpack.c.b16 %v1560, %v1553
    %v1778 = vpack.c.b16 %v1561, %v1554
    %v1779 = vpack.c.b16 %v1562, %v1555
    %v1780 = vpack.c.b16 %v1563, %v1556
    %v1781 = vpack.c.b16 %v1564, %v1557
    %v1782 = vpack.c.b16 %v1565, %v1558
    %v1783 = vpack.c.b16 %v1573, %v1566
    %v1784 = vpack.c.b16 %v1574, %v1567
    %v1785 = vpack.c.b16 %v1575, %v1568
    %v1786 = vpack.c.b16 %v1576, %v1569
    %v1787 = vpack.c.b16 %v1577, %v1570
    %v1788 = vpack.c.b16 %v1578, %v1571
    %v1789 = vpack.c.b16 %v1579, %v1572
    %v1790 = vpack.c.b16 %v1587, %v1580
    %v1791 = vpack.c.b16 %v1588, %v1581
    %v1792 = vpack.c.b16 %v1589, %v1582
    %v1793 = vpack.c.b16 %v1590, %v1583
    %v1794 = vpack.c.b16 %v1591, %v1584
    %v1795 = vpack.c.b16 %v1592, %v1585
    %v1796 = vpack.c.b16 %v1593, %v1586
    %v1797 = vpack.c.b16 %v1601, %v1594
    %v1798 = vpack.c.b16 %v1602, %v1595
    %v1799 = vpack.c.b16 %v1603, %v1596
    %v1800 = vpack.c.b16 %v1604, %v1597
    %v1801 = vpack.c.b16 %v1605, %v1598
    %v1802 = vpack.c.b16 %v1606, %v1599
    %v1803 = vpack.c.b16 %v1607, %v1600
    %v1804 = vpack.c.b16 %v1615, %v1608
    %v1805 = vpack.c.b16 %v1616, %v1609
    %v1806 = vpack.c.b16 %v1617, %v1610
    %v1807 = vpack.c.b16 %v1618, %v1611
    %v1808 = vpack.c.b16 %v1619, %v1612
    %v1809 = vpack.c.b16 %v1620, %v1613
    %v1810 = vpack.c.b16 %v1621, %v1614
    %v1811 = vpack.c.b16 %v1629, %v1622
    %v1812 = vpack.c.b16 %v1630, %v1623
    %v1813 = vpack.c.b16 %v1631, %v1624
    %v1814 = vpack.c.b16 %v1632, %v1625
    %v1815 = vpack.c.b16 %v1633, %v1626
    %v1816 = vpack.c.b16 %v1634, %v1627
    %v1817 = vpack.c.b16 %v1635, %v1628
    %v1818 = vpack.c.b16 %v1643, %v1636
    %v1819 = vpack.c.b16 %v1644, %v1637
    %v1820 = vpack.c.b16 %v1645, %v1638
    %v1821 = vpack.c.b16 %v1646, %v1639
    %v1822 = vpack.c.b16 %v1647, %v1640
    %v1823 = vpack.c.b16 %v1648, %v1641
    %v1824 = vpack.c.b16 %v1649, %v1642
    %v1825 = vpack.c.b16 %v1657, %v1650
    %v1826 = vpack.c.b16 %v1658, %v1651
    %v1827 = vpack.c.b16 %v1659, %v1652
    %v1828 = vpack.c.b16 %v1660, %v1653
    %v1829 = vpack.c.b16 %v1661, %v1654
    %v1830 = vpack.c.b16 %v1662, %v1655
    %v1831 = vpack.c.b16 %v1663, %v1656
    %v1832 = vpack.c.b16 %v1671, %v1664
    %v1833 = vpack.c.b16 %v1672, %v1665
    %v1834 = vpack.c.b16 %v1673, %v1666
    %v1835 = vpack.c.b16 %v1674, %v1667
    %v1836 = vpack.c.b16 %v1675, %v1668
    %v1837 = vpack.c.b16 %v1676, %v1669
    %v1838 = vpack.c.b16 %v1677, %v1670
    %v1839 = vpack.c.b16 %v1685, %v1678
    %v1840 = vpack.c.b16 %v1686, %v1679
    %v1841 = vpack.c.b16 %v1687, %v1680
    %v1842 = vpack.c.b16 %v1688, %v1681
    %v1843 = vpack.c.b16 %v1689, %v1682
    %v1844 = vpack.c.b16 %v1690, %v1683
    %v1845 = vpack.c.b16 %v1691, %v1684
    %v1846 = vpack.c.b16 %v1699, %v1692
    %v1847 = vpack.c.b16 %v1700, %v1693
    %v1848 = vpack.c.b16 %v1701, %v1694
    %v1849 = vpack.c.b16 %v1702, %v1695
    %v1850 = vpack.c.b16 %v1703, %v1696
    %v1851 = vpack.c.b16 %v1704, %v1697
    %v1852 = vpack.c.b16 %v1705, %v1698
    %v1853 = vpack.c.b16 %v1713, %v1706
    %v1854 = vpack.c.b16 %v1714, %v1707
    %v1855 = vpack.c.b16 %v1715, %v1708
    %v1856 = vpack.c.b16 %v1716, %v1709
    %v1857 = vpack.c.b16 %v1717, %v1710
    %v1858 = vpack.c.b16 %v1718, %v1711
    %v1859 = vpack.c.b16 %v1719, %v1712
    %v1860 = vpack.c.b16 %v1727, %v1720
    %v1861 = vpack.c.b16 %v1728, %v1721
    %v1862 = vpack.c.b16 %v1729, %v1722
    %v1863 = vpack.c.b16 %v1730, %v1723
    %v1864 = vpack.c.b16 %v1731, %v1724
    %v1865 = vpack.c.b16 %v1732, %v1725
    %v1866 = vpack.c.b16 %v1733, %v1726
    %v1867 = vpack.c.b16 %v1741, %v1734
    %v1868 = vpack.c.b16 %v1742, %v1735
    %v1869 = vpack.c.b16 %v1743, %v1736
    %v1870 = vpack.c.b16 %v1744, %v1737
    %v1871 = vpack.c.b16 %v1745, %v1738
    %v1872 = vpack.c.b16 %v1746, %v1739
    %v1873 = vpack.c.b16 %v1747, %v1740
    %v1874 = vpack.c.b16 %v1755, %v1748
    %v1875 = vpack.c.b16 %v1756, %v1749
    %v1876 = vpack.c.b16 %v1757, %v1750
    %v1877 = vpack.c.b16 %v1758, %v1751
    %v1878 = vpack.c.b16 %v1759, %v1752
    %v1879 = vpack.c.b16 %v1760, %v1753
    %v1880 = vpack.c.b16 %v1761, %v1754
    %v1881 = vpack.c.b16 %v1769, %v1762
    %v1882 = vpack.c.b16 %v1770, %v1763
    %v1883 = vpack.c.b16 %v1771, %v1764
    %v1884 = vpack.c.b16 %v1772, %v1765
    %v1885 = vpack.c.b16 %v1773, %v1766
    %v1886 = vpack.c.b16 %v1774, %v1767
    %v1887 = vpack.c.b16 %v1775, %v1768
    %2000 = vmatpush.bf16.msra.mxu0 %v1825
    %2001 = vmatpush.bf16.msra.mxu0 %v1818
    %2002 = vmatpush.bf16.msra.mxu0 %v1811
    %2003 = vmatpush.bf16.msra.mxu0 %v1804
    %2004 = vmatpush.bf16.msra.mxu0 %v1797
    %2005 = vmatpush.bf16.msra.mxu0 %v1790
    %2006 = vmatpush.bf16.msra.mxu0 %v1783
    %2007 = vmatpush.bf16.msra.mxu0 %v1776
    %2008 = vmatmul.bf16.gmra.mxu0 %v1278
    %v2009 = vpop.f32.mrf.mxu0
    %v2010 = vadd.f32 %v1410, %v2009
    %v2011 = vpop.f32.mrf.mxu0
    %v2012 = vadd.f32 %v1410, %v2011
    %2013 = vdwg.mxu0
    %2014 = vmatpush.bf16.msra.mxu0 %v1881
    %2015 = vmatpush.bf16.msra.mxu0 %v1874
    %2016 = vmatpush.bf16.msra.mxu0 %v1867
    %2017 = vmatpush.bf16.msra.mxu0 %v1860
    %2018 = vmatpush.bf16.msra.mxu0 %v1853
    %2019 = vmatpush.bf16.msra.mxu0 %v1846
    %2020 = vmatpush.bf16.msra.mxu0 %v1839
    %2021 = vmatpush.bf16.msra.mxu0 %v1832
    %2022 = vmatmul.bf16.gmra.mxu0 %v1279
    %v2023 = vpop.f32.mrf.mxu0
    %v2024 = vadd.f32 %v2010, %v2023
    %v2025 = vpop.f32.mrf.mxu0
    %v2026 = vadd.f32 %v2012, %v2025
    %2027 = vdwg.mxu0
    %2028 = vmatpush.bf16.msra.mxu0 %v1826
    %2029 = vmatpush.bf16.msra.mxu0 %v1819
    %2030 = vmatpush.bf16.msra.mxu0 %v1812
    %2031 = vmatpush.bf16.msra.mxu0 %v1805
    %2032 = vmatpush.bf16.msra.mxu0 %v1798
    %2033 = vmatpush.bf16.msra.mxu0 %v1791
    %2034 = vmatpush.bf16.msra.mxu0 %v1784
    %2035 = vmatpush.bf16.msra.mxu0 %v1777
    %2036 = vmatmul.bf16.gmra.mxu0 %v1278
    %v2037 = vpop.f32.mrf.mxu0
    %v2038 = vadd.f32 %v1411, %v2037
    %v2039 = vpop.f32.mrf.mxu0
    %v2040 = vadd.f32 %v1411, %v2039
    %2041 = vdwg.mxu0
    %2042 = vmatpush.bf16.msra.mxu0 %v1882
    %2043 = vmatpush.bf16.msra.mxu0 %v1875
    %2044 = vmatpush.bf16.msra.mxu0 %v1868
    %2045 = vmatpush.bf16.msra.mxu0 %v1861
    %2046 = vmatpush.bf16.msra.mxu0 %v1854
    %2047 = vmatpush.bf16.msra.mxu0 %v1847
    %2048 = vmatpush.bf16.msra.mxu0 %v1840
    %2049 = vmatpush.bf16.msra.mxu0 %v1833
    %2050 = vmatmul.bf16.gmra.mxu0 %v1279
    %v2051 = vpop.f32.mrf.mxu0
    %v2052 = vadd.f32 %v2038, %v2051
    %v2053 = vpop.f32.mrf.mxu0
    %v2054 = vadd.f32 %v2040, %v2053
    %2055 = vdwg.mxu0
    %2056 = vmatpush.bf16.msra.mxu0 %v1827
    %2057 = vmatpush.bf16.msra.mxu0 %v1820
    %2058 = vmatpush.bf16.msra.mxu0 %v1813
    %2059 = vmatpush.bf16.msra.mxu0 %v1806
    %2060 = vmatpush.bf16.msra.mxu0 %v1799
    %2061 = vmatpush.bf16.msra.mxu0 %v1792
    %2062 = vmatpush.bf16.msra.mxu0 %v1785
    %2063 = vmatpush.bf16.msra.mxu0 %v1778
    %2064 = vmatmul.bf16.gmra.mxu0 %v1278
    %v2065 = vpop.f32.mrf.mxu0
    %v2066 = vadd.f32 %v1412, %v2065
    %v2067 = vpop.f32.mrf.mxu0
    %v2068 = vadd.f32 %v1412, %v2067
    %2069 = vdwg.mxu0
    %2070 = vmatpush.bf16.msra.mxu0 %v1883
    %2071 = vmatpush.bf16.msra.mxu0 %v1876
    %2072 = vmatpush.bf16.msra.mxu0 %v1869
    %2073 = vmatpush.bf16.msra.mxu0 %v1862
    %2074 = vmatpush.bf16.msra.mxu0 %v1855
    %2075 = vmatpush.bf16.msra.mxu0 %v1848
    %2076 = vmatpush.bf16.msra.mxu0 %v1841
    %2077 = vmatpush.bf16.msra.mxu0 %v1834
    %2078 = vmatmul.bf16.gmra.mxu0 %v1279
    %v2079 = vpop.f32.mrf.mxu0
    %v2080 = vadd.f32 %v2066, %v2079
    %v2081 = vpop.f32.mrf.mxu0
    %v2082 = vadd.f32 %v2068, %v2081
    %2083 = vdwg.mxu0
    %2084 = vmatpush.bf16.msra.mxu0 %v1828
    %2085 = vmatpush.bf16.msra.mxu0 %v1821
    %2086 = vmatpush.bf16.msra.mxu0 %v1814
    %2087 = vmatpush.bf16.msra.mxu0 %v1807
    %2088 = vmatpush.bf16.msra.mxu0 %v1800
    %2089 = vmatpush.bf16.msra.mxu0 %v1793
    %2090 = vmatpush.bf16.msra.mxu0 %v1786
    %2091 = vmatpush.bf16.msra.mxu0 %v1779
    %2092 = vmatmul.bf16.gmra.mxu0 %v1278
    %v2093 = vpop.f32.mrf.mxu0
    %v2094 = vadd.f32 %v1413, %v2093
    %v2095 = vpop.f32.mrf.mxu0
    %v2096 = vadd.f32 %v1413, %v2095
    %2097 = vdwg.mxu0
    %2098 = vmatpush.bf16.msra.mxu0 %v1884
    %2099 = vmatpush.bf16.msra.mxu0 %v1877
    %2100 = vmatpush.bf16.msra.mxu0 %v1870
    %2101 = vmatpush.bf16.msra.mxu0 %v1863
    %2102 = vmatpush.bf16.msra.mxu0 %v1856
    %2103 = vmatpush.bf16.msra.mxu0 %v1849
    %2104 = vmatpush.bf16.msra.mxu0 %v1842
    %2105 = vmatpush.bf16.msra.mxu0 %v1835
    %2106 = vmatmul.bf16.gmra.mxu0 %v1279
    %v2107 = vpop.f32.mrf.mxu0
    %v2108 = vadd.f32 %v2094, %v2107
    %v2109 = vpop.f32.mrf.mxu0
    %v2110 = vadd.f32 %v2096, %v2109
    %2111 = vdwg.mxu0
    %2112 = vmatpush.bf16.msra.mxu0 %v1829
    %2113 = vmatpush.bf16.msra.mxu0 %v1822
    %2114 = vmatpush.bf16.msra.mxu0 %v1815
    %2115 = vmatpush.bf16.msra.mxu0 %v1808
    %2116 = vmatpush.bf16.msra.mxu0 %v1801
    %2117 = vmatpush.bf16.msra.mxu0 %v1794
    %2118 = vmatpush.bf16.msra.mxu0 %v1787
    %2119 = vmatpush.bf16.msra.mxu0 %v1780
    %2120 = vmatmul.bf16.gmra.mxu0 %v1278
    %v2121 = vpop.f32.mrf.mxu0
    %v2122 = vadd.f32 %v1414, %v2121
    %v2123 = vpop.f32.mrf.mxu0
    %v2124 = vadd.f32 %v1414, %v2123
    %2125 = vdwg.mxu0
    %2126 = vmatpush.bf16.msra.mxu0 %v1885
    %2127 = vmatpush.bf16.msra.mxu0 %v1878
    %2128 = vmatpush.bf16.msra.mxu0 %v1871
    %2129 = vmatpush.bf16.msra.mxu0 %v1864
    %2130 = vmatpush.bf16.msra.mxu0 %v1857
    %2131 = vmatpush.bf16.msra.mxu0 %v1850
    %2132 = vmatpush.bf16.msra.mxu0 %v1843
    %2133 = vmatpush.bf16.msra.mxu0 %v1836
    %2134 = vmatmul.bf16.gmra.mxu0 %v1279
    %v2135 = vpop.f32.mrf.mxu0
    %v2136 = vadd.f32 %v2122, %v2135
    %v2137 = vpop.f32.mrf.mxu0
    %v2138 = vadd.f32 %v2124, %v2137
    %2139 = vdwg.mxu0
    %2140 = vmatpush.bf16.msra.mxu0 %v1830
    %2141 = vmatpush.bf16.msra.mxu0 %v1823
    %2142 = vmatpush.bf16.msra.mxu0 %v1816
    %2143 = vmatpush.bf16.msra.mxu0 %v1809
    %2144 = vmatpush.bf16.msra.mxu0 %v1802
    %2145 = vmatpush.bf16.msra.mxu0 %v1795
    %2146 = vmatpush.bf16.msra.mxu0 %v1788
    %2147 = vmatpush.bf16.msra.mxu0 %v1781
    %2148 = vmatmul.bf16.gmra.mxu0 %v1278
    %v2149 = vpop.f32.mrf.mxu0
    %v2150 = vadd.f32 %v1415, %v2149
    %v2151 = vpop.f32.mrf.mxu0
    %v2152 = vadd.f32 %v1415, %v2151
    %2153 = vdwg.mxu0
    %2154 = vmatpush.bf16.msra.mxu0 %v1886
    %2155 = vmatpush.bf16.msra.mxu0 %v1879
    %2156 = vmatpush.bf16.msra.mxu0 %v1872
    %2157 = vmatpush.bf16.msra.mxu0 %v1865
    %2158 = vmatpush.bf16.msra.mxu0 %v1858
    %2159 = vmatpush.bf16.msra.mxu0 %v1851
    %2160 = vmatpush.bf16.msra.mxu0 %v1844
    %2161 = vmatpush.bf16.msra.mxu0 %v1837
    %2162 = vmatmul.bf16.gmra.mxu0 %v1279
    %v2163 = vpop.f32.mrf.mxu0
    %v2164 = vadd.f32 %v2150, %v2163
    %v2165 = vpop.f32.mrf.mxu0
    %v2166 = vadd.f32 %v2152, %v2165
    %2167 = vdwg.mxu0
    %2168 = vmatpush.bf16.msra.mxu0 %v1831
    %2169 = vmatpush.bf16.msra.mxu0 %v1824
    %2170 = vmatpush.bf16.msra.mxu0 %v1817
    %2171 = vmatpush.bf16.msra.mxu0 %v1810
    %2172 = vmatpush.bf16.msra.mxu0 %v1803
    %2173 = vmatpush.bf16.msra.mxu0 %v1796
    %2174 = vmatpush.bf16.msra.mxu0 %v1789
    %2175 = vmatpush.bf16.msra.mxu0 %v1782
    %2176 = vmatmul.bf16.gmra.mxu0 %v1278
    %v2177 = vpop.f32.mrf.mxu0
    %v2178 = vadd.f32 %v1416, %v2177
    %v2179 = vpop.f32.mrf.mxu0
    %v2180 = vadd.f32 %v1416, %v2179
    %2181 = vdwg.mxu0
    %2182 = vmatpush.bf16.msra.mxu0 %v1887
    %2183 = vmatpush.bf16.msra.mxu0 %v1880
    %2184 = vmatpush.bf16.msra.mxu0 %v1873
    %2185 = vmatpush.bf16.msra.mxu0 %v1866
    %2186 = vmatpush.bf16.msra.mxu0 %v1859
    %2187 = vmatpush.bf16.msra.mxu0 %v1852
    %2188 = vmatpush.bf16.msra.mxu0 %v1845
    %2189 = vmatpush.bf16.msra.mxu0 %v1838
    %2190 = vmatmul.bf16.gmra.mxu0 %v1279
    %v2191 = vpop.f32.mrf.mxu0
    %v2192 = vadd.f32 %v2178, %v2191
    %v2193 = vpop.f32.mrf.mxu0
    %v2194 = vadd.f32 %v2180, %v2193
    %2195 = vdwg.mxu0
    %2196 = vst [vmem:[#allocation2] sm:$0xff] %v2024
    %2197 = vst [vmem:[#allocation2 + $0x8] sm:$0xff] %v2052
    %2198 = vst [vmem:[#allocation2 + $0x10] sm:$0xff] %v2080
    %2199 = vst [vmem:[#allocation2 + $0x18] sm:$0xff] %v2108
    %2200 = vst [vmem:[#allocation2 + $0x20] sm:$0xff] %v2136
    %2201 = vst [vmem:[#allocation2 + $0x28] sm:$0xff] %v2164
    %2202 = vst.msk [vmem:[#allocation2 + $0x30] sm:$0xff] %vm689, %v2192
    %2203 = vst [vmem:[#allocation2 + $0x38] sm:$0xff] %v2026
    %2204 = vst [vmem:[#allocation2 + $0x40] sm:$0xff] %v2054
    %2205 = vst [vmem:[#allocation2 + $0x48] sm:$0xff] %v2082
    %2206 = vst [vmem:[#allocation2 + $0x50] sm:$0xff] %v2110
    %2207 = vst [vmem:[#allocation2 + $0x58] sm:$0xff] %v2138
    %2208 = vst [vmem:[#allocation2 + $0x60] sm:$0xff] %v2166
    %2209 = vst.msk [vmem:[#allocation2 + $0x68] sm:$0xff] %vm689, %v2194
    %vm2210 = vcmask 261120
    %2211 = vst.msk [vmem:[#allocation4] sm:$0xff] %vm2210, %v1120
    %2212 = vst.msk [vmem:[#allocation4 + $0x8] sm:$0xff] %vm2210, %v1122
    // Predicated region
    $region58: #{_vae_forward_padded.1} parent=1 // pred_check
      _
    $region59: #{_vae_forward_padded.1} parent=1 // pred_check_branch
      %2214 = sbr.rel (0) target = $region61
    $region60: #{_vae_forward_padded.1} parent=1 // pred_region
      %2216 = vsyncadd [#allocation3], 0
      %s2217 = sshll.u32 [#allocation2], 4
      %s2218 = int_to_ptr.vmem [resolvable:$true] %s2217
      %s2219 = sshll.u32 %s14, 4
      %s2220 = int_to_ptr.hbm [resolvable:$true] %s2219
      %2225 = dma.vmem_to_hbm [thread:$0]  %s2218, 1792, %s2220, [#allocation3], 896, 896, 56
    $region61: #{_vae_forward_padded.1} parent=1 // pred_fallthru
      _
    // Predicated region
    $region62: #{_vae_forward_padded.1} parent=1 // pred_check
      _
    $region63: #{_vae_forward_padded.1} parent=1 // pred_check_branch
      %2227 = sbr.rel (0) target = $region65
    $region64: #{_vae_forward_padded.1} parent=1 // pred_region
      %2229 = vsyncadd [#allocation5], 0
      %s2230 = sshll.u32 [#allocation4], 4
      %s2231 = int_to_ptr.vmem [resolvable:$true] %s2230
      %s2232 = sshll.u32 %s15, 4
      %s2233 = int_to_ptr.hbm [resolvable:$true] %s2232
      %2238 = dma.vmem_to_hbm [thread:$0]  %s2231, 256, %s2233, [#allocation5], 128, 128, 8
    $region65: #{_vae_forward_padded.1} parent=1 // pred_fallthru
      _
    // Predicated region
    $region66: #{_vae_forward_padded.1} parent=1 // pred_check
      _
    $region67: #{_vae_forward_padded.1} parent=1 // pred_check_branch
      %2240 = sbr.rel (0) target = $region69
    $region68: #{_vae_forward_padded.1} parent=1 // pred_region
      %2242 = dma.done [#allocation3], 1792
    $region69: #{_vae_forward_padded.1} parent=1 // pred_fallthru
      _
    // Predicated region
    $region70: #{_vae_forward_padded.1} parent=1 // pred_check
      _
    $region71: #{_vae_forward_padded.1} parent=1 // pred_check_branch
      %2244 = sbr.rel (0) target = $region73
    $region72: #{_vae_forward_padded.1} parent=1 // pred_region
      %2246 = dma.done [#allocation5], 256
    $region73: #{_vae_forward_padded.1} parent=1 // pred_fallthru
      _
    %2247 = vsyncpa [#allocation3], 1
    %2248 = vsyncpa [#allocation5], 1

// kernel: _vae_forward_padded.1
$region0: #{_vae_forward_padded.1}
  #allocation0 [shape = 'u32[]', space=smem, size = 0x4, offset = 0x4, fixed_abs, tag = 'smem constant byte address 0x4 - core index']
  #allocation1 [shape = 'u32[72,128]{1,0:T(1,128)}', space=vmem, size = 0x9000, scoped, tag = 'internal scratch']
  %s0 = inlined_call_operand.vmem [shape: bf16[16,784], index: 0, kind: input, shape index: {}]
  %s1 = inlined_call_operand.vmem [shape: f32[16,16], index: 1, kind: input, shape index: {}]
  %s2 = inlined_call_operand.vmem [shape: bf16[784,256], index: 2, kind: input, shape index: {}]
  %s3 = inlined_call_operand.vmem [shape: f32[1,256], index: 3, kind: input, shape index: {}]
  %s4 = inlined_call_operand.vmem [shape: bf16[256,64], index: 4, kind: input, shape index: {}]
  %s5 = inlined_call_operand.vmem [shape: f32[1,64], index: 5, kind: input, shape index: {}]
  %s6 = inlined_call_operand.vmem [shape: bf16[64,32], index: 6, kind: input, shape index: {}]
  %s7 = inlined_call_operand.vmem [shape: f32[1,32], index: 7, kind: input, shape index: {}]
  %s8 = inlined_call_operand.vmem [shape: bf16[16,64], index: 8, kind: input, shape index: {}]
  %s9 = inlined_call_operand.vmem [shape: f32[1,64], index: 9, kind: input, shape index: {}]
  %s10 = inlined_call_operand.vmem [shape: bf16[64,256], index: 10, kind: input, shape index: {}]
  %s11 = inlined_call_operand.vmem [shape: f32[1,256], index: 11, kind: input, shape index: {}]
  %s12 = inlined_call_operand.vmem [shape: bf16[256,784], index: 12, kind: input, shape index: {}]
  %s13 = inlined_call_operand.vmem [shape: f32[1,784], index: 13, kind: input, shape index: {}]
  %s14 = inlined_call_operand.hbm [shape: f32[16,784], index: 14, kind: output, shape index: {0}]
  %s15 = inlined_call_operand.hbm [shape: f32[16,32], index: 15, kind: output, shape index: {1}]
  %16 = xla_tuple %s14, %s15
  %s17 = sld [smem:[#allocation0]]
  $region74: #{_vae_forward_padded.1} parent=0
    _
  %s19 = ssub.s32 1, %s17
  %s20 = scalar_select 0, %s19, %s17
  $region1: #{_vae_forward_padded.1} parent=0
    #allocation2 [shape = 'u8[57344]{0}', space=vmem, size = 0xe000, scoped, tag = 'output window, operand 0, single buffered']
    #allocation3 [shape = 's32[1]{0}', space=sflag, size = 0x4, scoped, tag = 'scoped memory for _vae_forward_padded.1']
    #allocation4 [shape = 'u8[8192]{0}', space=vmem, size = 0x2000, scoped, tag = 'output window, operand 1, single buffered']
    #allocation5 [shape = 's32[1]{0}', space=sflag, size = 0x4, scoped, tag = 'scoped memory for _vae_forward_padded.1']
    %21 = vsyncpa [#allocation3], 0
    %22 = vsyncpa [#allocation5], 0
    // Predicated region
    $region2: #{_vae_forward_padded.1} parent=1 // pred_check
      _
    $region3: #{_vae_forward_padded.1} parent=1 // pred_check_branch
      %24 = sbr.rel (0) target = $region5
    $region4: #{_vae_forward_padded.1} parent=1 // pred_region
      _
    $region5: #{_vae_forward_padded.1} parent=1 // pred_fallthru
      _
    // Predicated region
    $region6: #{_vae_forward_padded.1} parent=1 // pred_check
      _
    $region7: #{_vae_forward_padded.1} parent=1 // pred_check_branch
      %26 = sbr.rel (0) target = $region9
    $region8: #{_vae_forward_padded.1} parent=1 // pred_region
      _
    $region9: #{_vae_forward_padded.1} parent=1 // pred_fallthru
      _
    // Predicated region
    $region10: #{_vae_forward_padded.1} parent=1 // pred_check
      _
    $region11: #{_vae_forward_padded.1} parent=1 // pred_check_branch
      %28 = sbr.rel (0) target = $region13
    $region12: #{_vae_forward_padded.1} parent=1 // pred_region
      _
    $region13: #{_vae_forward_padded.1} parent=1 // pred_fallthru
      _
    // Predicated region
    $region14: #{_vae_forward_padded.1} parent=1 // pred_check
      _
    $region15: #{_vae_forward_padded.1} parent=1 // pred_check_branch
      %30 = sbr.rel (0) target = $region17
    $region16: #{_vae_forward_padded.1} parent=1 // pred_region
      _
    $region17: #{_vae_forward_padded.1} parent=1 // pred_fallthru
      _
    // Predicated region
    $region18: #{_vae_forward_padded.1} parent=1 // pred_check
      _
    $region19: #{_vae_forward_padded.1} parent=1 // pred_check_branch
      %32 = sbr.rel (0) target = $region21
    $region20: #{_vae_forward_padded.1} parent=1 // pred_region
      _
    $region21: #{_vae_forward_padded.1} parent=1 // pred_fallthru
      _
    // Predicated region
    $region22: #{_vae_forward_padded.1} parent=1 // pred_check
      _
    $region23: #{_vae_forward_padded.1} parent=1 // pred_check_branch
      %34 = sbr.rel (0) target = $region25
    $region24: #{_vae_forward_padded.1} parent=1 // pred_region
      _
    $region25: #{_vae_forward_padded.1} parent=1 // pred_fallthru
      _
    // Predicated region
    $region26: #{_vae_forward_padded.1} parent=1 // pred_check
      _
    $region27: #{_vae_forward_padded.1} parent=1 // pred_check_branch
      %36 = sbr.rel (0) target = $region29
    $region28: #{_vae_forward_padded.1} parent=1 // pred_region
      _
    $region29: #{_vae_forward_padded.1} parent=1 // pred_fallthru
      _
    // Predicated region
    $region30: #{_vae_forward_padded.1} parent=1 // pred_check
      _
    $region31: #{_vae_forward_padded.1} parent=1 // pred_check_branch
      %38 = sbr.rel (0) target = $region33
    $region32: #{_vae_forward_padded.1} parent=1 // pred_region
      _
    $region33: #{_vae_forward_padded.1} parent=1 // pred_fallthru
      _
    // Predicated region
    $region34: #{_vae_forward_padded.1} parent=1 // pred_check
      _
    $region35: #{_vae_forward_padded.1} parent=1 // pred_check_branch
      %40 = sbr.rel (0) target = $region37
    $region36: #{_vae_forward_padded.1} parent=1 // pred_region
      _
    $region37: #{_vae_forward_padded.1} parent=1 // pred_fallthru
      _
    // Predicated region
    $region38: #{_vae_forward_padded.1} parent=1 // pred_check
      _
    $region39: #{_vae_forward_padded.1} parent=1 // pred_check_branch
      %42 = sbr.rel (0) target = $region41
    $region40: #{_vae_forward_padded.1} parent=1 // pred_region
      _
    $region41: #{_vae_forward_padded.1} parent=1 // pred_fallthru
      _
    // Predicated region
    $region42: #{_vae_forward_padded.1} parent=1 // pred_check
      _
    $region43: #{_vae_forward_padded.1} parent=1 // pred_check_branch
      %44 = sbr.rel (0) target = $region45
    $region44: #{_vae_forward_padded.1} parent=1 // pred_region
      _
    $region45: #{_vae_forward_padded.1} parent=1 // pred_fallthru
      _
    // Predicated region
    $region46: #{_vae_forward_padded.1} parent=1 // pred_check
      _
    $region47: #{_vae_forward_padded.1} parent=1 // pred_check_branch
      %46 = sbr.rel (0) target = $region49
    $region48: #{_vae_forward_padded.1} parent=1 // pred_region
      _
    $region49: #{_vae_forward_padded.1} parent=1 // pred_fallthru
      _
    // Predicated region
    $region50: #{_vae_forward_padded.1} parent=1 // pred_check
      _
    $region51: #{_vae_forward_padded.1} parent=1 // pred_check_branch
      %48 = sbr.rel (0) target = $region53
    $region52: #{_vae_forward_padded.1} parent=1 // pred_region
      _
    $region53: #{_vae_forward_padded.1} parent=1 // pred_fallthru
      _
    // Predicated region
    $region54: #{_vae_forward_padded.1} parent=1 // pred_check
      _
    $region55: #{_vae_forward_padded.1} parent=1 // pred_check_branch
      %50 = sbr.rel (0) target = $region57
    $region56: #{_vae_forward_padded.1} parent=1 // pred_region
      _
    $region57: #{_vae_forward_padded.1} parent=1 // pred_fallthru
      _
    %v52 = vld [vmem:[%s0] sm:$0xff]
    %v53 = vld [vmem:[%s0 + $0x8] sm:$0xff]
    %v54 = vld [vmem:[%s0 + $0x10] sm:$0xff]
    %v55 = vld [vmem:[%s0 + $0x18] sm:$0xf]
    %v56 = vld [vmem:[%s0 + $0x1c] sm:$0xff]
    %v57 = vld [vmem:[%s0 + $0x24] sm:$0xff]
    %v58 = vld [vmem:[%s0 + $0x2c] sm:$0xff]
    %v59 = vld [vmem:[%s0 + $0x34] sm:$0xf]
    %v60 = vld [vmem:[%s2] sm:$0xff]
    %v61 = vld [vmem:[%s2 + $0x8] sm:$0xff]
    %v62 = vld [vmem:[%s2 + $0x10] sm:$0xff]
    %v63 = vld [vmem:[%s2 + $0x18] sm:$0xff]
    %v64 = vld [vmem:[%s2 + $0x20] sm:$0xff]
    %v65 = vld [vmem:[%s2 + $0x28] sm:$0xff]
    %v66 = vld [vmem:[%s2 + $0x30] sm:$0xff]
    %v67 = vld [vmem:[%s2 + $0x38] sm:$0xff]
    %v68 = vld [vmem:[%s2 + $0x40] sm:$0xff]
    %v69 = vld [vmem:[%s2 + $0x48] sm:$0xff]
    %v70 = vld [vmem:[%s2 + $0x50] sm:$0xff]
    %v71 = vld [vmem:[%s2 + $0x58] sm:$0xff]
    %v72 = vld [vmem:[%s2 + $0x60] sm:$0xff]
    %v73 = vld [vmem:[%s2 + $0x68] sm:$0xff]
    %v74 = vld [vmem:[%s2 + $0x70] sm:$0xff]
    %v75 = vld [vmem:[%s2 + $0x78] sm:$0xff]
    %v76 = vld [vmem:[%s2 + $0x80] sm:$0xff]
    %v77 = vld [vmem:[%s2 + $0x88] sm:$0xff]
    %v78 = vld [vmem:[%s2 + $0x90] sm:$0xff]
    %v79 = vld [vmem:[%s2 + $0x98] sm:$0xff]
    %v80 = vld [vmem:[%s2 + $0xa0] sm:$0xff]
    %v81 = vld [vmem:[%s2 + $0xa8] sm:$0xff]
    %v82 = vld [vmem:[%s2 + $0xb0] sm:$0xff]
    %v83 = vld [vmem:[%s2 + $0xb8] sm:$0xff]
    %v84 = vld [vmem:[%s2 + $0xc0] sm:$0xff]
    %v85 = vld [vmem:[%s2 + $0xc8] sm:$0xff]
    %v86 = vld [vmem:[%s2 + $0xd0] sm:$0xff]
    %v87 = vld [vmem:[%s2 + $0xd8] sm:$0xff]
    %v88 = vld [vmem:[%s2 + $0xe0] sm:$0xff]
    %v89 = vld [vmem:[%s2 + $0xe8] sm:$0xff]
    %v90 = vld [vmem:[%s2 + $0xf0] sm:$0xff]
    %v91 = vld [vmem:[%s2 + $0xf8] sm:$0xff]
    %v92 = vld [vmem:[%s2 + $0x100] sm:$0xff]
    %v93 = vld [vmem:[%s2 + $0x108] sm:$0xff]
    %v94 = vld [vmem:[%s2 + $0x110] sm:$0xff]
    %v95 = vld [vmem:[%s2 + $0x118] sm:$0xff]
    %v96 = vld [vmem:[%s2 + $0x120] sm:$0xff]
    %v97 = vld [vmem:[%s2 + $0x128] sm:$0xff]
    %v98 = vld [vmem:[%s2 + $0x130] sm:$0xff]
    %v99 = vld [vmem:[%s2 + $0x138] sm:$0xff]
    %v100 = vld [vmem:[%s2 + $0x140] sm:$0xff]
    %v101 = vld [vmem:[%s2 + $0x148] sm:$0xff]
    %v102 = vld [vmem:[%s2 + $0x150] sm:$0xff]
    %v103 = vld [vmem:[%s2 + $0x158] sm:$0xff]
    %v104 = vld [vmem:[%s2 + $0x160] sm:$0xff]
    %v105 = vld [vmem:[%s2 + $0x168] sm:$0xff]
    %v106 = vld [vmem:[%s2 + $0x170] sm:$0xff]
    %v107 = vld [vmem:[%s2 + $0x178] sm:$0xff]
    %v108 = vld [vmem:[%s2 + $0x180] sm:$0xff]
    %v109 = vld [vmem:[%s2 + $0x188] sm:$0xff]
    %v110 = vld [vmem:[%s2 + $0x190] sm:$0xff]
    %v111 = vld [vmem:[%s2 + $0x198] sm:$0xff]
    %v112 = vld [vmem:[%s2 + $0x1a0] sm:$0xff]
    %v113 = vld [vmem:[%s2 + $0x1a8] sm:$0xff]
    %v114 = vld [vmem:[%s2 + $0x1b0] sm:$0xff]
    %v115 = vld [vmem:[%s2 + $0x1b8] sm:$0xff]
    %v116 = vld [vmem:[%s2 + $0x1c0] sm:$0xff]
    %v117 = vld [vmem:[%s2 + $0x1c8] sm:$0xff]
    %v118 = vld [vmem:[%s2 + $0x1d0] sm:$0xff]
    %v119 = vld [vmem:[%s2 + $0x1d8] sm:$0xff]
    %v120 = vld [vmem:[%s2 + $0x1e0] sm:$0xff]
    %v121 = vld [vmem:[%s2 + $0x1e8] sm:$0xff]
    %v122 = vld [vmem:[%s2 + $0x1f0] sm:$0xff]
    %v123 = vld [vmem:[%s2 + $0x1f8] sm:$0xff]
    %v124 = vld [vmem:[%s2 + $0x200] sm:$0xff]
    %v125 = vld [vmem:[%s2 + $0x208] sm:$0xff]
    %v126 = vld [vmem:[%s2 + $0x210] sm:$0xff]
    %v127 = vld [vmem:[%s2 + $0x218] sm:$0xff]
    %v128 = vld [vmem:[%s2 + $0x220] sm:$0xff]
    %v129 = vld [vmem:[%s2 + $0x228] sm:$0xff]
    %v130 = vld [vmem:[%s2 + $0x230] sm:$0xff]
    %v131 = vld [vmem:[%s2 + $0x238] sm:$0xff]
    %v132 = vld [vmem:[%s2 + $0x240] sm:$0xff]
    %v133 = vld [vmem:[%s2 + $0x248] sm:$0xff]
    %v134 = vld [vmem:[%s2 + $0x250] sm:$0xff]
    %v135 = vld [vmem:[%s2 + $0x258] sm:$0xff]
    %v136 = vld [vmem:[%s2 + $0x260] sm:$0xff]
    %v137 = vld [vmem:[%s2 + $0x268] sm:$0xff]
    %v138 = vld [vmem:[%s2 + $0x270] sm:$0xff]
    %v139 = vld [vmem:[%s2 + $0x278] sm:$0xff]
    %v140 = vld [vmem:[%s2 + $0x280] sm:$0xff]
    %v141 = vld [vmem:[%s2 + $0x288] sm:$0xff]
    %v142 = vld [vmem:[%s2 + $0x290] sm:$0xff]
    %v143 = vld [vmem:[%s2 + $0x298] sm:$0xff]
    %v144 = vld [vmem:[%s2 + $0x2a0] sm:$0xff]
    %v145 = vld [vmem:[%s2 + $0x2a8] sm:$0xff]
    %v146 = vld [vmem:[%s2 + $0x2b0] sm:$0xff]
    %v147 = vld [vmem:[%s2 + $0x2b8] sm:$0xff]
    %v148 = vld [vmem:[%s2 + $0x2c0] sm:$0xff]
    %v149 = vld [vmem:[%s2 + $0x2c8] sm:$0xff]
    %v150 = vld [vmem:[%s2 + $0x2d0] sm:$0xff]
    %v151 = vld [vmem:[%s2 + $0x2d8] sm:$0xff]
    %v152 = vld [vmem:[%s2 + $0x2e0] sm:$0xff]
    %v153 = vld [vmem:[%s2 + $0x2e8] sm:$0xff]
    %v154 = vld [vmem:[%s2 + $0x2f0] sm:$0xff]
    %v155 = vld [vmem:[%s2 + $0x2f8] sm:$0xff]
    %v156 = vld [vmem:[%s2 + $0x300] sm:$0xff]
    %v157 = vld [vmem:[%s2 + $0x308] sm:$0xff]
    %v158 = vld [vmem:[%s3] sm:$0x3]
    %v160 = vperm.slane %v158, 0
    %v161 = vperm.slane %v158, 1
    %v172 = vunpack.c.l.b16 %v52
    %v173 = vunpack.c.h.b16 %v52
    %v174 = vunpack.c.l.b16 %v53
    %v175 = vunpack.c.h.b16 %v53
    %v176 = vunpack.c.l.b16 %v54
    %v177 = vunpack.c.h.b16 %v54
    %v178 = vunpack.c.l.b16 %v55
    %v179 = vunpack.c.l.b16 %v56
    %v180 = vunpack.c.h.b16 %v56
    %v181 = vunpack.c.l.b16 %v57
    %v182 = vunpack.c.h.b16 %v57
    %v183 = vunpack.c.l.b16 %v58
    %v184 = vunpack.c.h.b16 %v58
    %v185 = vunpack.c.l.b16 %v59
    %v186 = vpack.c.b16 %v179, %v172
    %v187 = vpack.c.b16 %v180, %v173
    %v188 = vpack.c.b16 %v181, %v174
    %v189 = vpack.c.b16 %v182, %v175
    %v190 = vpack.c.b16 %v183, %v176
    %v191 = vpack.c.b16 %v184, %v177
    %v192 = vpack.c.b16 %v185, %v178
    %v297 = vunpack.c.l.b16 %v60
    %v298 = vunpack.c.h.b16 %v60
    %v299 = vunpack.c.l.b16 %v61
    %v300 = vunpack.c.h.b16 %v61
    %v301 = vunpack.c.l.b16 %v62
    %v302 = vunpack.c.h.b16 %v62
    %v303 = vunpack.c.l.b16 %v63
    %v304 = vunpack.c.h.b16 %v63
    %v305 = vunpack.c.l.b16 %v64
    %v306 = vunpack.c.h.b16 %v64
    %v307 = vunpack.c.l.b16 %v65
    %v308 = vunpack.c.h.b16 %v65
    %v309 = vunpack.c.l.b16 %v66
    %v310 = vunpack.c.h.b16 %v66
    %v311 = vunpack.c.l.b16 %v67
    %v312 = vunpack.c.h.b16 %v67
    %v313 = vunpack.c.l.b16 %v68
    %v314 = vunpack.c.h.b16 %v68
    %v315 = vunpack.c.l.b16 %v69
    %v316 = vunpack.c.h.b16 %v69
    %v317 = vunpack.c.l.b16 %v70
    %v318 = vunpack.c.h.b16 %v70
    %v319 = vunpack.c.l.b16 %v71
    %v320 = vunpack.c.h.b16 %v71
    %v321 = vunpack.c.l.b16 %v72
    %v322 = vunpack.c.h.b16 %v72
    %v323 = vunpack.c.l.b16 %v73
    %v324 = vunpack.c.h.b16 %v73
    %v325 = vunpack.c.l.b16 %v74
    %v326 = vunpack.c.h.b16 %v74
    %v327 = vunpack.c.l.b16 %v75
    %v328 = vunpack.c.h.b16 %v75
    %v329 = vunpack.c.l.b16 %v76
    %v330 = vunpack.c.h.b16 %v76
    %v331 = vunpack.c.l.b16 %v77
    %v332 = vunpack.c.h.b16 %v77
    %v333 = vunpack.c.l.b16 %v78
    %v334 = vunpack.c.h.b16 %v78
    %v335 = vunpack.c.l.b16 %v79
    %v336 = vunpack.c.h.b16 %v79
    %v337 = vunpack.c.l.b16 %v80
    %v338 = vunpack.c.h.b16 %v80
    %v339 = vunpack.c.l.b16 %v81
    %v340 = vunpack.c.h.b16 %v81
    %v341 = vunpack.c.l.b16 %v82
    %v342 = vunpack.c.h.b16 %v82
    %v343 = vunpack.c.l.b16 %v83
    %v344 = vunpack.c.h.b16 %v83
    %v345 = vunpack.c.l.b16 %v84
    %v346 = vunpack.c.h.b16 %v84
    %v347 = vunpack.c.l.b16 %v85
    %v348 = vunpack.c.h.b16 %v85
    %v349 = vunpack.c.l.b16 %v86
    %v350 = vunpack.c.h.b16 %v86
    %v351 = vunpack.c.l.b16 %v87
    %v352 = vunpack.c.h.b16 %v87
    %v353 = vunpack.c.l.b16 %v88
    %v354 = vunpack.c.h.b16 %v88
    %v355 = vunpack.c.l.b16 %v89
    %v356 = vunpack.c.h.b16 %v89
    %v357 = vunpack.c.l.b16 %v90
    %v358 = vunpack.c.h.b16 %v90
    %v359 = vunpack.c.l.b16 %v91
    %v360 = vunpack.c.h.b16 %v91
    %v361 = vunpack.c.l.b16 %v92
    %v362 = vunpack.c.h.b16 %v92
    %v363 = vunpack.c.l.b16 %v93
    %v364 = vunpack.c.h.b16 %v93
    %v365 = vunpack.c.l.b16 %v94
    %v366 = vunpack.c.h.b16 %v94
    %v367 = vunpack.c.l.b16 %v95
    %v368 = vunpack.c.h.b16 %v95
    %v369 = vunpack.c.l.b16 %v96
    %v370 = vunpack.c.h.b16 %v96
    %v371 = vunpack.c.l.b16 %v97
    %v372 = vunpack.c.h.b16 %v97
    %v373 = vunpack.c.l.b16 %v98
    %v374 = vunpack.c.h.b16 %v98
    %v375 = vunpack.c.l.b16 %v99
    %v376 = vunpack.c.h.b16 %v99
    %v377 = vunpack.c.l.b16 %v100
    %v378 = vunpack.c.h.b16 %v100
    %v379 = vunpack.c.l.b16 %v101
    %v380 = vunpack.c.h.b16 %v101
    %v381 = vunpack.c.l.b16 %v102
    %v382 = vunpack.c.h.b16 %v102
    %v383 = vunpack.c.l.b16 %v103
    %v384 = vunpack.c.h.b16 %v103
    %v385 = vunpack.c.l.b16 %v104
    %v386 = vunpack.c.h.b16 %v104
    %v387 = vunpack.c.l.b16 %v105
    %v388 = vunpack.c.h.b16 %v105
    %v389 = vunpack.c.l.b16 %v106
    %v390 = vunpack.c.h.b16 %v106
    %v391 = vunpack.c.l.b16 %v107
    %v392 = vunpack.c.h.b16 %v107
    %v393 = vunpack.c.l.b16 %v108
    %v394 = vunpack.c.h.b16 %v108
    %v395 = vunpack.c.l.b16 %v109
    %v396 = vunpack.c.h.b16 %v109
    %v397 = vunpack.c.l.b16 %v110
    %v398 = vunpack.c.h.b16 %v110
    %v399 = vunpack.c.l.b16 %v111
    %v400 = vunpack.c.h.b16 %v111
    %v401 = vunpack.c.l.b16 %v112
    %v402 = vunpack.c.h.b16 %v112
    %v403 = vunpack.c.l.b16 %v113
    %v404 = vunpack.c.h.b16 %v113
    %v405 = vunpack.c.l.b16 %v114
    %v406 = vunpack.c.h.b16 %v114
    %v407 = vunpack.c.l.b16 %v115
    %v408 = vunpack.c.h.b16 %v115
    %v409 = vunpack.c.l.b16 %v116
    %v410 = vunpack.c.h.b16 %v116
    %v411 = vunpack.c.l.b16 %v117
    %v412 = vunpack.c.h.b16 %v117
    %v413 = vunpack.c.l.b16 %v118
    %v414 = vunpack.c.h.b16 %v118
    %v415 = vunpack.c.l.b16 %v119
    %v416 = vunpack.c.h.b16 %v119
    %v417 = vunpack.c.l.b16 %v120
    %v418 = vunpack.c.h.b16 %v120
    %v419 = vunpack.c.l.b16 %v121
    %v420 = vunpack.c.h.b16 %v121
    %v421 = vunpack.c.l.b16 %v122
    %v422 = vunpack.c.h.b16 %v122
    %v423 = vunpack.c.l.b16 %v123
    %v424 = vunpack.c.h.b16 %v123
    %v425 = vunpack.c.l.b16 %v124
    %v426 = vunpack.c.h.b16 %v124
    %v427 = vunpack.c.l.b16 %v125
    %v428 = vunpack.c.h.b16 %v125
    %v429 = vunpack.c.l.b16 %v126
    %v430 = vunpack.c.h.b16 %v126
    %v431 = vunpack.c.l.b16 %v127
    %v432 = vunpack.c.h.b16 %v127
    %v433 = vunpack.c.l.b16 %v128
    %v434 = vunpack.c.h.b16 %v128
    %v435 = vunpack.c.l.b16 %v129
    %v436 = vunpack.c.h.b16 %v129
    %v437 = vunpack.c.l.b16 %v130
    %v438 = vunpack.c.h.b16 %v130
    %v439 = vunpack.c.l.b16 %v131
    %v440 = vunpack.c.h.b16 %v131
    %v441 = vunpack.c.l.b16 %v132
    %v442 = vunpack.c.h.b16 %v132
    %v443 = vunpack.c.l.b16 %v133
    %v444 = vunpack.c.h.b16 %v133
    %v445 = vunpack.c.l.b16 %v134
    %v446 = vunpack.c.h.b16 %v134
    %v447 = vunpack.c.l.b16 %v135
    %v448 = vunpack.c.h.b16 %v135
    %v449 = vunpack.c.l.b16 %v136
    %v450 = vunpack.c.h.b16 %v136
    %v451 = vunpack.c.l.b16 %v137
    %v452 = vunpack.c.h.b16 %v137
    %v453 = vunpack.c.l.b16 %v138
    %v454 = vunpack.c.h.b16 %v138
    %v455 = vunpack.c.l.b16 %v139
    %v456 = vunpack.c.h.b16 %v139
    %v457 = vunpack.c.l.b16 %v140
    %v458 = vunpack.c.h.b16 %v140
    %v459 = vunpack.c.l.b16 %v141
    %v460 = vunpack.c.h.b16 %v141
    %v461 = vunpack.c.l.b16 %v142
    %v462 = vunpack.c.h.b16 %v142
    %v463 = vunpack.c.l.b16 %v143
    %v464 = vunpack.c.h.b16 %v143
    %v465 = vunpack.c.l.b16 %v144
    %v466 = vunpack.c.h.b16 %v144
    %v467 = vunpack.c.l.b16 %v145
    %v468 = vunpack.c.h.b16 %v145
    %v469 = vunpack.c.l.b16 %v146
    %v470 = vunpack.c.h.b16 %v146
    %v471 = vunpack.c.l.b16 %v147
    %v472 = vunpack.c.h.b16 %v147
    %v473 = vunpack.c.l.b16 %v148
    %v474 = vunpack.c.h.b16 %v148
    %v475 = vunpack.c.l.b16 %v149
    %v476 = vunpack.c.h.b16 %v149
    %v477 = vunpack.c.l.b16 %v150
    %v478 = vunpack.c.h.b16 %v150
    %v479 = vunpack.c.l.b16 %v151
    %v480 = vunpack.c.h.b16 %v151
    %v481 = vunpack.c.l.b16 %v152
    %v482 = vunpack.c.h.b16 %v152
    %v483 = vunpack.c.l.b16 %v153
    %v484 = vunpack.c.h.b16 %v153
    %v485 = vunpack.c.l.b16 %v154
    %v486 = vunpack.c.h.b16 %v154
    %v487 = vunpack.c.l.b16 %v155
    %v488 = vunpack.c.h.b16 %v155
    %v489 = vunpack.c.l.b16 %v156
    %v490 = vunpack.c.h.b16 %v156
    %v491 = vunpack.c.l.b16 %v157
    %v492 = vunpack.c.h.b16 %v157
    %v493 = vpack.c.b16 %v299, %v297
    %v494 = vpack.c.b16 %v300, %v298
    %v495 = vpack.c.b16 %v303, %v301
    %v496 = vpack.c.b16 %v304, %v302
    %v497 = vpack.c.b16 %v307, %v305
    %v498 = vpack.c.b16 %v308, %v306
    %v499 = vpack.c.b16 %v311, %v309
    %v500 = vpack.c.b16 %v312, %v310
    %v501 = vpack.c.b16 %v315, %v313
    %v502 = vpack.c.b16 %v316, %v314
    %v503 = vpack.c.b16 %v319, %v317
    %v504 = vpack.c.b16 %v320, %v318
    %v505 = vpack.c.b16 %v323, %v321
    %v506 = vpack.c.b16 %v324, %v322
    %v507 = vpack.c.b16 %v327, %v325
    %v508 = vpack.c.b16 %v328, %v326
    %v509 = vpack.c.b16 %v331, %v329
    %v510 = vpack.c.b16 %v332, %v330
    %v511 = vpack.c.b16 %v335, %v333
    %v512 = vpack.c.b16 %v336, %v334
    %v513 = vpack.c.b16 %v339, %v337
    %v514 = vpack.c.b16 %v340, %v338
    %v515 = vpack.c.b16 %v343, %v341
    %v516 = vpack.c.b16 %v344, %v342
    %v517 = vpack.c.b16 %v347, %v345
    %v518 = vpack.c.b16 %v348, %v346
    %v519 = vpack.c.b16 %v351, %v349
    %v520 = vpack.c.b16 %v352, %v350
    %v521 = vpack.c.b16 %v355, %v353
    %v522 = vpack.c.b16 %v356, %v354
    %v523 = vpack.c.b16 %v359, %v357
    %v524 = vpack.c.b16 %v360, %v358
    %v525 = vpack.c.b16 %v363, %v361
    %v526 = vpack.c.b16 %v364, %v362
    %v527 = vpack.c.b16 %v367, %v365
    %v528 = vpack.c.b16 %v368, %v366
    %v529 = vpack.c.b16 %v371, %v369
    %v530 = vpack.c.b16 %v372, %v370
    %v531 = vpack.c.b16 %v375, %v373
    %v532 = vpack.c.b16 %v376, %v374
    %v533 = vpack.c.b16 %v379, %v377
    %v534 = vpack.c.b16 %v380, %v378
    %v535 = vpack.c.b16 %v383, %v381
    %v536 = vpack.c.b16 %v384, %v382
    %v537 = vpack.c.b16 %v387, %v385
    %v538 = vpack.c.b16 %v388, %v386
    %v539 = vpack.c.b16 %v391, %v389
    %v540 = vpack.c.b16 %v392, %v390
    %v541 = vpack.c.b16 %v395, %v393
    %v542 = vpack.c.b16 %v396, %v394
    %v543 = vpack.c.b16 %v399, %v397
    %v544 = vpack.c.b16 %v400, %v398
    %v545 = vpack.c.b16 %v403, %v401
    %v546 = vpack.c.b16 %v404, %v402
    %v547 = vpack.c.b16 %v407, %v405
    %v548 = vpack.c.b16 %v408, %v406
    %v549 = vpack.c.b16 %v411, %v409
    %v550 = vpack.c.b16 %v412, %v410
    %v551 = vpack.c.b16 %v415, %v413
    %v552 = vpack.c.b16 %v416, %v414
    %v553 = vpack.c.b16 %v419, %v417
    %v554 = vpack.c.b16 %v420, %v418
    %v555 = vpack.c.b16 %v423, %v421
    %v556 = vpack.c.b16 %v424, %v422
    %v557 = vpack.c.b16 %v427, %v425
    %v558 = vpack.c.b16 %v428, %v426
    %v559 = vpack.c.b16 %v431, %v429
    %v560 = vpack.c.b16 %v432, %v430
    %v561 = vpack.c.b16 %v435, %v433
    %v562 = vpack.c.b16 %v436, %v434
    %v563 = vpack.c.b16 %v439, %v437
    %v564 = vpack.c.b16 %v440, %v438
    %v565 = vpack.c.b16 %v443, %v441
    %v566 = vpack.c.b16 %v444, %v442
    %v567 = vpack.c.b16 %v447, %v445
    %v568 = vpack.c.b16 %v448, %v446
    %v569 = vpack.c.b16 %v451, %v449
    %v570 = vpack.c.b16 %v452, %v450
    %v571 = vpack.c.b16 %v455, %v453
    %v572 = vpack.c.b16 %v456, %v454
    %v573 = vpack.c.b16 %v459, %v457
    %v574 = vpack.c.b16 %v460, %v458
    %v575 = vpack.c.b16 %v463, %v461
    %v576 = vpack.c.b16 %v464, %v462
    %v577 = vpack.c.b16 %v467, %v465
    %v578 = vpack.c.b16 %v468, %v466
    %v579 = vpack.c.b16 %v471, %v469
    %v580 = vpack.c.b16 %v472, %v470
    %v581 = vpack.c.b16 %v475, %v473
    %v582 = vpack.c.b16 %v476, %v474
    %v583 = vpack.c.b16 %v479, %v477
    %v584 = vpack.c.b16 %v480, %v478
    %v585 = vpack.c.b16 %v483, %v481
    %v586 = vpack.c.b16 %v484, %v482
    %v587 = vpack.c.b16 %v487, %v485
    %v588 = vpack.c.b16 %v488, %v486
    %v589 = vpack.c.b16 %v491, %v489
    %v590 = vpack.c.b16 %v492, %v490
    %vm689 = vcmask 130048
    %v691 = vsel %vm689, %v192, 0
    %693 = vmatpush.bf16.msra.mxu0 %v507
    %694 = vmatpush.bf16.msra.mxu0 %v505
    %695 = vmatpush.bf16.msra.mxu0 %v503
    %696 = vmatpush.bf16.msra.mxu0 %v501
    %697 = vmatpush.bf16.msra.mxu0 %v499
    %698 = vmatpush.bf16.msra.mxu0 %v497
    %699 = vmatpush.bf16.msra.mxu0 %v495
    %700 = vmatpush.bf16.msra.mxu0 %v493
    %701 = vmatmul.bf16.gmra.mxu0 %v186
    %v702 = vpop.f32.mrf.mxu0
    %v703 = vadd.f32 %v160, %v702
    %v704 = vpop.f32.mrf.mxu0
    %v705 = vadd.f32 %v160, %v704
    %706 = vdwg.mxu0
    %707 = vmatpush.bf16.msra.mxu0 %v523
    %708 = vmatpush.bf16.msra.mxu0 %v521
    %709 = vmatpush.bf16.msra.mxu0 %v519
    %710 = vmatpush.bf16.msra.mxu0 %v517
    %711 = vmatpush.bf16.msra.mxu0 %v515
    %712 = vmatpush.bf16.msra.mxu0 %v513
    %713 = vmatpush.bf16.msra.mxu0 %v511
    %714 = vmatpush.bf16.msra.mxu0 %v509
    %715 = vmatmul.bf16.gmra.mxu0 %v187
    %v716 = vpop.f32.mrf.mxu0
    %v717 = vadd.f32 %v703, %v716
    %v718 = vpop.f32.mrf.mxu0
    %v719 = vadd.f32 %v705, %v718
    %720 = vdwg.mxu0
    %721 = vmatpush.bf16.msra.mxu0 %v539
    %722 = vmatpush.bf16.msra.mxu0 %v537
    %723 = vmatpush.bf16.msra.mxu0 %v535
    %724 = vmatpush.bf16.msra.mxu0 %v533
    %725 = vmatpush.bf16.msra.mxu0 %v531
    %726 = vmatpush.bf16.msra.mxu0 %v529
    %727 = vmatpush.bf16.msra.mxu0 %v527
    %728 = vmatpush.bf16.msra.mxu0 %v525
    %729 = vmatmul.bf16.gmra.mxu0 %v188
    %v730 = vpop.f32.mrf.mxu0
    %v731 = vadd.f32 %v717, %v730
    %v732 = vpop.f32.mrf.mxu0
    %v733 = vadd.f32 %v719, %v732
    %734 = vdwg.mxu0
    %735 = vmatpush.bf16.msra.mxu0 %v555
    %736 = vmatpush.bf16.msra.mxu0 %v553
    %737 = vmatpush.bf16.msra.mxu0 %v551
    %738 = vmatpush.bf16.msra.mxu0 %v549
    %739 = vmatpush.bf16.msra.mxu0 %v547
    %740 = vmatpush.bf16.msra.mxu0 %v545
    %741 = vmatpush.bf16.msra.mxu0 %v543
    %742 = vmatpush.bf16.msra.mxu0 %v541
    %743 = vmatmul.bf16.gmra.mxu0 %v189
    %v744 = vpop.f32.mrf.mxu0
    %v745 = vadd.f32 %v731, %v744
    %v746 = vpop.f32.mrf.mxu0
    %v747 = vadd.f32 %v733, %v746
    %748 = vdwg.mxu0
    %749 = vmatpush.bf16.msra.mxu0 %v571
    %750 = vmatpush.bf16.msra.mxu0 %v569
    %751 = vmatpush.bf16.msra.mxu0 %v567
    %752 = vmatpush.bf16.msra.mxu0 %v565
    %753 = vmatpush.bf16.msra.mxu0 %v563
    %754 = vmatpush.bf16.msra.mxu0 %v561
    %755 = vmatpush.bf16.msra.mxu0 %v559
    %756 = vmatpush.bf16.msra.mxu0 %v557
    %757 = vmatmul.bf16.gmra.mxu0 %v190
    %v758 = vpop.f32.mrf.mxu0
    %v759 = vadd.f32 %v745, %v758
    %v760 = vpop.f32.mrf.mxu0
    %v761 = vadd.f32 %v747, %v760
    %762 = vdwg.mxu0
    %763 = vmatpush.bf16.msra.mxu0 %v587
    %764 = vmatpush.bf16.msra.mxu0 %v585
    %765 = vmatpush.bf16.msra.mxu0 %v583
    %766 = vmatpush.bf16.msra.mxu0 %v581
    %767 = vmatpush.bf16.msra.mxu0 %v579
    %768 = vmatpush.bf16.msra.mxu0 %v577
    %769 = vmatpush.bf16.msra.mxu0 %v575
    %770 = vmatpush.bf16.msra.mxu0 %v573
    %771 = vmatmul.bf16.gmra.mxu0 %v191
    %v772 = vpop.f32.mrf.mxu0
    %v773 = vadd.f32 %v759, %v772
    %v774 = vpop.f32.mrf.mxu0
    %v775 = vadd.f32 %v761, %v774
    %776 = vdwg.mxu0
    %777 = vmatpush.bf16.msra.mxu0 0
    %778 = vmatpush.bf16.msra.mxu0 0
    %779 = vmatpush.bf16.msra.mxu0 0
    %780 = vmatpush.bf16.msra.mxu0 0
    %781 = vmatpush.bf16.msra.mxu0 0
    %782 = vmatpush.bf16.msra.mxu0 0
    %783 = vmatpush.bf16.msra.mxu0 0
    %784 = vmatpush.bf16.msra.mxu0 %v589
    %785 = vmatmul.bf16.gmra.mxu0 %v691
    %v786 = vpop.f32.mrf.mxu0
    %v787 = vadd.f32 %v773, %v786
    %v788 = vpop.f32.mrf.mxu0
    %v789 = vadd.f32 %v775, %v788
    %790 = vdwg.mxu0
    %791 = vmatpush.bf16.msra.mxu0 %v508
    %792 = vmatpush.bf16.msra.mxu0 %v506
    %793 = vmatpush.bf16.msra.mxu0 %v504
    %794 = vmatpush.bf16.msra.mxu0 %v502
    %795 = vmatpush.bf16.msra.mxu0 %v500
    %796 = vmatpush.bf16.msra.mxu0 %v498
    %797 = vmatpush.bf16.msra.mxu0 %v496
    %798 = vmatpush.bf16.msra.mxu0 %v494
    %799 = vmatmul.bf16.gmra.mxu0 %v186
    %v800 = vpop.f32.mrf.mxu0
    %v801 = vadd.f32 %v161, %v800
    %v802 = vpop.f32.mrf.mxu0
    %v803 = vadd.f32 %v161, %v802
    %804 = vdwg.mxu0
    %805 = vmatpush.bf16.msra.mxu0 %v524
    %806 = vmatpush.bf16.msra.mxu0 %v522
    %807 = vmatpush.bf16.msra.mxu0 %v520
    %808 = vmatpush.bf16.msra.mxu0 %v518
    %809 = vmatpush.bf16.msra.mxu0 %v516
    %810 = vmatpush.bf16.msra.mxu0 %v514
    %811 = vmatpush.bf16.msra.mxu0 %v512
    %812 = vmatpush.bf16.msra.mxu0 %v510
    %813 = vmatmul.bf16.gmra.mxu0 %v187
    %v814 = vpop.f32.mrf.mxu0
    %v815 = vadd.f32 %v801, %v814
    %v816 = vpop.f32.mrf.mxu0
    %v817 = vadd.f32 %v803, %v816
    %818 = vdwg.mxu0
    %819 = vmatpush.bf16.msra.mxu0 %v540
    %820 = vmatpush.bf16.msra.mxu0 %v538
    %821 = vmatpush.bf16.msra.mxu0 %v536
    %822 = vmatpush.bf16.msra.mxu0 %v534
    %823 = vmatpush.bf16.msra.mxu0 %v532
    %824 = vmatpush.bf16.msra.mxu0 %v530
    %825 = vmatpush.bf16.msra.mxu0 %v528
    %826 = vmatpush.bf16.msra.mxu0 %v526
    %827 = vmatmul.bf16.gmra.mxu0 %v188
    %v828 = vpop.f32.mrf.mxu0
    %v829 = vadd.f32 %v815, %v828
    %v830 = vpop.f32.mrf.mxu0
    %v831 = vadd.f32 %v817, %v830
    %832 = vdwg.mxu0
    %833 = vmatpush.bf16.msra.mxu0 %v556
    %834 = vmatpush.bf16.msra.mxu0 %v554
    %835 = vmatpush.bf16.msra.mxu0 %v552
    %836 = vmatpush.bf16.msra.mxu0 %v550
    %837 = vmatpush.bf16.msra.mxu0 %v548
    %838 = vmatpush.bf16.msra.mxu0 %v546
    %839 = vmatpush.bf16.msra.mxu0 %v544
    %840 = vmatpush.bf16.msra.mxu0 %v542
    %841 = vmatmul.bf16.gmra.mxu0 %v189
    %v842 = vpop.f32.mrf.mxu0
    %v843 = vadd.f32 %v829, %v842
    %v844 = vpop.f32.mrf.mxu0
    %v845 = vadd.f32 %v831, %v844
    %846 = vdwg.mxu0
    %847 = vmatpush.bf16.msra.mxu0 %v572
    %848 = vmatpush.bf16.msra.mxu0 %v570
    %849 = vmatpush.bf16.msra.mxu0 %v568
    %850 = vmatpush.bf16.msra.mxu0 %v566
    %851 = vmatpush.bf16.msra.mxu0 %v564
    %852 = vmatpush.bf16.msra.mxu0 %v562
    %853 = vmatpush.bf16.msra.mxu0 %v560
    %854 = vmatpush.bf16.msra.mxu0 %v558
    %855 = vmatmul.bf16.gmra.mxu0 %v190
    %v856 = vpop.f32.mrf.mxu0
    %v857 = vadd.f32 %v843, %v856
    %v858 = vpop.f32.mrf.mxu0
    %v859 = vadd.f32 %v845, %v858
    %860 = vdwg.mxu0
    %861 = vmatpush.bf16.msra.mxu0 %v588
    %862 = vmatpush.bf16.msra.mxu0 %v586
    %863 = vmatpush.bf16.msra.mxu0 %v584
    %864 = vmatpush.bf16.msra.mxu0 %v582
    %865 = vmatpush.bf16.msra.mxu0 %v580
    %866 = vmatpush.bf16.msra.mxu0 %v578
    %867 = vmatpush.bf16.msra.mxu0 %v576
    %868 = vmatpush.bf16.msra.mxu0 %v574
    %869 = vmatmul.bf16.gmra.mxu0 %v191
    %v870 = vpop.f32.mrf.mxu0
    %v871 = vadd.f32 %v857, %v870
    %v872 = vpop.f32.mrf.mxu0
    %v873 = vadd.f32 %v859, %v872
    %874 = vdwg.mxu0
    %875 = vmatpush.bf16.msra.mxu0 0
    %876 = vmatpush.bf16.msra.mxu0 0
    %877 = vmatpush.bf16.msra.mxu0 0
    %878 = vmatpush.bf16.msra.mxu0 0
    %879 = vmatpush.bf16.msra.mxu0 0
    %880 = vmatpush.bf16.msra.mxu0 0
    %881 = vmatpush.bf16.msra.mxu0 0
    %882 = vmatpush.bf16.msra.mxu0 %v590
    %883 = vmatmul.bf16.gmra.mxu0 %v691
    %v884 = vpop.f32.mrf.mxu0
    %v885 = vadd.f32 %v871, %v884
    %v886 = vpop.f32.mrf.mxu0
    %v887 = vadd.f32 %v873, %v886
    %888 = vdwg.mxu0
    %vm889 = vcmp.ge.f32.partialorder %v787, 0.0
    %vm890 = vcmp.ge.f32.partialorder %v885, 0.0
    %vm891 = vcmp.ge.f32.partialorder %v789, 0.0
    %vm892 = vcmp.ge.f32.partialorder %v887, 0.0
    %v893 = vmul.f32 %v787, 0.2
    %v894 = vmul.f32 %v885, 0.2
    %v895 = vmul.f32 %v789, 0.2
    %v896 = vmul.f32 %v887, 0.2
    %v897 = vsel %vm889, %v787, %v893
    %v898 = vsel %vm890, %v885, %v894
    %v899 = vsel %vm891, %v789, %v895
    %v900 = vsel %vm892, %v887, %v896
    %v901 = vpack.c.bf16 %v899, %v897
    %v902 = vpack.c.bf16 %v900, %v898
    %v903 = vld [vmem:[%s4] sm:$0xf]
    %v904 = vld [vmem:[%s4 + $0x4] sm:$0xf]
    %v905 = vld [vmem:[%s4 + $0x8] sm:$0xf]
    %v906 = vld [vmem:[%s4 + $0xc] sm:$0xf]
    %v907 = vld [vmem:[%s4 + $0x10] sm:$0xf]
    %v908 = vld [vmem:[%s4 + $0x14] sm:$0xf]
    %v909 = vld [vmem:[%s4 + $0x18] sm:$0xf]
    %v910 = vld [vmem:[%s4 + $0x1c] sm:$0xf]
    %v911 = vld [vmem:[%s4 + $0x20] sm:$0xf]
    %v912 = vld [vmem:[%s4 + $0x24] sm:$0xf]
    %v913 = vld [vmem:[%s4 + $0x28] sm:$0xf]
    %v914 = vld [vmem:[%s4 + $0x2c] sm:$0xf]
    %v915 = vld [vmem:[%s4 + $0x30] sm:$0xf]
    %v916 = vld [vmem:[%s4 + $0x34] sm:$0xf]
    %v917 = vld [vmem:[%s4 + $0x38] sm:$0xf]
    %v918 = vld [vmem:[%s4 + $0x3c] sm:$0xf]
    %v919 = vld [vmem:[%s4 + $0x40] sm:$0xf]
    %v920 = vld [vmem:[%s4 + $0x44] sm:$0xf]
    %v921 = vld [vmem:[%s4 + $0x48] sm:$0xf]
    %v922 = vld [vmem:[%s4 + $0x4c] sm:$0xf]
    %v923 = vld [vmem:[%s4 + $0x50] sm:$0xf]
    %v924 = vld [vmem:[%s4 + $0x54] sm:$0xf]
    %v925 = vld [vmem:[%s4 + $0x58] sm:$0xf]
    %v926 = vld [vmem:[%s4 + $0x5c] sm:$0xf]
    %v927 = vld [vmem:[%s4 + $0x60] sm:$0xf]
    %v928 = vld [vmem:[%s4 + $0x64] sm:$0xf]
    %v929 = vld [vmem:[%s4 + $0x68] sm:$0xf]
    %v930 = vld [vmem:[%s4 + $0x6c] sm:$0xf]
    %v931 = vld [vmem:[%s4 + $0x70] sm:$0xf]
    %v932 = vld [vmem:[%s4 + $0x74] sm:$0xf]
    %v933 = vld [vmem:[%s4 + $0x78] sm:$0xf]
    %v934 = vld [vmem:[%s4 + $0x7c] sm:$0xf]
    %v935 = vld [vmem:[%s5] sm:$0x1]
    %v937 = vperm.slane %v935, 0
    %v971 = vunpack.c.l.b16 %v903
    %v972 = vunpack.c.l.b16 %v904
    %v973 = vunpack.c.l.b16 %v905
    %v974 = vunpack.c.l.b16 %v906
    %v975 = vunpack.c.l.b16 %v907
    %v976 = vunpack.c.l.b16 %v908
    %v977 = vunpack.c.l.b16 %v909
    %v978 = vunpack.c.l.b16 %v910
    %v979 = vunpack.c.l.b16 %v911
    %v980 = vunpack.c.l.b16 %v912
    %v981 = vunpack.c.l.b16 %v913
    %v982 = vunpack.c.l.b16 %v914
    %v983 = vunpack.c.l.b16 %v915
    %v984 = vunpack.c.l.b16 %v916
    %v985 = vunpack.c.l.b16 %v917
    %v986 = vunpack.c.l.b16 %v918
    %v987 = vunpack.c.l.b16 %v919
    %v988 = vunpack.c.l.b16 %v920
    %v989 = vunpack.c.l.b16 %v921
    %v990 = vunpack.c.l.b16 %v922
    %v991 = vunpack.c.l.b16 %v923
    %v992 = vunpack.c.l.b16 %v924
    %v993 = vunpack.c.l.b16 %v925
    %v994 = vunpack.c.l.b16 %v926
    %v995 = vunpack.c.l.b16 %v927
    %v996 = vunpack.c.l.b16 %v928
    %v997 = vunpack.c.l.b16 %v929
    %v998 = vunpack.c.l.b16 %v930
    %v999 = vunpack.c.l.b16 %v931
    %v1000 = vunpack.c.l.b16 %v932
    %v1001 = vunpack.c.l.b16 %v933
    %v1002 = vunpack.c.l.b16 %v934
    %v1003 = vpack.c.b16 %v972, %v971
    %v1004 = vpack.c.b16 %v974, %v973
    %v1005 = vpack.c.b16 %v976, %v975
    %v1006 = vpack.c.b16 %v978, %v977
    %v1007 = vpack.c.b16 %v980, %v979
    %v1008 = vpack.c.b16 %v982, %v981
    %v1009 = vpack.c.b16 %v984, %v983
    %v1010 = vpack.c.b16 %v986, %v985
    %v1011 = vpack.c.b16 %v988, %v987
    %v1012 = vpack.c.b16 %v990, %v989
    %v1013 = vpack.c.b16 %v992, %v991
    %v1014 = vpack.c.b16 %v994, %v993
    %v1015 = vpack.c.b16 %v996, %v995
    %v1016 = vpack.c.b16 %v998, %v997
    %v1017 = vpack.c.b16 %v1000, %v999
    %v1018 = vpack.c.b16 %v1002, %v1001
    %1035 = vmatpush.bf16.msra.mxu0 %v1010
    %1036 = vmatpush.bf16.msra.mxu0 %v1009
    %1037 = vmatpush.bf16.msra.mxu0 %v1008
    %1038 = vmatpush.bf16.msra.mxu0 %v1007
    %1039 = vmatpush.bf16.msra.mxu0 %v1006
    %1040 = vmatpush.bf16.msra.mxu0 %v1005
    %1041 = vmatpush.bf16.msra.mxu0 %v1004
    %1042 = vmatpush.bf16.msra.mxu0 %v1003
    %1043 = vmatmul.bf16.gmra.mxu0 %v901
    %v1044 = vpop.f32.mrf.mxu0
    %v1045 = vadd.f32 %v937, %v1044
    %v1046 = vpop.f32.mrf.mxu0
    %v1047 = vadd.f32 %v937, %v1046
    %1048 = vdwg.mxu0
    %1049 = vmatpush.bf16.msra.mxu0 %v1018
    %1050 = vmatpush.bf16.msra.mxu0 %v1017
    %1051 = vmatpush.bf16.msra.mxu0 %v1016
    %1052 = vmatpush.bf16.msra.mxu0 %v1015
    %1053 = vmatpush.bf16.msra.mxu0 %v1014
    %1054 = vmatpush.bf16.msra.mxu0 %v1013
    %1055 = vmatpush.bf16.msra.mxu0 %v1012
    %1056 = vmatpush.bf16.msra.mxu0 %v1011
    %1057 = vmatmul.bf16.gmra.mxu0 %v902
    %v1058 = vpop.f32.mrf.mxu0
    %v1059 = vadd.f32 %v1045, %v1058
    %v1060 = vpop.f32.mrf.mxu0
    %v1061 = vadd.f32 %v1047, %v1060
    %1062 = vdwg.mxu0
    %vm1063 = vcmp.ge.f32.partialorder %v1059, 0.0
    %vm1064 = vcmp.ge.f32.partialorder %v1061, 0.0
    %v1065 = vmul.f32 %v1059, 0.2
    %v1066 = vmul.f32 %v1061, 0.2
    %v1067 = vsel %vm1063, %v1059, %v1065
    %v1068 = vsel %vm1064, %v1061, %v1066
    %v1069 = vpack.c.bf16 %v1068, %v1067
    %v1070 = vld [vmem:[%s6] sm:$0xf]
    %v1071 = vld [vmem:[%s6 + $0x4] sm:$0xf]
    %v1072 = vld [vmem:[%s6 + $0x8] sm:$0xf]
    %v1073 = vld [vmem:[%s6 + $0xc] sm:$0xf]
    %v1074 = vld [vmem:[%s6 + $0x10] sm:$0xf]
    %v1075 = vld [vmem:[%s6 + $0x14] sm:$0xf]
    %v1076 = vld [vmem:[%s6 + $0x18] sm:$0xf]
    %v1077 = vld [vmem:[%s6 + $0x1c] sm:$0xf]
    %v1078 = vld [vmem:[%s7] sm:$0x1]
    %v1080 = vperm.slane %v1078, 0
    %v1090 = vunpack.c.l.b16 %v1070
    %v1091 = vunpack.c.l.b16 %v1071
    %v1092 = vunpack.c.l.b16 %v1072
    %v1093 = vunpack.c.l.b16 %v1073
    %v1094 = vunpack.c.l.b16 %v1074
    %v1095 = vunpack.c.l.b16 %v1075
    %v1096 = vunpack.c.l.b16 %v1076
    %v1097 = vunpack.c.l.b16 %v1077
    %v1098 = vpack.c.b16 %v1091, %v1090
    %v1099 = vpack.c.b16 %v1093, %v1092
    %v1100 = vpack.c.b16 %v1095, %v1094
    %v1101 = vpack.c.b16 %v1097, %v1096
    %vm1106 = vcmask 523264
    %v1108 = vsel %vm1106, %v1069, 0
    %1110 = vmatpush.bf16.msra.mxu0 0
    %1111 = vmatpush.bf16.msra.mxu0 0
    %1112 = vmatpush.bf16.msra.mxu0 0
    %1113 = vmatpush.bf16.msra.mxu0 0
    %1114 = vmatpush.bf16.msra.mxu0 %v1101
    %1115 = vmatpush.bf16.msra.mxu0 %v1100
    %1116 = vmatpush.bf16.msra.mxu0 %v1099
    %1117 = vmatpush.bf16.msra.mxu0 %v1098
    %1118 = vmatmul.bf16.gmra.mxu0 %v1108
    %v1119 = vpop.f32.mrf.mxu0
    %v1120 = vadd.f32 %v1080, %v1119
    %v1121 = vpop.f32.mrf.mxu0
    %v1122 = vadd.f32 %v1080, %v1121
    %1123 = vdwg.mxu0
    %v1124 = vmul.f32 %v1120, 0.5
    %v1125 = vmul.f32 %v1122, 0.5
    %v1126 = vmul.f32 %v1124, 1.442695
    %v1127 = vpow.pop %v1126
    %v1128 = vmul.f32 %v1125, 1.442695
    %v1129 = vpow.pop %v1128
    %v1130 = vld [vmem:[%s1] sm:$0xff]
    %v1131 = vld [vmem:[%s1 + $0x8] sm:$0xff]
    %1134 = vrot.lane.b32.xlu0 %v1127, 112
    %v1135 = vpop.permute.xlu0 %1134
    %1136 = vrot.lane.b32.xlu0 %v1129, 112
    %v1137 = vpop.permute.xlu0 %1136
    %v1140 = vmul.f32 %v1130, %v1135
    %v1141 = vmul.f32 %v1131, %v1137
    %v1142 = vadd.f32 %v1120, %v1140
    %v1143 = vadd.f32 %v1122, %v1141
    %v1144 = vpack.c.bf16 %v1143, %v1142
    %v1145 = vld [vmem:[%s8] sm:$0xf]
    %v1146 = vld [vmem:[%s8 + $0x4] sm:$0xf]
    %v1147 = vld [vmem:[%s9] sm:$0x1]
    %v1149 = vperm.slane %v1147, 0
    %v1153 = vunpack.c.l.b16 %v1145
    %v1154 = vunpack.c.l.b16 %v1146
    %v1155 = vpack.c.b16 %v1154, %v1153
    %v1158 = vsel %vm689, %v1144, 0
    %1160 = vmatpush.bf16.msra.mxu0 0
    %1161 = vmatpush.bf16.msra.mxu0 0
    %1162 = vmatpush.bf16.msra.mxu0 0
    %1163 = vmatpush.bf16.msra.mxu0 0
    %1164 = vmatpush.bf16.msra.mxu0 0
    %1165 = vmatpush.bf16.msra.mxu0 0
    %1166 = vmatpush.bf16.msra.mxu0 0
    %1167 = vmatpush.bf16.msra.mxu0 %v1155
    %1168 = vmatmul.bf16.gmra.mxu0 %v1158
    %v1169 = vpop.f32.mrf.mxu0
    %v1170 = vadd.f32 %v1149, %v1169
    %v1171 = vpop.f32.mrf.mxu0
    %v1172 = vadd.f32 %v1149, %v1171
    %1173 = vdwg.mxu0
    %vm1174 = vcmp.ge.f32.partialorder %v1170, 0.0
    %vm1175 = vcmp.ge.f32.partialorder %v1172, 0.0
    %v1176 = vmul.f32 %v1170, 0.2
    %v1177 = vmul.f32 %v1172, 0.2
    %v1178 = vsel %vm1174, %v1170, %v1176
    %v1179 = vsel %vm1175, %v1172, %v1177
    %v1180 = vpack.c.bf16 %v1179, %v1178
    %v1181 = vld [vmem:[%s10] sm:$0xff]
    %v1182 = vld [vmem:[%s10 + $0x8] sm:$0xff]
    %v1183 = vld [vmem:[%s10 + $0x10] sm:$0xff]
    %v1184 = vld [vmem:[%s10 + $0x18] sm:$0xff]
    %v1185 = vld [vmem:[%s10 + $0x20] sm:$0xff]
    %v1186 = vld [vmem:[%s10 + $0x28] sm:$0xff]
    %v1187 = vld [vmem:[%s10 + $0x30] sm:$0xff]
    %v1188 = vld [vmem:[%s10 + $0x38] sm:$0xff]
    %v1189 = vld [vmem:[%s11] sm:$0x3]
    %v1191 = vperm.slane %v1189, 0
    %v1192 = vperm.slane %v1189, 1
    %v1203 = vunpack.c.l.b16 %v1181
    %v1204 = vunpack.c.h.b16 %v1181
    %v1205 = vunpack.c.l.b16 %v1182
    %v1206 = vunpack.c.h.b16 %v1182
    %v1207 = vunpack.c.l.b16 %v1183
    %v1208 = vunpack.c.h.b16 %v1183
    %v1209 = vunpack.c.l.b16 %v1184
    %v1210 = vunpack.c.h.b16 %v1184
    %v1211 = vunpack.c.l.b16 %v1185
    %v1212 = vunpack.c.h.b16 %v1185
    %v1213 = vunpack.c.l.b16 %v1186
    %v1214 = vunpack.c.h.b16 %v1186
    %v1215 = vunpack.c.l.b16 %v1187
    %v1216 = vunpack.c.h.b16 %v1187
    %v1217 = vunpack.c.l.b16 %v1188
    %v1218 = vunpack.c.h.b16 %v1188
    %v1219 = vpack.c.b16 %v1205, %v1203
    %v1220 = vpack.c.b16 %v1206, %v1204
    %v1221 = vpack.c.b16 %v1209, %v1207
    %v1222 = vpack.c.b16 %v1210, %v1208
    %v1223 = vpack.c.b16 %v1213, %v1211
    %v1224 = vpack.c.b16 %v1214, %v1212
    %v1225 = vpack.c.b16 %v1217, %v1215
    %v1226 = vpack.c.b16 %v1218, %v1216
    %v1236 = vsel %vm1106, %v1180, 0
    %1238 = vmatpush.bf16.msra.mxu0 0
    %1239 = vmatpush.bf16.msra.mxu0 0
    %1240 = vmatpush.bf16.msra.mxu0 0
    %1241 = vmatpush.bf16.msra.mxu0 0
    %1242 = vmatpush.bf16.msra.mxu0 %v1225
    %1243 = vmatpush.bf16.msra.mxu0 %v1223
    %1244 = vmatpush.bf16.msra.mxu0 %v1221
    %1245 = vmatpush.bf16.msra.mxu0 %v1219
    %1246 = vmatmul.bf16.gmra.mxu0 %v1236
    %v1247 = vpop.f32.mrf.mxu0
    %v1248 = vadd.f32 %v1191, %v1247
    %v1249 = vpop.f32.mrf.mxu0
    %v1250 = vadd.f32 %v1191, %v1249
    %1251 = vdwg.mxu0
    %1252 = vmatpush.bf16.msra.mxu0 0
    %1253 = vmatpush.bf16.msra.mxu0 0
    %1254 = vmatpush.bf16.msra.mxu0 0
    %1255 = vmatpush.bf16.msra.mxu0 0
    %1256 = vmatpush.bf16.msra.mxu0 %v1226
    %1257 = vmatpush.bf16.msra.mxu0 %v1224
    %1258 = vmatpush.bf16.msra.mxu0 %v1222
    %1259 = vmatpush.bf16.msra.mxu0 %v1220
    %1260 = vmatmul.bf16.gmra.mxu0 %v1236
    %v1261 = vpop.f32.mrf.mxu0
    %v1262 = vadd.f32 %v1192, %v1261
    %v1263 = vpop.f32.mrf.mxu0
    %v1264 = vadd.f32 %v1192, %v1263
    %1265 = vdwg.mxu0
    %vm1266 = vcmp.ge.f32.partialorder %v1248, 0.0
    %vm1267 = vcmp.ge.f32.partialorder %v1262, 0.0
    %vm1268 = vcmp.ge.f32.partialorder %v1250, 0.0
    %vm1269 = vcmp.ge.f32.partialorder %v1264, 0.0
    %v1270 = vmul.f32 %v1248, 0.2
    %v1271 = vmul.f32 %v1262, 0.2
    %v1272 = vmul.f32 %v1250, 0.2
    %v1273 = vmul.f32 %v1264, 0.2
    %v1274 = vsel %vm1266, %v1248, %v1270
    %v1275 = vsel %vm1267, %v1262, %v1271
    %v1276 = vsel %vm1268, %v1250, %v1272
    %v1277 = vsel %vm1269, %v1264, %v1273
    %v1278 = vpack.c.bf16 %v1276, %v1274
    %v1279 = vpack.c.bf16 %v1277, %v1275
    %v1280 = vld [vmem:[%s12] sm:$0xff]
    %v1281 = vld [vmem:[%s12 + $0x8] sm:$0xff]
    %v1282 = vld [vmem:[%s12 + $0x10] sm:$0xff]
    %v1283 = vld [vmem:[%s12 + $0x18] sm:$0xf]
    %v1284 = vld [vmem:[%s12 + $0x1c] sm:$0xff]
    %v1285 = vld [vmem:[%s12 + $0x24] sm:$0xff]
    %v1286 = vld [vmem:[%s12 + $0x2c] sm:$0xff]
    %v1287 = vld [vmem:[%s12 + $0x34] sm:$0xf]
    %v1288 = vld [vmem:[%s12 + $0x38] sm:$0xff]
    %v1289 = vld [vmem:[%s12 + $0x40] sm:$0xff]
    %v1290 = vld [vmem:[%s12 + $0x48] sm:$0xff]
    %v1291 = vld [vmem:[%s12 + $0x50] sm:$0xf]
    %v1292 = vld [vmem:[%s12 + $0x54] sm:$0xff]
    %v1293 = vld [vmem:[%s12 + $0x5c] sm:$0xff]
    %v1294 = vld [vmem:[%s12 + $0x64] sm:$0xff]
    %v1295 = vld [vmem:[%s12 + $0x6c] sm:$0xf]
    %v1296 = vld [vmem:[%s12 + $0x70] sm:$0xff]
    %v1297 = vld [vmem:[%s12 + $0x78] sm:$0xff]
    %v1298 = vld [vmem:[%s12 + $0x80] sm:$0xff]
    %v1299 = vld [vmem:[%s12 + $0x88] sm:$0xf]
    %v1300 = vld [vmem:[%s12 + $0x8c] sm:$0xff]
    %v1301 = vld [vmem:[%s12 + $0x94] sm:$0xff]
    %v1302 = vld [vmem:[%s12 + $0x9c] sm:$0xff]
    %v1303 = vld [vmem:[%s12 + $0xa4] sm:$0xf]
    %v1304 = vld [vmem:[%s12 + $0xa8] sm:$0xff]
    %v1305 = vld [vmem:[%s12 + $0xb0] sm:$0xff]
    %v1306 = vld [vmem:[%s12 + $0xb8] sm:$0xff]
    %v1307 = vld [vmem:[%s12 + $0xc0] sm:$0xf]
    %v1308 = vld [vmem:[%s12 + $0xc4] sm:$0xff]
    %v1309 = vld [vmem:[%s12 + $0xcc] sm:$0xff]
    %v1310 = vld [vmem:[%s12 + $0xd4] sm:$0xff]
    %v1311 = vld [vmem:[%s12 + $0xdc] sm:$0xf]
    %v1312 = vld [vmem:[%s12 + $0xe0] sm:$0xff]
    %v1313 = vld [vmem:[%s12 + $0xe8] sm:$0xff]
    %v1314 = vld [vmem:[%s12 + $0xf0] sm:$0xff]
    %v1315 = vld [vmem:[%s12 + $0xf8] sm:$0xf]
    %v1316 = vld [vmem:[%s12 + $0xfc] sm:$0xff]
    %v1317 = vld [vmem:[%s12 + $0x104] sm:$0xff]
    %v1318 = vld [vmem:[%s12 + $0x10c] sm:$0xff]
    %v1319 = vld [vmem:[%s12 + $0x114] sm:$0xf]
    %v1320 = vld [vmem:[%s12 + $0x118] sm:$0xff]
    %v1321 = vld [vmem:[%s12 + $0x120] sm:$0xff]
    %v1322 = vld [vmem:[%s12 + $0x128] sm:$0xff]
    %v1323 = vld [vmem:[%s12 + $0x130] sm:$0xf]
    %v1324 = vld [vmem:[%s12 + $0x134] sm:$0xff]
    %v1325 = vld [vmem:[%s12 + $0x13c] sm:$0xff]
    %v1326 = vld [vmem:[%s12 + $0x144] sm:$0xff]
    %v1327 = vld [vmem:[%s12 + $0x14c] sm:$0xf]
    %v1328 = vld [vmem:[%s12 + $0x150] sm:$0xff]
    %v1329 = vld [vmem:[%s12 + $0x158] sm:$0xff]
    %v1330 = vld [vmem:[%s12 + $0x160] sm:$0xff]
    %v1331 = vld [vmem:[%s12 + $0x168] sm:$0xf]
    %v1332 = vld [vmem:[%s12 + $0x16c] sm:$0xff]
    %v1333 = vld [vmem:[%s12 + $0x174] sm:$0xff]
    %v1334 = vld [vmem:[%s12 + $0x17c] sm:$0xff]
    %v1335 = vld [vmem:[%s12 + $0x184] sm:$0xf]
    %v1336 = vld [vmem:[%s12 + $0x188] sm:$0xff]
    %v1337 = vld [vmem:[%s12 + $0x190] sm:$0xff]
    %v1338 = vld [vmem:[%s12 + $0x198] sm:$0xff]
    %v1339 = vld [vmem:[%s12 + $0x1a0] sm:$0xf]
    %v1340 = vld [vmem:[%s12 + $0x1a4] sm:$0xff]
    %v1341 = vld [vmem:[%s12 + $0x1ac] sm:$0xff]
    %v1342 = vld [vmem:[%s12 + $0x1b4] sm:$0xff]
    %v1343 = vld [vmem:[%s12 + $0x1bc] sm:$0xf]
    %v1344 = vld [vmem:[%s12 + $0x1c0] sm:$0xff]
    %v1345 = vld [vmem:[%s12 + $0x1c8] sm:$0xff]
    %v1346 = vld [vmem:[%s12 + $0x1d0] sm:$0xff]
    %v1347 = vld [vmem:[%s12 + $0x1d8] sm:$0xf]
    %v1348 = vld [vmem:[%s12 + $0x1dc] sm:$0xff]
    %v1349 = vld [vmem:[%s12 + $0x1e4] sm:$0xff]
    %v1350 = vld [vmem:[%s12 + $0x1ec] sm:$0xff]
    %v1351 = vld [vmem:[%s12 + $0x1f4] sm:$0xf]
    %v1352 = vld [vmem:[%s12 + $0x1f8] sm:$0xff]
    %v1353 = vld [vmem:[%s12 + $0x200] sm:$0xff]
    %v1354 = vld [vmem:[%s12 + $0x208] sm:$0xff]
    %v1355 = vld [vmem:[%s12 + $0x210] sm:$0xf]
    %v1356 = vld [vmem:[%s12 + $0x214] sm:$0xff]
    %v1357 = vld [vmem:[%s12 + $0x21c] sm:$0xff]
    %v1358 = vld [vmem:[%s12 + $0x224] sm:$0xff]
    %v1359 = vld [vmem:[%s12 + $0x22c] sm:$0xf]
    %v1360 = vld [vmem:[%s12 + $0x230] sm:$0xff]
    %v1361 = vld [vmem:[%s12 + $0x238] sm:$0xff]
    %v1362 = vld [vmem:[%s12 + $0x240] sm:$0xff]
    %v1363 = vld [vmem:[%s12 + $0x248] sm:$0xf]
    %v1364 = vld [vmem:[%s12 + $0x24c] sm:$0xff]
    %v1365 = vld [vmem:[%s12 + $0x254] sm:$0xff]
    %v1366 = vld [vmem:[%s12 + $0x25c] sm:$0xff]
    %v1367 = vld [vmem:[%s12 + $0x264] sm:$0xf]
    %v1368 = vld [vmem:[%s12 + $0x268] sm:$0xff]
    %v1369 = vld [vmem:[%s12 + $0x270] sm:$0xff]
    %v1370 = vld [vmem:[%s12 + $0x278] sm:$0xff]
    %v1371 = vld [vmem:[%s12 + $0x280] sm:$0xf]
    %v1372 = vld [vmem:[%s12 + $0x284] sm:$0xff]
    %v1373 = vld [vmem:[%s12 + $0x28c] sm:$0xff]
    %v1374 = vld [vmem:[%s12 + $0x294] sm:$0xff]
    %v1375 = vld [vmem:[%s12 + $0x29c] sm:$0xf]
    %v1376 = vld [vmem:[%s12 + $0x2a0] sm:$0xff]
    %v1377 = vld [vmem:[%s12 + $0x2a8] sm:$0xff]
    %v1378 = vld [vmem:[%s12 + $0x2b0] sm:$0xff]
    %v1379 = vld [vmem:[%s12 + $0x2b8] sm:$0xf]
    %v1380 = vld [vmem:[%s12 + $0x2bc] sm:$0xff]
    %v1381 = vld [vmem:[%s12 + $0x2c4] sm:$0xff]
    %v1382 = vld [vmem:[%s12 + $0x2cc] sm:$0xff]
    %v1383 = vld [vmem:[%s12 + $0x2d4] sm:$0xf]
    %v1384 = vld [vmem:[%s12 + $0x2d8] sm:$0xff]
    %v1385 = vld [vmem:[%s12 + $0x2e0] sm:$0xff]
    %v1386 = vld [vmem:[%s12 + $0x2e8] sm:$0xff]
    %v1387 = vld [vmem:[%s12 + $0x2f0] sm:$0xf]
    %v1388 = vld [vmem:[%s12 + $0x2f4] sm:$0xff]
    %v1389 = vld [vmem:[%s12 + $0x2fc] sm:$0xff]
    %v1390 = vld [vmem:[%s12 + $0x304] sm:$0xff]
    %v1391 = vld [vmem:[%s12 + $0x30c] sm:$0xf]
    %v1392 = vld [vmem:[%s12 + $0x310] sm:$0xff]
    %v1393 = vld [vmem:[%s12 + $0x318] sm:$0xff]
    %v1394 = vld [vmem:[%s12 + $0x320] sm:$0xff]
    %v1395 = vld [vmem:[%s12 + $0x328] sm:$0xf]
    %v1396 = vld [vmem:[%s12 + $0x32c] sm:$0xff]
    %v1397 = vld [vmem:[%s12 + $0x334] sm:$0xff]
    %v1398 = vld [vmem:[%s12 + $0x33c] sm:$0xff]
    %v1399 = vld [vmem:[%s12 + $0x344] sm:$0xf]
    %v1400 = vld [vmem:[%s12 + $0x348] sm:$0xff]
    %v1401 = vld [vmem:[%s12 + $0x350] sm:$0xff]
    %v1402 = vld [vmem:[%s12 + $0x358] sm:$0xff]
    %v1403 = vld [vmem:[%s12 + $0x360] sm:$0xf]
    %v1404 = vld [vmem:[%s12 + $0x364] sm:$0xff]
    %v1405 = vld [vmem:[%s12 + $0x36c] sm:$0xff]
    %v1406 = vld [vmem:[%s12 + $0x374] sm:$0xff]
    %v1407 = vld [vmem:[%s12 + $0x37c] sm:$0xf]
    %v1408 = vld [vmem:[%s13] sm:$0x7f]
    %v1410 = vperm.slane %v1408, 0
    %v1411 = vperm.slane %v1408, 1
    %v1412 = vperm.slane %v1408, 2
    %v1413 = vperm.slane %v1408, 3
    %v1414 = vperm.slane %v1408, 4
    %v1415 = vperm.slane %v1408, 5
    %v1416 = vperm.slane %v1408, 6
    %v1552 = vunpack.c.l.b16 %v1280
    %v1553 = vunpack.c.h.b16 %v1280
    %v1554 = vunpack.c.l.b16 %v1281
    %v1555 = vunpack.c.h.b16 %v1281
    %v1556 = vunpack.c.l.b16 %v1282
    %v1557 = vunpack.c.h.b16 %v1282
    %v1558 = vunpack.c.l.b16 %v1283
    %v1559 = vunpack.c.l.b16 %v1284
    %v1560 = vunpack.c.h.b16 %v1284
    %v1561 = vunpack.c.l.b16 %v1285
    %v1562 = vunpack.c.h.b16 %v1285
    %v1563 = vunpack.c.l.b16 %v1286
    %v1564 = vunpack.c.h.b16 %v1286
    %v1565 = vunpack.c.l.b16 %v1287
    %v1566 = vunpack.c.l.b16 %v1288
    %v1567 = vunpack.c.h.b16 %v1288
    %v1568 = vunpack.c.l.b16 %v1289
    %v1569 = vunpack.c.h.b16 %v1289
    %v1570 = vunpack.c.l.b16 %v1290
    %v1571 = vunpack.c.h.b16 %v1290
    %v1572 = vunpack.c.l.b16 %v1291
    %v1573 = vunpack.c.l.b16 %v1292
    %v1574 = vunpack.c.h.b16 %v1292
    %v1575 = vunpack.c.l.b16 %v1293
    %v1576 = vunpack.c.h.b16 %v1293
    %v1577 = vunpack.c.l.b16 %v1294
    %v1578 = vunpack.c.h.b16 %v1294
    %v1579 = vunpack.c.l.b16 %v1295
    %v1580 = vunpack.c.l.b16 %v1296
    %v1581 = vunpack.c.h.b16 %v1296
    %v1582 = vunpack.c.l.b16 %v1297
    %v1583 = vunpack.c.h.b16 %v1297
    %v1584 = vunpack.c.l.b16 %v1298
    %v1585 = vunpack.c.h.b16 %v1298
    %v1586 = vunpack.c.l.b16 %v1299
    %v1587 = vunpack.c.l.b16 %v1300
    %v1588 = vunpack.c.h.b16 %v1300
    %v1589 = vunpack.c.l.b16 %v1301
    %v1590 = vunpack.c.h.b16 %v1301
    %v1591 = vunpack.c.l.b16 %v1302
    %v1592 = vunpack.c.h.b16 %v1302
    %v1593 = vunpack.c.l.b16 %v1303
    %v1594 = vunpack.c.l.b16 %v1304
    %v1595 = vunpack.c.h.b16 %v1304
    %v1596 = vunpack.c.l.b16 %v1305
    %v1597 = vunpack.c.h.b16 %v1305
    %v1598 = vunpack.c.l.b16 %v1306
    %v1599 = vunpack.c.h.b16 %v1306
    %v1600 = vunpack.c.l.b16 %v1307
    %v1601 = vunpack.c.l.b16 %v1308
    %v1602 = vunpack.c.h.b16 %v1308
    %v1603 = vunpack.c.l.b16 %v1309
    %v1604 = vunpack.c.h.b16 %v1309
    %v1605 = vunpack.c.l.b16 %v1310
    %v1606 = vunpack.c.h.b16 %v1310
    %v1607 = vunpack.c.l.b16 %v1311
    %v1608 = vunpack.c.l.b16 %v1312
    %v1609 = vunpack.c.h.b16 %v1312
    %v1610 = vunpack.c.l.b16 %v1313
    %v1611 = vunpack.c.h.b16 %v1313
    %v1612 = vunpack.c.l.b16 %v1314
    %v1613 = vunpack.c.h.b16 %v1314
    %v1614 = vunpack.c.l.b16 %v1315
    %v1615 = vunpack.c.l.b16 %v1316
    %v1616 = vunpack.c.h.b16 %v1316
    %v1617 = vunpack.c.l.b16 %v1317
    %v1618 = vunpack.c.h.b16 %v1317
    %v1619 = vunpack.c.l.b16 %v1318
    %v1620 = vunpack.c.h.b16 %v1318
    %v1621 = vunpack.c.l.b16 %v1319
    %v1622 = vunpack.c.l.b16 %v1320
    %v1623 = vunpack.c.h.b16 %v1320
    %v1624 = vunpack.c.l.b16 %v1321
    %v1625 = vunpack.c.h.b16 %v1321
    %v1626 = vunpack.c.l.b16 %v1322
    %v1627 = vunpack.c.h.b16 %v1322
    %v1628 = vunpack.c.l.b16 %v1323
    %v1629 = vunpack.c.l.b16 %v1324
    %v1630 = vunpack.c.h.b16 %v1324
    %v1631 = vunpack.c.l.b16 %v1325
    %v1632 = vunpack.c.h.b16 %v1325
    %v1633 = vunpack.c.l.b16 %v1326
    %v1634 = vunpack.c.h.b16 %v1326
    %v1635 = vunpack.c.l.b16 %v1327
    %v1636 = vunpack.c.l.b16 %v1328
    %v1637 = vunpack.c.h.b16 %v1328
    %v1638 = vunpack.c.l.b16 %v1329
    %v1639 = vunpack.c.h.b16 %v1329
    %v1640 = vunpack.c.l.b16 %v1330
    %v1641 = vunpack.c.h.b16 %v1330
    %v1642 = vunpack.c.l.b16 %v1331
    %v1643 = vunpack.c.l.b16 %v1332
    %v1644 = vunpack.c.h.b16 %v1332
    %v1645 = vunpack.c.l.b16 %v1333
    %v1646 = vunpack.c.h.b16 %v1333
    %v1647 = vunpack.c.l.b16 %v1334
    %v1648 = vunpack.c.h.b16 %v1334
    %v1649 = vunpack.c.l.b16 %v1335
    %v1650 = vunpack.c.l.b16 %v1336
    %v1651 = vunpack.c.h.b16 %v1336
    %v1652 = vunpack.c.l.b16 %v1337
    %v1653 = vunpack.c.h.b16 %v1337
    %v1654 = vunpack.c.l.b16 %v1338
    %v1655 = vunpack.c.h.b16 %v1338
    %v1656 = vunpack.c.l.b16 %v1339
    %v1657 = vunpack.c.l.b16 %v1340
    %v1658 = vunpack.c.h.b16 %v1340
    %v1659 = vunpack.c.l.b16 %v1341
    %v1660 = vunpack.c.h.b16 %v1341
    %v1661 = vunpack.c.l.b16 %v1342
    %v1662 = vunpack.c.h.b16 %v1342
    %v1663 = vunpack.c.l.b16 %v1343
    %v1664 = vunpack.c.l.b16 %v1344
    %v1665 = vunpack.c.h.b16 %v1344
    %v1666 = vunpack.c.l.b16 %v1345
    %v1667 = vunpack.c.h.b16 %v1345
    %v1668 = vunpack.c.l.b16 %v1346
    %v1669 = vunpack.c.h.b16 %v1346
    %v1670 = vunpack.c.l.b16 %v1347
    %v1671 = vunpack.c.l.b16 %v1348
    %v1672 = vunpack.c.h.b16 %v1348
    %v1673 = vunpack.c.l.b16 %v1349
    %v1674 = vunpack.c.h.b16 %v1349
    %v1675 = vunpack.c.l.b16 %v1350
    %v1676 = vunpack.c.h.b16 %v1350
    %v1677 = vunpack.c.l.b16 %v1351
    %v1678 = vunpack.c.l.b16 %v1352
    %v1679 = vunpack.c.h.b16 %v1352
    %v1680 = vunpack.c.l.b16 %v1353
    %v1681 = vunpack.c.h.b16 %v1353
    %v1682 = vunpack.c.l.b16 %v1354
    %v1683 = vunpack.c.h.b16 %v1354
    %v1684 = vunpack.c.l.b16 %v1355
    %v1685 = vunpack.c.l.b16 %v1356
    %v1686 = vunpack.c.h.b16 %v1356
    %v1687 = vunpack.c.l.b16 %v1357
    %v1688 = vunpack.c.h.b16 %v1357
    %v1689 = vunpack.c.l.b16 %v1358
    %v1690 = vunpack.c.h.b16 %v1358
    %v1691 = vunpack.c.l.b16 %v1359
    %v1692 = vunpack.c.l.b16 %v1360
    %v1693 = vunpack.c.h.b16 %v1360
    %v1694 = vunpack.c.l.b16 %v1361
    %v1695 = vunpack.c.h.b16 %v1361
    %v1696 = vunpack.c.l.b16 %v1362
    %v1697 = vunpack.c.h.b16 %v1362
    %v1698 = vunpack.c.l.b16 %v1363
    %v1699 = vunpack.c.l.b16 %v1364
    %v1700 = vunpack.c.h.b16 %v1364
    %v1701 = vunpack.c.l.b16 %v1365
    %v1702 = vunpack.c.h.b16 %v1365
    %v1703 = vunpack.c.l.b16 %v1366
    %v1704 = vunpack.c.h.b16 %v1366
    %v1705 = vunpack.c.l.b16 %v1367
    %v1706 = vunpack.c.l.b16 %v1368
    %v1707 = vunpack.c.h.b16 %v1368
    %v1708 = vunpack.c.l.b16 %v1369
    %v1709 = vunpack.c.h.b16 %v1369
    %v1710 = vunpack.c.l.b16 %v1370
    %v1711 = vunpack.c.h.b16 %v1370
    %v1712 = vunpack.c.l.b16 %v1371
    %v1713 = vunpack.c.l.b16 %v1372
    %v1714 = vunpack.c.h.b16 %v1372
    %v1715 = vunpack.c.l.b16 %v1373
    %v1716 = vunpack.c.h.b16 %v1373
    %v1717 = vunpack.c.l.b16 %v1374
    %v1718 = vunpack.c.h.b16 %v1374
    %v1719 = vunpack.c.l.b16 %v1375
    %v1720 = vunpack.c.l.b16 %v1376
    %v1721 = vunpack.c.h.b16 %v1376
    %v1722 = vunpack.c.l.b16 %v1377
    %v1723 = vunpack.c.h.b16 %v1377
    %v1724 = vunpack.c.l.b16 %v1378
    %v1725 = vunpack.c.h.b16 %v1378
    %v1726 = vunpack.c.l.b16 %v1379
    %v1727 = vunpack.c.l.b16 %v1380
    %v1728 = vunpack.c.h.b16 %v1380
    %v1729 = vunpack.c.l.b16 %v1381
    %v1730 = vunpack.c.h.b16 %v1381
    %v1731 = vunpack.c.l.b16 %v1382
    %v1732 = vunpack.c.h.b16 %v1382
    %v1733 = vunpack.c.l.b16 %v1383
    %v1734 = vunpack.c.l.b16 %v1384
    %v1735 = vunpack.c.h.b16 %v1384
    %v1736 = vunpack.c.l.b16 %v1385
    %v1737 = vunpack.c.h.b16 %v1385
    %v1738 = vunpack.c.l.b16 %v1386
    %v1739 = vunpack.c.h.b16 %v1386
    %v1740 = vunpack.c.l.b16 %v1387
    %v1741 = vunpack.c.l.b16 %v1388
    %v1742 = vunpack.c.h.b16 %v1388
    %v1743 = vunpack.c.l.b16 %v1389
    %v1744 = vunpack.c.h.b16 %v1389
    %v1745 = vunpack.c.l.b16 %v1390
    %v1746 = vunpack.c.h.b16 %v1390
    %v1747 = vunpack.c.l.b16 %v1391
    %v1748 = vunpack.c.l.b16 %v1392
    %v1749 = vunpack.c.h.b16 %v1392
    %v1750 = vunpack.c.l.b16 %v1393
    %v1751 = vunpack.c.h.b16 %v1393
    %v1752 = vunpack.c.l.b16 %v1394
    %v1753 = vunpack.c.h.b16 %v1394
    %v1754 = vunpack.c.l.b16 %v1395
    %v1755 = vunpack.c.l.b16 %v1396
    %v1756 = vunpack.c.h.b16 %v1396
    %v1757 = vunpack.c.l.b16 %v1397
    %v1758 = vunpack.c.h.b16 %v1397
    %v1759 = vunpack.c.l.b16 %v1398
    %v1760 = vunpack.c.h.b16 %v1398
    %v1761 = vunpack.c.l.b16 %v1399
    %v1762 = vunpack.c.l.b16 %v1400
    %v1763 = vunpack.c.h.b16 %v1400
    %v1764 = vunpack.c.l.b16 %v1401
    %v1765 = vunpack.c.h.b16 %v1401
    %v1766 = vunpack.c.l.b16 %v1402
    %v1767 = vunpack.c.h.b16 %v1402
    %v1768 = vunpack.c.l.b16 %v1403
    %v1769 = vunpack.c.l.b16 %v1404
    %v1770 = vunpack.c.h.b16 %v1404
    %v1771 = vunpack.c.l.b16 %v1405
    %v1772 = vunpack.c.h.b16 %v1405
    %v1773 = vunpack.c.l.b16 %v1406
    %v1774 = vunpack.c.h.b16 %v1406
    %v1775 = vunpack.c.l.b16 %v1407
    %v1776 = vpack.c.b16 %v1559, %v1552
    %v1777 = vpack.c.b16 %v1560, %v1553
    %v1778 = vpack.c.b16 %v1561, %v1554
    %v1779 = vpack.c.b16 %v1562, %v1555
    %v1780 = vpack.c.b16 %v1563, %v1556
    %v1781 = vpack.c.b16 %v1564, %v1557
    %v1782 = vpack.c.b16 %v1565, %v1558
    %v1783 = vpack.c.b16 %v1573, %v1566
    %v1784 = vpack.c.b16 %v1574, %v1567
    %v1785 = vpack.c.b16 %v1575, %v1568
    %v1786 = vpack.c.b16 %v1576, %v1569
    %v1787 = vpack.c.b16 %v1577, %v1570
    %v1788 = vpack.c.b16 %v1578, %v1571
    %v1789 = vpack.c.b16 %v1579, %v1572
    %v1790 = vpack.c.b16 %v1587, %v1580
    %v1791 = vpack.c.b16 %v1588, %v1581
    %v1792 = vpack.c.b16 %v1589, %v1582
    %v1793 = vpack.c.b16 %v1590, %v1583
    %v1794 = vpack.c.b16 %v1591, %v1584
    %v1795 = vpack.c.b16 %v1592, %v1585
    %v1796 = vpack.c.b16 %v1593, %v1586
    %v1797 = vpack.c.b16 %v1601, %v1594
    %v1798 = vpack.c.b16 %v1602, %v1595
    %v1799 = vpack.c.b16 %v1603, %v1596
    %v1800 = vpack.c.b16 %v1604, %v1597
    %v1801 = vpack.c.b16 %v1605, %v1598
    %v1802 = vpack.c.b16 %v1606, %v1599
    %v1803 = vpack.c.b16 %v1607, %v1600
    %v1804 = vpack.c.b16 %v1615, %v1608
    %v1805 = vpack.c.b16 %v1616, %v1609
    %v1806 = vpack.c.b16 %v1617, %v1610
    %v1807 = vpack.c.b16 %v1618, %v1611
    %v1808 = vpack.c.b16 %v1619, %v1612
    %v1809 = vpack.c.b16 %v1620, %v1613
    %v1810 = vpack.c.b16 %v1621, %v1614
    %v1811 = vpack.c.b16 %v1629, %v1622
    %v1812 = vpack.c.b16 %v1630, %v1623
    %v1813 = vpack.c.b16 %v1631, %v1624
    %v1814 = vpack.c.b16 %v1632, %v1625
    %v1815 = vpack.c.b16 %v1633, %v1626
    %v1816 = vpack.c.b16 %v1634, %v1627
    %v1817 = vpack.c.b16 %v1635, %v1628
    %v1818 = vpack.c.b16 %v1643, %v1636
    %v1819 = vpack.c.b16 %v1644, %v1637
    %v1820 = vpack.c.b16 %v1645, %v1638
    %v1821 = vpack.c.b16 %v1646, %v1639
    %v1822 = vpack.c.b16 %v1647, %v1640
    %v1823 = vpack.c.b16 %v1648, %v1641
    %v1824 = vpack.c.b16 %v1649, %v1642
    %v1825 = vpack.c.b16 %v1657, %v1650
    %v1826 = vpack.c.b16 %v1658, %v1651
    %v1827 = vpack.c.b16 %v1659, %v1652
    %v1828 = vpack.c.b16 %v1660, %v1653
    %v1829 = vpack.c.b16 %v1661, %v1654
    %v1830 = vpack.c.b16 %v1662, %v1655
    %v1831 = vpack.c.b16 %v1663, %v1656
    %v1832 = vpack.c.b16 %v1671, %v1664
    %v1833 = vpack.c.b16 %v1672, %v1665
    %v1834 = vpack.c.b16 %v1673, %v1666
    %v1835 = vpack.c.b16 %v1674, %v1667
    %v1836 = vpack.c.b16 %v1675, %v1668
    %v1837 = vpack.c.b16 %v1676, %v1669
    %v1838 = vpack.c.b16 %v1677, %v1670
    %v1839 = vpack.c.b16 %v1685, %v1678
    %v1840 = vpack.c.b16 %v1686, %v1679
    %v1841 = vpack.c.b16 %v1687, %v1680
    %v1842 = vpack.c.b16 %v1688, %v1681
    %v1843 = vpack.c.b16 %v1689, %v1682
    %v1844 = vpack.c.b16 %v1690, %v1683
    %v1845 = vpack.c.b16 %v1691, %v1684
    %v1846 = vpack.c.b16 %v1699, %v1692
    %v1847 = vpack.c.b16 %v1700, %v1693
    %v1848 = vpack.c.b16 %v1701, %v1694
    %v1849 = vpack.c.b16 %v1702, %v1695
    %v1850 = vpack.c.b16 %v1703, %v1696
    %v1851 = vpack.c.b16 %v1704, %v1697
    %v1852 = vpack.c.b16 %v1705, %v1698
    %v1853 = vpack.c.b16 %v1713, %v1706
    %v1854 = vpack.c.b16 %v1714, %v1707
    %v1855 = vpack.c.b16 %v1715, %v1708
    %v1856 = vpack.c.b16 %v1716, %v1709
    %v1857 = vpack.c.b16 %v1717, %v1710
    %v1858 = vpack.c.b16 %v1718, %v1711
    %v1859 = vpack.c.b16 %v1719, %v1712
    %v1860 = vpack.c.b16 %v1727, %v1720
    %v1861 = vpack.c.b16 %v1728, %v1721
    %v1862 = vpack.c.b16 %v1729, %v1722
    %v1863 = vpack.c.b16 %v1730, %v1723
    %v1864 = vpack.c.b16 %v1731, %v1724
    %v1865 = vpack.c.b16 %v1732, %v1725
    %v1866 = vpack.c.b16 %v1733, %v1726
    %v1867 = vpack.c.b16 %v1741, %v1734
    %v1868 = vpack.c.b16 %v1742, %v1735
    %v1869 = vpack.c.b16 %v1743, %v1736
    %v1870 = vpack.c.b16 %v1744, %v1737
    %v1871 = vpack.c.b16 %v1745, %v1738
    %v1872 = vpack.c.b16 %v1746, %v1739
    %v1873 = vpack.c.b16 %v1747, %v1740
    %v1874 = vpack.c.b16 %v1755, %v1748
    %v1875 = vpack.c.b16 %v1756, %v1749
    %v1876 = vpack.c.b16 %v1757, %v1750
    %v1877 = vpack.c.b16 %v1758, %v1751
    %v1878 = vpack.c.b16 %v1759, %v1752
    %v1879 = vpack.c.b16 %v1760, %v1753
    %v1880 = vpack.c.b16 %v1761, %v1754
    %v1881 = vpack.c.b16 %v1769, %v1762
    %v1882 = vpack.c.b16 %v1770, %v1763
    %v1883 = vpack.c.b16 %v1771, %v1764
    %v1884 = vpack.c.b16 %v1772, %v1765
    %v1885 = vpack.c.b16 %v1773, %v1766
    %v1886 = vpack.c.b16 %v1774, %v1767
    %v1887 = vpack.c.b16 %v1775, %v1768
    %2000 = vmatpush.bf16.msra.mxu0 %v1825
    %2001 = vmatpush.bf16.msra.mxu0 %v1818
    %2002 = vmatpush.bf16.msra.mxu0 %v1811
    %2003 = vmatpush.bf16.msra.mxu0 %v1804
    %2004 = vmatpush.bf16.msra.mxu0 %v1797
    %2005 = vmatpush.bf16.msra.mxu0 %v1790
    %2006 = vmatpush.bf16.msra.mxu0 %v1783
    %2007 = vmatpush.bf16.msra.mxu0 %v1776
    %2008 = vmatmul.bf16.gmra.mxu0 %v1278
    %v2009 = vpop.f32.mrf.mxu0
    %v2010 = vadd.f32 %v1410, %v2009
    %v2011 = vpop.f32.mrf.mxu0
    %v2012 = vadd.f32 %v1410, %v2011
    %2013 = vdwg.mxu0
    %2014 = vmatpush.bf16.msra.mxu0 %v1881
    %2015 = vmatpush.bf16.msra.mxu0 %v1874
    %2016 = vmatpush.bf16.msra.mxu0 %v1867
    %2017 = vmatpush.bf16.msra.mxu0 %v1860
    %2018 = vmatpush.bf16.msra.mxu0 %v1853
    %2019 = vmatpush.bf16.msra.mxu0 %v1846
    %2020 = vmatpush.bf16.msra.mxu0 %v1839
    %2021 = vmatpush.bf16.msra.mxu0 %v1832
    %2022 = vmatmul.bf16.gmra.mxu0 %v1279
    %v2023 = vpop.f32.mrf.mxu0
    %v2024 = vadd.f32 %v2010, %v2023
    %v2025 = vpop.f32.mrf.mxu0
    %v2026 = vadd.f32 %v2012, %v2025
    %2027 = vdwg.mxu0
    %2028 = vmatpush.bf16.msra.mxu0 %v1826
    %2029 = vmatpush.bf16.msra.mxu0 %v1819
    %2030 = vmatpush.bf16.msra.mxu0 %v1812
    %2031 = vmatpush.bf16.msra.mxu0 %v1805
    %2032 = vmatpush.bf16.msra.mxu0 %v1798
    %2033 = vmatpush.bf16.msra.mxu0 %v1791
    %2034 = vmatpush.bf16.msra.mxu0 %v1784
    %2035 = vmatpush.bf16.msra.mxu0 %v1777
    %2036 = vmatmul.bf16.gmra.mxu0 %v1278
    %v2037 = vpop.f32.mrf.mxu0
    %v2038 = vadd.f32 %v1411, %v2037
    %v2039 = vpop.f32.mrf.mxu0
    %v2040 = vadd.f32 %v1411, %v2039
    %2041 = vdwg.mxu0
    %2042 = vmatpush.bf16.msra.mxu0 %v1882
    %2043 = vmatpush.bf16.msra.mxu0 %v1875
    %2044 = vmatpush.bf16.msra.mxu0 %v1868
    %2045 = vmatpush.bf16.msra.mxu0 %v1861
    %2046 = vmatpush.bf16.msra.mxu0 %v1854
    %2047 = vmatpush.bf16.msra.mxu0 %v1847
    %2048 = vmatpush.bf16.msra.mxu0 %v1840
    %2049 = vmatpush.bf16.msra.mxu0 %v1833
    %2050 = vmatmul.bf16.gmra.mxu0 %v1279
    %v2051 = vpop.f32.mrf.mxu0
    %v2052 = vadd.f32 %v2038, %v2051
    %v2053 = vpop.f32.mrf.mxu0
    %v2054 = vadd.f32 %v2040, %v2053
    %2055 = vdwg.mxu0
    %2056 = vmatpush.bf16.msra.mxu0 %v1827
    %2057 = vmatpush.bf16.msra.mxu0 %v1820
    %2058 = vmatpush.bf16.msra.mxu0 %v1813
    %2059 = vmatpush.bf16.msra.mxu0 %v1806
    %2060 = vmatpush.bf16.msra.mxu0 %v1799
    %2061 = vmatpush.bf16.msra.mxu0 %v1792
    %2062 = vmatpush.bf16.msra.mxu0 %v1785
    %2063 = vmatpush.bf16.msra.mxu0 %v1778
    %2064 = vmatmul.bf16.gmra.mxu0 %v1278
    %v2065 = vpop.f32.mrf.mxu0
    %v2066 = vadd.f32 %v1412, %v2065
    %v2067 = vpop.f32.mrf.mxu0
    %v2068 = vadd.f32 %v1412, %v2067
    %2069 = vdwg.mxu0
    %2070 = vmatpush.bf16.msra.mxu0 %v1883
    %2071 = vmatpush.bf16.msra.mxu0 %v1876
    %2072 = vmatpush.bf16.msra.mxu0 %v1869
    %2073 = vmatpush.bf16.msra.mxu0 %v1862
    %2074 = vmatpush.bf16.msra.mxu0 %v1855
    %2075 = vmatpush.bf16.msra.mxu0 %v1848
    %2076 = vmatpush.bf16.msra.mxu0 %v1841
    %2077 = vmatpush.bf16.msra.mxu0 %v1834
    %2078 = vmatmul.bf16.gmra.mxu0 %v1279
    %v2079 = vpop.f32.mrf.mxu0
    %v2080 = vadd.f32 %v2066, %v2079
    %v2081 = vpop.f32.mrf.mxu0
    %v2082 = vadd.f32 %v2068, %v2081
    %2083 = vdwg.mxu0
    %2084 = vmatpush.bf16.msra.mxu0 %v1828
    %2085 = vmatpush.bf16.msra.mxu0 %v1821
    %2086 = vmatpush.bf16.msra.mxu0 %v1814
    %2087 = vmatpush.bf16.msra.mxu0 %v1807
    %2088 = vmatpush.bf16.msra.mxu0 %v1800
    %2089 = vmatpush.bf16.msra.mxu0 %v1793
    %2090 = vmatpush.bf16.msra.mxu0 %v1786
    %2091 = vmatpush.bf16.msra.mxu0 %v1779
    %2092 = vmatmul.bf16.gmra.mxu0 %v1278
    %v2093 = vpop.f32.mrf.mxu0
    %v2094 = vadd.f32 %v1413, %v2093
    %v2095 = vpop.f32.mrf.mxu0
    %v2096 = vadd.f32 %v1413, %v2095
    %2097 = vdwg.mxu0
    %2098 = vmatpush.bf16.msra.mxu0 %v1884
    %2099 = vmatpush.bf16.msra.mxu0 %v1877
    %2100 = vmatpush.bf16.msra.mxu0 %v1870
    %2101 = vmatpush.bf16.msra.mxu0 %v1863
    %2102 = vmatpush.bf16.msra.mxu0 %v1856
    %2103 = vmatpush.bf16.msra.mxu0 %v1849
    %2104 = vmatpush.bf16.msra.mxu0 %v1842
    %2105 = vmatpush.bf16.msra.mxu0 %v1835
    %2106 = vmatmul.bf16.gmra.mxu0 %v1279
    %v2107 = vpop.f32.mrf.mxu0
    %v2108 = vadd.f32 %v2094, %v2107
    %v2109 = vpop.f32.mrf.mxu0
    %v2110 = vadd.f32 %v2096, %v2109
    %2111 = vdwg.mxu0
    %2112 = vmatpush.bf16.msra.mxu0 %v1829
    %2113 = vmatpush.bf16.msra.mxu0 %v1822
    %2114 = vmatpush.bf16.msra.mxu0 %v1815
    %2115 = vmatpush.bf16.msra.mxu0 %v1808
    %2116 = vmatpush.bf16.msra.mxu0 %v1801
    %2117 = vmatpush.bf16.msra.mxu0 %v1794
    %2118 = vmatpush.bf16.msra.mxu0 %v1787
    %2119 = vmatpush.bf16.msra.mxu0 %v1780
    %2120 = vmatmul.bf16.gmra.mxu0 %v1278
    %v2121 = vpop.f32.mrf.mxu0
    %v2122 = vadd.f32 %v1414, %v2121
    %v2123 = vpop.f32.mrf.mxu0
    %v2124 = vadd.f32 %v1414, %v2123
    %2125 = vdwg.mxu0
    %2126 = vmatpush.bf16.msra.mxu0 %v1885
    %2127 = vmatpush.bf16.msra.mxu0 %v1878
    %2128 = vmatpush.bf16.msra.mxu0 %v1871
    %2129 = vmatpush.bf16.msra.mxu0 %v1864
    %2130 = vmatpush.bf16.msra.mxu0 %v1857
    %2131 = vmatpush.bf16.msra.mxu0 %v1850
    %2132 = vmatpush.bf16.msra.mxu0 %v1843
    %2133 = vmatpush.bf16.msra.mxu0 %v1836
    %2134 = vmatmul.bf16.gmra.mxu0 %v1279
    %v2135 = vpop.f32.mrf.mxu0
    %v2136 = vadd.f32 %v2122, %v2135
    %v2137 = vpop.f32.mrf.mxu0
    %v2138 = vadd.f32 %v2124, %v2137
    %2139 = vdwg.mxu0
    %2140 = vmatpush.bf16.msra.mxu0 %v1830
    %2141 = vmatpush.bf16.msra.mxu0 %v1823
    %2142 = vmatpush.bf16.msra.mxu0 %v1816
    %2143 = vmatpush.bf16.msra.mxu0 %v1809
    %2144 = vmatpush.bf16.msra.mxu0 %v1802
    %2145 = vmatpush.bf16.msra.mxu0 %v1795
    %2146 = vmatpush.bf16.msra.mxu0 %v1788
    %2147 = vmatpush.bf16.msra.mxu0 %v1781
    %2148 = vmatmul.bf16.gmra.mxu0 %v1278
    %v2149 = vpop.f32.mrf.mxu0
    %v2150 = vadd.f32 %v1415, %v2149
    %v2151 = vpop.f32.mrf.mxu0
    %v2152 = vadd.f32 %v1415, %v2151
    %2153 = vdwg.mxu0
    %2154 = vmatpush.bf16.msra.mxu0 %v1886
    %2155 = vmatpush.bf16.msra.mxu0 %v1879
    %2156 = vmatpush.bf16.msra.mxu0 %v1872
    %2157 = vmatpush.bf16.msra.mxu0 %v1865
    %2158 = vmatpush.bf16.msra.mxu0 %v1858
    %2159 = vmatpush.bf16.msra.mxu0 %v1851
    %2160 = vmatpush.bf16.msra.mxu0 %v1844
    %2161 = vmatpush.bf16.msra.mxu0 %v1837
    %2162 = vmatmul.bf16.gmra.mxu0 %v1279
    %v2163 = vpop.f32.mrf.mxu0
    %v2164 = vadd.f32 %v2150, %v2163
    %v2165 = vpop.f32.mrf.mxu0
    %v2166 = vadd.f32 %v2152, %v2165
    %2167 = vdwg.mxu0
    %2168 = vmatpush.bf16.msra.mxu0 %v1831
    %2169 = vmatpush.bf16.msra.mxu0 %v1824
    %2170 = vmatpush.bf16.msra.mxu0 %v1817
    %2171 = vmatpush.bf16.msra.mxu0 %v1810
    %2172 = vmatpush.bf16.msra.mxu0 %v1803
    %2173 = vmatpush.bf16.msra.mxu0 %v1796
    %2174 = vmatpush.bf16.msra.mxu0 %v1789
    %2175 = vmatpush.bf16.msra.mxu0 %v1782
    %2176 = vmatmul.bf16.gmra.mxu0 %v1278
    %v2177 = vpop.f32.mrf.mxu0
    %v2178 = vadd.f32 %v1416, %v2177
    %v2179 = vpop.f32.mrf.mxu0
    %v2180 = vadd.f32 %v1416, %v2179
    %2181 = vdwg.mxu0
    %2182 = vmatpush.bf16.msra.mxu0 %v1887
    %2183 = vmatpush.bf16.msra.mxu0 %v1880
    %2184 = vmatpush.bf16.msra.mxu0 %v1873
    %2185 = vmatpush.bf16.msra.mxu0 %v1866
    %2186 = vmatpush.bf16.msra.mxu0 %v1859
    %2187 = vmatpush.bf16.msra.mxu0 %v1852
    %2188 = vmatpush.bf16.msra.mxu0 %v1845
    %2189 = vmatpush.bf16.msra.mxu0 %v1838
    %2190 = vmatmul.bf16.gmra.mxu0 %v1279
    %v2191 = vpop.f32.mrf.mxu0
    %v2192 = vadd.f32 %v2178, %v2191
    %v2193 = vpop.f32.mrf.mxu0
    %v2194 = vadd.f32 %v2180, %v2193
    %2195 = vdwg.mxu0
    %2196 = vst [vmem:[#allocation2] sm:$0xff] %v2024
    %2197 = vst [vmem:[#allocation2 + $0x8] sm:$0xff] %v2052
    %2198 = vst [vmem:[#allocation2 + $0x10] sm:$0xff] %v2080
    %2199 = vst [vmem:[#allocation2 + $0x18] sm:$0xff] %v2108
    %2200 = vst [vmem:[#allocation2 + $0x20] sm:$0xff] %v2136
    %2201 = vst [vmem:[#allocation2 + $0x28] sm:$0xff] %v2164
    %2202 = vst.msk [vmem:[#allocation2 + $0x30] sm:$0xff] %vm689, %v2192
    %2203 = vst [vmem:[#allocation2 + $0x38] sm:$0xff] %v2026
    %2204 = vst [vmem:[#allocation2 + $0x40] sm:$0xff] %v2054
    %2205 = vst [vmem:[#allocation2 + $0x48] sm:$0xff] %v2082
    %2206 = vst [vmem:[#allocation2 + $0x50] sm:$0xff] %v2110
    %2207 = vst [vmem:[#allocation2 + $0x58] sm:$0xff] %v2138
    %2208 = vst [vmem:[#allocation2 + $0x60] sm:$0xff] %v2166
    %2209 = vst.msk [vmem:[#allocation2 + $0x68] sm:$0xff] %vm689, %v2194
    %vm2210 = vcmask 261120
    %2211 = vst.msk [vmem:[#allocation4] sm:$0xff] %vm2210, %v1120
    %2212 = vst.msk [vmem:[#allocation4 + $0x8] sm:$0xff] %vm2210, %v1122
    // Predicated region
    $region58: #{_vae_forward_padded.1} parent=1 // pred_check
      _
    $region59: #{_vae_forward_padded.1} parent=1 // pred_check_branch
      %2214 = sbr.rel (0) target = $region61
    $region60: #{_vae_forward_padded.1} parent=1 // pred_region
      %2216 = vsyncadd [#allocation3], 0
      %s2217 = sshll.u32 [#allocation2], 4
      %s2218 = int_to_ptr.vmem [resolvable:$true] %s2217
      %s2219 = sshll.u32 %s14, 4
      %s2220 = int_to_ptr.hbm [resolvable:$true] %s2219
      %2225 = dma.vmem_to_hbm [thread:$0]  %s2218, 1792, %s2220, [#allocation3], 896, 896, 56
    $region61: #{_vae_forward_padded.1} parent=1 // pred_fallthru
      _
    // Predicated region
    $region62: #{_vae_forward_padded.1} parent=1 // pred_check
      _
    $region63: #{_vae_forward_padded.1} parent=1 // pred_check_branch
      %2227 = sbr.rel (0) target = $region65
    $region64: #{_vae_forward_padded.1} parent=1 // pred_region
      %2229 = vsyncadd [#allocation5], 0
      %s2230 = sshll.u32 [#allocation4], 4
      %s2231 = int_to_ptr.vmem [resolvable:$true] %s2230
      %s2232 = sshll.u32 %s15, 4
      %s2233 = int_to_ptr.hbm [resolvable:$true] %s2232
      %2238 = dma.vmem_to_hbm [thread:$0]  %s2231, 256, %s2233, [#allocation5], 128, 128, 8
    $region65: #{_vae_forward_padded.1} parent=1 // pred_fallthru
      _
    // Predicated region
    $region66: #{_vae_forward_padded.1} parent=1 // pred_check
      _
    $region67: #{_vae_forward_padded.1} parent=1 // pred_check_branch
      %2240 = sbr.rel (0) target = $region69
    $region68: #{_vae_forward_padded.1} parent=1 // pred_region
      %2242 = dma.done [#allocation3], 1792
    $region69: #{_vae_forward_padded.1} parent=1 // pred_fallthru
      _
    // Predicated region
    $region70: #{_vae_forward_padded.1} parent=1 // pred_check
      _
    $region71: #{_vae_forward_padded.1} parent=1 // pred_check_branch
      %2244 = sbr.rel (0) target = $region73
    $region72: #{_vae_forward_padded.1} parent=1 // pred_region
      %2246 = dma.done [#allocation5], 256
    $region73: #{_vae_forward_padded.1} parent=1 // pred_fallthru
      _
    %2247 = vsyncpa [#allocation3], 1
    %2248 = vsyncpa [#allocation5], 1

</llo_original>
